<compile_context>
chip_gen: v7x
topology: tpu7x:2x2x1
jax: 0.10.0
libtpu: 0.0.40
codegen_flags: <defaults>
</compile_context>

<pallas_src>
import jax
import jax.numpy as jnp
from jax import lax
from jax.experimental import pallas as pl
from jax.experimental.pallas import tpu as pltpu

_BN_EPS = 1e-5
_SLK = 8        # slack rows around the y1 halo scratch (keeps tap slices in-bounds)
_LANES = 128


# ---------------------------------------------------------------------------
# Fused Pallas kernel
# ---------------------------------------------------------------------------

def _make_fused_block_kernel(*, H, W, Cgw, has_proj, compute_dtype):
    HW = H * W

    def kernel(*refs):
        if has_proj:
            (x_ref, w1_ref, w2_ref, w3_ref, ws_ref,
             s1_ref, b1_ref, s2_ref, b2_ref, s3_ref, b3_ref, ss_ref, bs_ref,
             o_ref, y1s) = refs
        else:
            (x_ref, w1_ref, w2_ref, w3_ref,
             s1_ref, b1_ref, s2_ref, b2_ref, s3_ref, b3_ref,
             o_ref, y1s) = refs

        x0 = x_ref[0]                                       # (HW, Cin) compute dtype

        # ---- conv1 (1x1) + bn1 + relu ------------------------------------
        y1 = jnp.dot(x0, w1_ref[...], preferred_element_type=jnp.float32)
        y1 = jnp.maximum(y1 * s1_ref[...] + b1_ref[...], 0.0)

        # Stage y1 into a row-haloed VMEM scratch laid out as the flattened
        # (H+2, W) grid (width unpadded).  Zero halo rows implement conv2's
        # zero row-padding; the +/-_SLK slack keeps every tap slice in-bounds.
        y1s[0:_SLK + W, :] = jnp.zeros((_SLK + W, Cgw), jnp.float32)
        y1s[_SLK + W:_SLK + W + HW, :] = y1
        y1s[_SLK + W + HW:2 * _SLK + 2 * W + HW, :] = jnp.zeros(
            (_SLK + W, Cgw), jnp.float32)

        # Column-edge masks implement conv2's zero column-padding (width is
        # flattened unpadded, so kw=0 / kw=2 taps wrap across rows at the
        # image edges and must be zeroed there).
        col = lax.broadcasted_iota(jnp.int32, (HW, 1), 0) % W
        left_edge = col == 0
        right_edge = col == (W - 1)

        # ---- grouped 3x3 conv (stride 1, pad 1) + bn2 + relu ---------------
        # 9 tap matmuls against the block-diagonal weight, fully unrolled
        # in-kernel (no K grid axis); accumulator stays on-chip.
        acc = jnp.zeros((HW, Cgw), jnp.float32)
        for kh in range(3):
            for kw in range(3):
                start = _SLK + kh * W + (kw - 1)
                slab = y1s[start:start + HW, :]
                if kw == 0:
                    slab = jnp.where(left_edge, 0.0, slab)
                elif kw == 2:
                    slab = jnp.where(right_edge, 0.0, slab)
                acc = acc + jnp.dot(slab.astype(compute_dtype),
                                    w2_ref[kh * 3 + kw],
                                    preferred_element_type=jnp.float32)
        y2 = jnp.maximum(acc * s2_ref[...] + b2_ref[...], 0.0)
        y2 = y2.astype(compute_dtype)

        # ---- conv3 (1x1) + bn3 + shortcut + relu ---------------------------
        main = jnp.dot(y2, w3_ref[...], preferred_element_type=jnp.float32)
        main = main * s3_ref[...] + b3_ref[...]
        if has_proj:
            sc = jnp.dot(x0, ws_ref[...], preferred_element_type=jnp.float32)
            sc = sc * ss_ref[...] + bs_ref[...]
        else:
            # Identity shortcut: x channels were pre-padded to the lane-dense
            # width in the wrapper, so this is a plain add (no matmul).
            sc = x0.astype(jnp.float32)
        o_ref[0] = jnp.maximum(main + sc, 0.0).astype(o_ref.dtype)

    return kernel


# ---------------------------------------------------------------------------
# Parameter plumbing (plain JAX)
# ---------------------------------------------------------------------------

def _fold_bn(p):
    gamma, beta, mean, var = p
    scale = gamma / jnp.sqrt(var + _BN_EPS)
    bias = beta - mean * scale
    return (scale.reshape(1, -1).astype(jnp.float32),
            bias.reshape(1, -1).astype(jnp.float32))


def _grouped_to_blockdiag(w, groups):
    """PyTorch grouped weight [Cout, Cin/groups, 3, 3] -> dense block-diagonal
    [9, Cin, Cout] taps (matmul layout).  The dense block-diagonal wastes
    (groups-1)/groups of the MXU flops; accepted while this stage is
    memory/overhead bound at these channel widths."""
    Cout, cinpg, KH, KW = w.shape
    outpg = Cout // groups
    Cin = cinpg * groups
    wf = jnp.zeros((KH, KW, Cin, Cout), w.dtype)
    for g in range(groups):
        blk = jnp.transpose(w[g * outpg:(g + 1) * outpg], (2, 3, 1, 0))
        wf = wf.at[:, :, g * cinpg:(g + 1) * cinpg,
                   g * outpg:(g + 1) * outpg].set(blk)
    return wf.reshape(KH * KW, Cin, Cout)


def _pad_last(a, width):
    pad = width - a.shape[-1]
    if pad == 0:
        return a
    return jnp.concatenate(
        [a, jnp.zeros(a.shape[:-1] + (pad,), a.dtype)], axis=-1)


def block_forward(x_nchw, params, *, cardinality, stride=1,
                  compute_dtype=jnp.bfloat16):
    """Fused ResNeXt Block forward (eval-mode BN), NCHW in / NCHW out."""
    if stride != 1:
        # TODO(synk): stride>1 is not supported by this fused kernel.
        raise NotImplementedError("fused Block kernel supports stride=1 only")

    N, Cin, H, W = x_nchw.shape
    Cgw = params['w1'].shape[0]
    Cout = params['w3'].shape[0]
    Cout_p = ((Cout + _LANES - 1) // _LANES) * _LANES      # lane-dense output
    HW = H * W
    has_proj = 'ws' in params

    s1, b1 = _fold_bn(params['bn1'])
    s2, b2 = _fold_bn(params['bn2'])
    s3, b3 = _fold_bn(params['bn3'])
    s3, b3 = _pad_last(s3, Cout_p), _pad_last(b3, Cout_p)

    w1 = jnp.transpose(params['w1'][:, :, 0, 0], (1, 0))             # [Cin, Cgw]
    w2 = _grouped_to_blockdiag(params['w2'], cardinality)            # [9, Cgw, Cgw]
    w3 = _pad_last(jnp.transpose(params['w3'][:, :, 0, 0], (1, 0)), Cout_p)

    x = jnp.transpose(x_nchw, (0, 2, 3, 1)).reshape(N, HW, Cin)
    if not has_proj:
        # Identity shortcut: the module guarantees Cin == Cout on this branch.
        assert Cin == Cout
        x = _pad_last(x, Cout_p)
        if Cout_p > Cin:
            w1 = jnp.concatenate(
                [w1, jnp.zeros((Cout_p - Cin, Cgw), w1.dtype)], axis=0)
    Cin_k = x.shape[-1]

    x = x.astype(compute_dtype)
    w1 = w1.astype(compute_dtype)
    w2 = w2.astype(compute_dtype)
    w3 = w3.astype(compute_dtype)

    args = [x, w1, w2, w3]
    in_specs = [
        pl.BlockSpec((1, HW, Cin_k), lambda n: (n, 0, 0)),
        pl.BlockSpec((Cin_k, Cgw), lambda n: (0, 0)),
        pl.BlockSpec((9, Cgw, Cgw), lambda n: (0, 0, 0)),
        pl.BlockSpec((Cgw, Cout_p), lambda n: (0, 0)),
    ]
    if has_proj:
        ws = _pad_last(jnp.transpose(params['ws'][:, :, 0, 0], (1, 0)), Cout_p)
        ss, bs = _fold_bn(params['bns'])
        ss, bs = _pad_last(ss, Cout_p), _pad_last(bs, Cout_p)
        args.append(ws.astype(compute_dtype))
        in_specs.append(pl.BlockSpec((Cin_k, Cout_p), lambda n: (0, 0)))
        affine = [s1, b1, s2, b2, s3, b3, ss, bs]
    else:
        affine = [s1, b1, s2, b2, s3, b3]
    for a in affine:
        args.append(a)
        in_specs.append(pl.BlockSpec(a.shape, lambda n: (0, 0)))

    kernel = _make_fused_block_kernel(
        H=H, W=W, Cgw=Cgw, has_proj=has_proj, compute_dtype=compute_dtype)

    out = pl.pallas_call(
        kernel,
        out_shape=jax.ShapeDtypeStruct((N, HW, Cout_p), jnp.float32),
        grid_spec=pltpu.PrefetchScalarGridSpec(
            num_scalar_prefetch=0,
            grid=(N,),                        # >= 2 parallel steps in the demo
            in_specs=in_specs,
            out_specs=pl.BlockSpec((1, HW, Cout_p), lambda n: (n, 0, 0)),
            scratch_shapes=[
                pltpu.VMEM((2 * _SLK + (H + 2) * W, Cgw), jnp.float32)],
        ),
        compiler_params=pltpu.CompilerParams(
            dimension_semantics=("parallel",),
            # Explicit scoped-VMEM budget, <= physical on every generation
            # (v7x has only 64 MiB physical VMEM).
            vmem_limit_bytes=32 * 1024 * 1024),
    )(*args)

    out = out[:, :, :Cout].reshape(N, H, W, Cout)
    return jnp.transpose(out, (0, 3, 1, 2))                 # back to NCHW


# ---------------------------------------------------------------------------
# Pure-JAX reference (eval-mode BN) for verification
# ---------------------------------------------------------------------------

def block_ref(x, params, *, cardinality, stride=1):
    def conv(x, w, stride=1, groups=1, pad=0):
        return lax.conv_general_dilated(
            x, w, window_strides=(stride, stride),
            padding=((pad, pad), (pad, pad)),
            dimension_numbers=('NCHW', 'OIHW', 'NCHW'),
            feature_group_count=groups,
            precision=lax.Precision.HIGHEST)

    def bn(x, p):
        g, b, m, v = p
        inv = g / jnp.sqrt(v + _BN_EPS)
        return (x - m[None, :, None, None]) * inv[None, :, None, None] \
            + b[None, :, None, None]

    out = jax.nn.relu(bn(conv(x, params['w1']), params['bn1']))
    out = jax.nn.relu(bn(conv(out, params['w2'], stride=stride,
                              groups=cardinality, pad=1), params['bn2']))
    out = bn(conv(out, params['w3']), params['bn3'])
    sc = bn(conv(x, params['ws'], stride=stride), params['bns']) \
        if 'ws' in params else x
    return jax.nn.relu(out + sc)


# ---------------------------------------------------------------------------
# Main
# ---------------------------------------------------------------------------

def _bn_init(k, C):
    k1, k2, k3, k4 = jax.random.split(k, 4)
    gamma = jax.random.uniform(k1, (C,), jnp.float32, 0.8, 1.2)
    beta = 0.1 * jax.random.normal(k2, (C,), jnp.float32)
    mean = 0.1 * jax.random.normal(k3, (C,), jnp.float32)
    var = jax.random.uniform(k4, (C,), jnp.float32, 0.5, 1.5)
    return (gamma, beta, mean, var)


def _make_params(key, in_planes, cardinality, bottleneck_width):
    Cgw = cardinality * bottleneck_width
    Cout = 2 * Cgw                                     # expansion = 2
    ks = jax.random.split(key, 8)
    params = {
        'w1': 0.2 * jax.random.normal(ks[0], (Cgw, in_planes, 1, 1), jnp.float32),
        'bn1': _bn_init(ks[1], Cgw),
        'w2': 0.2 * jax.random.normal(ks[2], (Cgw, Cgw // cardinality, 3, 3),
                                      jnp.float32),
        'bn2': _bn_init(ks[3], Cgw),
        'w3': 0.2 * jax.random.normal(ks[4], (Cout, Cgw, 1, 1), jnp.float32),
        'bn3': _bn_init(ks[5], Cout),
    }
    if in_planes != Cout:                              # projection shortcut
        params['ws'] = 0.2 * jax.random.normal(ks[6], (Cout, in_planes, 1, 1),
                                               jnp.float32)
        params['bns'] = _bn_init(ks[7], Cout)
    return params


if __name__ == "__main__":
    key = jax.random.PRNGKey(0)
    k_a, k_b, kx_a, kx_b = jax.random.split(key, 4)
    card, bw = 8, 4                                    # group_width = 32, Cout = 64

    # --- config A: projection shortcut (in_planes != expansion*group_width) ---
    params_a = _make_params(k_a, 16, card, bw)
    x_a = jax.random.normal(kx_a, (2, 16, 16, 16), jnp.float32)       # NCHW
    ref_a = block_ref(x_a, params_a, cardinality=card)

    out_f32 = jax.block_until_ready(
        block_forward(x_a, params_a, cardinality=card,
                      compute_dtype=jnp.float32))
    assert out_f32.shape == ref_a.shape == (2, 64, 16, 16)
    err_f32 = float(jnp.max(jnp.abs(out_f32 - ref_a)))
    if not bool(jnp.allclose(out_f32, ref_a, atol=2e-3, rtol=2e-3)):
        raise SystemExit(f"f32 path mismatch (projection), max abs err={err_f32}")

    out_bf16 = jax.block_until_ready(
        block_forward(x_a, params_a, cardinality=card,
                      compute_dtype=jnp.bfloat16))
    # bf16 matmul inputs (f32 accumulation / epilogue): allow a few percent of
    # the activation range for three chained convolutions.
    err_bf = float(jnp.max(jnp.abs(out_bf16 - ref_a)))
    bound = 5e-2 * (1.0 + float(jnp.max(jnp.abs(ref_a))))
    if err_bf > bound:
        raise SystemExit(f"bf16 path mismatch, max abs err={err_bf} > {bound}")

    # --- config B: identity shortcut (in_planes == expansion*group_width) ---
    params_b = _make_params(k_b, 64, card, bw)
    assert 'ws' not in params_b
    x_b = jax.random.normal(kx_b, (2, 64, 8, 8), jnp.float32)
    ref_b = block_ref(x_b, params_b, cardinality=card)
    out_b = jax.block_until_ready(
        block_forward(x_b, params_b, cardinality=card,
                      compute_dtype=jnp.float32))
    assert out_b.shape == ref_b.shape == (2, 64, 8, 8)
    err_b = float(jnp.max(jnp.abs(out_b - ref_b)))
    if not bool(jnp.allclose(out_b, ref_b, atol=2e-3, rtol=2e-3)):
        raise SystemExit(f"f32 path mismatch (identity), max abs err={err_b}")

    print("KERNEL_OK")
</pallas_src>

<mosaic_0001>
module attributes {stable_mosaic.version = 11 : i64} {
  func.func @kernel(%arg0: i32, %arg1: memref<1x256x16xf32, #tpu.memory_space<vmem>>, %arg2: memref<16x32xf32, #tpu.memory_space<vmem>>, %arg3: memref<9x32x32xf32, #tpu.memory_space<vmem>>, %arg4: memref<32x128xf32, #tpu.memory_space<vmem>>, %arg5: memref<16x128xf32, #tpu.memory_space<vmem>>, %arg6: memref<1x32xf32, #tpu.memory_space<vmem>>, %arg7: memref<1x32xf32, #tpu.memory_space<vmem>>, %arg8: memref<1x32xf32, #tpu.memory_space<vmem>>, %arg9: memref<1x32xf32, #tpu.memory_space<vmem>>, %arg10: memref<1x128xf32, #tpu.memory_space<vmem>>, %arg11: memref<1x128xf32, #tpu.memory_space<vmem>>, %arg12: memref<1x128xf32, #tpu.memory_space<vmem>>, %arg13: memref<1x128xf32, #tpu.memory_space<vmem>>, %arg14: memref<1x256x128xf32, #tpu.memory_space<vmem>>, %arg15: memref<304x32xf32, #tpu.memory_space<vmem>>) attributes {dimension_semantics = [#tpu.dimension_semantics<parallel>], iteration_bounds = array<i64: 2>, scalar_prefetch = 0 : i64, scratch_operands = 1 : i64, tpu.core_type = #tpu.core_type<tc>, window_params = [{transform_indices = @transform_0, window_bounds = array<i64: 1, 256, 16>}, {pipeline_mode = #tpu.pipeline_mode<synchronous>, transform_indices = @transform_1, window_bounds = array<i64: 16, 32>}, {pipeline_mode = #tpu.pipeline_mode<synchronous>, transform_indices = @transform_2, window_bounds = array<i64: 9, 32, 32>}, {pipeline_mode = #tpu.pipeline_mode<synchronous>, transform_indices = @transform_3, window_bounds = array<i64: 32, 128>}, {pipeline_mode = #tpu.pipeline_mode<synchronous>, transform_indices = @transform_4, window_bounds = array<i64: 16, 128>}, {pipeline_mode = #tpu.pipeline_mode<synchronous>, transform_indices = @transform_5, window_bounds = array<i64: 1, 32>}, {pipeline_mode = #tpu.pipeline_mode<synchronous>, transform_indices = @transform_6, window_bounds = array<i64: 1, 32>}, {pipeline_mode = #tpu.pipeline_mode<synchronous>, transform_indices = @transform_7, window_bounds = array<i64: 1, 32>}, {pipeline_mode = #tpu.pipeline_mode<synchronous>, transform_indices = @transform_8, window_bounds = array<i64: 1, 32>}, {pipeline_mode = #tpu.pipeline_mode<synchronous>, transform_indices = @transform_9, window_bounds = array<i64: 1, 128>}, {pipeline_mode = #tpu.pipeline_mode<synchronous>, transform_indices = @transform_10, window_bounds = array<i64: 1, 128>}, {pipeline_mode = #tpu.pipeline_mode<synchronous>, transform_indices = @transform_11, window_bounds = array<i64: 1, 128>}, {pipeline_mode = #tpu.pipeline_mode<synchronous>, transform_indices = @transform_12, window_bounds = array<i64: 1, 128>}, {transform_indices = @transform_13, window_bounds = array<i64: 1, 256, 128>}]} {
    %c0 = arith.constant 0 : index
    %c0_0 = arith.constant 0 : index
    %c0_1 = arith.constant 0 : index
    %0 = vector.load %arg1[%c0, %c0_0, %c0_1] : memref<1x256x16xf32, #tpu.memory_space<vmem>>, vector<1x256x16xf32>
    %1 = vector.shape_cast %0 : vector<1x256x16xf32> to vector<256x16xf32>
    %c0_2 = arith.constant 0 : index
    %c0_3 = arith.constant 0 : index
    %2 = vector.load %arg2[%c0_2, %c0_3] : memref<16x32xf32, #tpu.memory_space<vmem>>, vector<16x32xf32>
    %cst = arith.constant dense<0.000000e+00> : vector<256x32xf32>
    %3 = tpu.matmul %1, %2, %cst {dimension_numbers = #tpu.dot_dimension_numbers<[1], [0], [0], [1], [0, 0, 1, 1], [], []>} : vector<256x16xf32>, vector<16x32xf32>, vector<256x32xf32> -> vector<256x32xf32>
    %c0_4 = arith.constant 0 : index
    %c0_5 = arith.constant 0 : index
    %4 = vector.load %arg6[%c0_4, %c0_5] : memref<1x32xf32, #tpu.memory_space<vmem>>, vector<1x32xf32>
    %5 = vector.broadcast %4 : vector<1x32xf32> to vector<256x32xf32>
    %6 = arith.mulf %3, %5 : vector<256x32xf32>
    %c0_6 = arith.constant 0 : index
    %c0_7 = arith.constant 0 : index
    %7 = vector.load %arg7[%c0_6, %c0_7] : memref<1x32xf32, #tpu.memory_space<vmem>>, vector<1x32xf32>
    %8 = vector.broadcast %7 : vector<1x32xf32> to vector<256x32xf32>
    %9 = arith.addf %6, %8 : vector<256x32xf32>
    %cst_8 = arith.constant 0.000000e+00 : f32
    %10 = vector.broadcast %cst_8 : f32 to vector<256x32xf32>
    %11 = arith.maximumf %9, %10 : vector<256x32xf32>
    %cst_9 = arith.constant 0.000000e+00 : f32
    %12 = vector.broadcast %cst_9 : f32 to vector<24x32xf32>
    %c0_10 = arith.constant 0 : index
    %c0_11 = arith.constant 0 : index
    %13 = vector.load %arg15[%c0_10, %c0_11] : memref<304x32xf32, #tpu.memory_space<vmem>>, vector<24x32xf32>
    tpu.vector_store %arg15[%c0_10, %c0_11], %12 {strides = array<i32>} : memref<304x32xf32, #tpu.memory_space<vmem>>, vector<24x32xf32>,
    %c24 = arith.constant 24 : index
    %c0_12 = arith.constant 0 : index
    %14 = vector.load %arg15[%c24, %c0_12] : memref<304x32xf32, #tpu.memory_space<vmem>>, vector<256x32xf32>
    tpu.vector_store %arg15[%c24, %c0_12], %11 {strides = array<i32>} : memref<304x32xf32, #tpu.memory_space<vmem>>, vector<256x32xf32>,
    %cst_13 = arith.constant 0.000000e+00 : f32
    %15 = vector.broadcast %cst_13 : f32 to vector<24x32xf32>
    %c280 = arith.constant 280 : index
    %c0_14 = arith.constant 0 : index
    %16 = vector.load %arg15[%c280, %c0_14] : memref<304x32xf32, #tpu.memory_space<vmem>>, vector<24x32xf32>
    tpu.vector_store %arg15[%c280, %c0_14], %15 {strides = array<i32>} : memref<304x32xf32, #tpu.memory_space<vmem>>, vector<24x32xf32>,
    %17 = tpu.iota {dimensions = array<i32: 0>} : vector<256x1xi32>
    %c16_i32 = arith.constant 16 : i32
    %c0_i32 = arith.constant 0 : i32
    %18 = arith.cmpi eq, %c16_i32, %c0_i32 : i32
    %c1_i32 = arith.constant 1 : i32
    %19 = arith.select %18, %c1_i32, %c16_i32 : i32
    %20 = vector.broadcast %19 : i32 to vector<256x1xi32>
    %21 = arith.remsi %17, %20 : vector<256x1xi32>
    %c0_i32_15 = arith.constant 0 : i32
    %22 = vector.broadcast %c0_i32_15 : i32 to vector<256x1xi32>
    %23 = arith.cmpi ne, %21, %22 : vector<256x1xi32>
    %c0_i32_16 = arith.constant 0 : i32
    %24 = vector.broadcast %c0_i32_16 : i32 to vector<256x1xi32>
    %25 = arith.cmpi slt, %21, %24 : vector<256x1xi32>
    %c0_i32_17 = arith.constant 0 : i32
    %26 = arith.cmpi slt, %19, %c0_i32_17 : i32
    %27 = vector.broadcast %26 : i1 to vector<256x1xi1>
    %28 = vector.broadcast %27 : vector<256x1xi1> to vector<256x1xi1>
    %29 = arith.xori %25, %28 : vector<256x1xi1>
    %30 = arith.andi %29, %23 : vector<256x1xi1>
    %31 = vector.broadcast %19 : i32 to vector<256x1xi32>
    %32 = arith.addi %21, %31 : vector<256x1xi32>
    %33 = arith.select %30, %32, %21 : vector<256x1xi1>, vector<256x1xi32>
    %c0_i32_18 = arith.constant 0 : i32
    %34 = vector.broadcast %c0_i32_18 : i32 to vector<256x1xi32>
    %35 = arith.cmpi eq, %33, %34 : vector<256x1xi32>
    %c15_i32 = arith.constant 15 : i32
    %36 = vector.broadcast %c15_i32 : i32 to vector<256x1xi32>
    %37 = arith.cmpi eq, %33, %36 : vector<256x1xi32>
    %cst_19 = arith.constant 0.000000e+00 : f32
    %38 = vector.broadcast %cst_19 : f32 to vector<256x32xf32>
    %c7 = arith.constant 7 : index
    %c0_20 = arith.constant 0 : index
    %39 = vector.load %arg15[%c7, %c0_20] : memref<304x32xf32, #tpu.memory_space<vmem>>, vector<256x32xf32>
    %cst_21 = arith.constant 0.000000e+00 : f32
    %40 = vector.shape_cast %35 : vector<256x1xi1> to vector<256x1xi1>
    %41 = vector.broadcast %40 : vector<256x1xi1> to vector<256x32xi1>
    %42 = vector.broadcast %cst_21 : f32 to vector<256x32xf32>
    %43 = arith.select %41, %42, %39 : vector<256x32xi1>, vector<256x32xf32>
    %c0_22 = arith.constant 0 : index
    %c0_23 = arith.constant 0 : index
    %c0_24 = arith.constant 0 : index
    %44 = vector.load %arg3[%c0_22, %c0_23, %c0_24] : memref<9x32x32xf32, #tpu.memory_space<vmem>>, vector<1x32x32xf32>
    %45 = vector.shape_cast %44 : vector<1x32x32xf32> to vector<32x32xf32>
    %cst_25 = arith.constant dense<0.000000e+00> : vector<256x32xf32>
    %46 = tpu.matmul %43, %45, %cst_25 {dimension_numbers = #tpu.dot_dimension_numbers<[1], [0], [0], [1], [0, 0, 1, 1], [], []>} : vector<256x32xf32>, vector<32x32xf32>, vector<256x32xf32> -> vector<256x32xf32>
    %47 = arith.addf %38, %46 : vector<256x32xf32>
    %c8 = arith.constant 8 : index
    %c0_26 = arith.constant 0 : index
    %48 = vector.load %arg15[%c8, %c0_26] : memref<304x32xf32, #tpu.memory_space<vmem>>, vector<256x32xf32>
    %c1 = arith.constant 1 : index
    %c0_27 = arith.constant 0 : index
    %c0_28 = arith.constant 0 : index
    %49 = vector.load %arg3[%c1, %c0_27, %c0_28] : memref<9x32x32xf32, #tpu.memory_space<vmem>>, vector<1x32x32xf32>
    %50 = vector.shape_cast %49 : vector<1x32x32xf32> to vector<32x32xf32>
    %cst_29 = arith.constant dense<0.000000e+00> : vector<256x32xf32>
    %51 = tpu.matmul %48, %50, %cst_29 {dimension_numbers = #tpu.dot_dimension_numbers<[1], [0], [0], [1], [0, 0, 1, 1], [], []>} : vector<256x32xf32>, vector<32x32xf32>, vector<256x32xf32> -> vector<256x32xf32>
    %52 = arith.addf %47, %51 : vector<256x32xf32>
    %c9 = arith.constant 9 : index
    %c0_30 = arith.constant 0 : index
    %53 = vector.load %arg15[%c9, %c0_30] : memref<304x32xf32, #tpu.memory_space<vmem>>, vector<256x32xf32>
    %cst_31 = arith.constant 0.000000e+00 : f32
    %54 = vector.shape_cast %37 : vector<256x1xi1> to vector<256x1xi1>
    %55 = vector.broadcast %54 : vector<256x1xi1> to vector<256x32xi1>
    %56 = vector.broadcast %cst_31 : f32 to vector<256x32xf32>
    %57 = arith.select %55, %56, %53 : vector<256x32xi1>, vector<256x32xf32>
    %c2 = arith.constant 2 : index
    %c0_32 = arith.constant 0 : index
    %c0_33 = arith.constant 0 : index
    %58 = vector.load %arg3[%c2, %c0_32, %c0_33] : memref<9x32x32xf32, #tpu.memory_space<vmem>>, vector<1x32x32xf32>
    %59 = vector.shape_cast %58 : vector<1x32x32xf32> to vector<32x32xf32>
    %cst_34 = arith.constant dense<0.000000e+00> : vector<256x32xf32>
    %60 = tpu.matmul %57, %59, %cst_34 {dimension_numbers = #tpu.dot_dimension_numbers<[1], [0], [0], [1], [0, 0, 1, 1], [], []>} : vector<256x32xf32>, vector<32x32xf32>, vector<256x32xf32> -> vector<256x32xf32>
    %61 = arith.addf %52, %60 : vector<256x32xf32>
    %c23 = arith.constant 23 : index
    %c0_35 = arith.constant 0 : index
    %62 = vector.load %arg15[%c23, %c0_35] : memref<304x32xf32, #tpu.memory_space<vmem>>, vector<256x32xf32>
    %cst_36 = arith.constant 0.000000e+00 : f32
    %63 = vector.shape_cast %35 : vector<256x1xi1> to vector<256x1xi1>
    %64 = vector.broadcast %63 : vector<256x1xi1> to vector<256x32xi1>
    %65 = vector.broadcast %cst_36 : f32 to vector<256x32xf32>
    %66 = arith.select %64, %65, %62 : vector<256x32xi1>, vector<256x32xf32>
    %c3 = arith.constant 3 : index
    %c0_37 = arith.constant 0 : index
    %c0_38 = arith.constant 0 : index
    %67 = vector.load %arg3[%c3, %c0_37, %c0_38] : memref<9x32x32xf32, #tpu.memory_space<vmem>>, vector<1x32x32xf32>
    %68 = vector.shape_cast %67 : vector<1x32x32xf32> to vector<32x32xf32>
    %cst_39 = arith.constant dense<0.000000e+00> : vector<256x32xf32>
    %69 = tpu.matmul %66, %68, %cst_39 {dimension_numbers = #tpu.dot_dimension_numbers<[1], [0], [0], [1], [0, 0, 1, 1], [], []>} : vector<256x32xf32>, vector<32x32xf32>, vector<256x32xf32> -> vector<256x32xf32>
    %70 = arith.addf %61, %69 : vector<256x32xf32>
    %c24_40 = arith.constant 24 : index
    %c0_41 = arith.constant 0 : index
    %71 = vector.load %arg15[%c24_40, %c0_41] : memref<304x32xf32, #tpu.memory_space<vmem>>, vector<256x32xf32>
    %c4 = arith.constant 4 : index
    %c0_42 = arith.constant 0 : index
    %c0_43 = arith.constant 0 : index
    %72 = vector.load %arg3[%c4, %c0_42, %c0_43] : memref<9x32x32xf32, #tpu.memory_space<vmem>>, vector<1x32x32xf32>
    %73 = vector.shape_cast %72 : vector<1x32x32xf32> to vector<32x32xf32>
    %cst_44 = arith.constant dense<0.000000e+00> : vector<256x32xf32>
    %74 = tpu.matmul %71, %73, %cst_44 {dimension_numbers = #tpu.dot_dimension_numbers<[1], [0], [0], [1], [0, 0, 1, 1], [], []>} : vector<256x32xf32>, vector<32x32xf32>, vector<256x32xf32> -> vector<256x32xf32>
    %75 = arith.addf %70, %74 : vector<256x32xf32>
    %c25 = arith.constant 25 : index
    %c0_45 = arith.constant 0 : index
    %76 = vector.load %arg15[%c25, %c0_45] : memref<304x32xf32, #tpu.memory_space<vmem>>, vector<256x32xf32>
    %cst_46 = arith.constant 0.000000e+00 : f32
    %77 = vector.shape_cast %37 : vector<256x1xi1> to vector<256x1xi1>
    %78 = vector.broadcast %77 : vector<256x1xi1> to vector<256x32xi1>
    %79 = vector.broadcast %cst_46 : f32 to vector<256x32xf32>
    %80 = arith.select %78, %79, %76 : vector<256x32xi1>, vector<256x32xf32>
    %c5 = arith.constant 5 : index
    %c0_47 = arith.constant 0 : index
    %c0_48 = arith.constant 0 : index
    %81 = vector.load %arg3[%c5, %c0_47, %c0_48] : memref<9x32x32xf32, #tpu.memory_space<vmem>>, vector<1x32x32xf32>
    %82 = vector.shape_cast %81 : vector<1x32x32xf32> to vector<32x32xf32>
    %cst_49 = arith.constant dense<0.000000e+00> : vector<256x32xf32>
    %83 = tpu.matmul %80, %82, %cst_49 {dimension_numbers = #tpu.dot_dimension_numbers<[1], [0], [0], [1], [0, 0, 1, 1], [], []>} : vector<256x32xf32>, vector<32x32xf32>, vector<256x32xf32> -> vector<256x32xf32>
    %84 = arith.addf %75, %83 : vector<256x32xf32>
    %c39 = arith.constant 39 : index
    %c0_50 = arith.constant 0 : index
    %85 = vector.load %arg15[%c39, %c0_50] : memref<304x32xf32, #tpu.memory_space<vmem>>, vector<256x32xf32>
    %cst_51 = arith.constant 0.000000e+00 : f32
    %86 = vector.shape_cast %35 : vector<256x1xi1> to vector<256x1xi1>
    %87 = vector.broadcast %86 : vector<256x1xi1> to vector<256x32xi1>
    %88 = vector.broadcast %cst_51 : f32 to vector<256x32xf32>
    %89 = arith.select %87, %88, %85 : vector<256x32xi1>, vector<256x32xf32>
    %c6 = arith.constant 6 : index
    %c0_52 = arith.constant 0 : index
    %c0_53 = arith.constant 0 : index
    %90 = vector.load %arg3[%c6, %c0_52, %c0_53] : memref<9x32x32xf32, #tpu.memory_space<vmem>>, vector<1x32x32xf32>
    %91 = vector.shape_cast %90 : vector<1x32x32xf32> to vector<32x32xf32>
    %cst_54 = arith.constant dense<0.000000e+00> : vector<256x32xf32>
    %92 = tpu.matmul %89, %91, %cst_54 {dimension_numbers = #tpu.dot_dimension_numbers<[1], [0], [0], [1], [0, 0, 1, 1], [], []>} : vector<256x32xf32>, vector<32x32xf32>, vector<256x32xf32> -> vector<256x32xf32>
    %93 = arith.addf %84, %92 : vector<256x32xf32>
    %c40 = arith.constant 40 : index
    %c0_55 = arith.constant 0 : index
    %94 = vector.load %arg15[%c40, %c0_55] : memref<304x32xf32, #tpu.memory_space<vmem>>, vector<256x32xf32>
    %c7_56 = arith.constant 7 : index
    %c0_57 = arith.constant 0 : index
    %c0_58 = arith.constant 0 : index
    %95 = vector.load %arg3[%c7_56, %c0_57, %c0_58] : memref<9x32x32xf32, #tpu.memory_space<vmem>>, vector<1x32x32xf32>
    %96 = vector.shape_cast %95 : vector<1x32x32xf32> to vector<32x32xf32>
    %cst_59 = arith.constant dense<0.000000e+00> : vector<256x32xf32>
    %97 = tpu.matmul %94, %96, %cst_59 {dimension_numbers = #tpu.dot_dimension_numbers<[1], [0], [0], [1], [0, 0, 1, 1], [], []>} : vector<256x32xf32>, vector<32x32xf32>, vector<256x32xf32> -> vector<256x32xf32>
    %98 = arith.addf %93, %97 : vector<256x32xf32>
    %c41 = arith.constant 41 : index
    %c0_60 = arith.constant 0 : index
    %99 = vector.load %arg15[%c41, %c0_60] : memref<304x32xf32, #tpu.memory_space<vmem>>, vector<256x32xf32>
    %cst_61 = arith.constant 0.000000e+00 : f32
    %100 = vector.shape_cast %37 : vector<256x1xi1> to vector<256x1xi1>
    %101 = vector.broadcast %100 : vector<256x1xi1> to vector<256x32xi1>
    %102 = vector.broadcast %cst_61 : f32 to vector<256x32xf32>
    %103 = arith.select %101, %102, %99 : vector<256x32xi1>, vector<256x32xf32>
    %c8_62 = arith.constant 8 : index
    %c0_63 = arith.constant 0 : index
    %c0_64 = arith.constant 0 : index
    %104 = vector.load %arg3[%c8_62, %c0_63, %c0_64] : memref<9x32x32xf32, #tpu.memory_space<vmem>>, vector<1x32x32xf32>
    %105 = vector.shape_cast %104 : vector<1x32x32xf32> to vector<32x32xf32>
    %cst_65 = arith.constant dense<0.000000e+00> : vector<256x32xf32>
    %106 = tpu.matmul %103, %105, %cst_65 {dimension_numbers = #tpu.dot_dimension_numbers<[1], [0], [0], [1], [0, 0, 1, 1], [], []>} : vector<256x32xf32>, vector<32x32xf32>, vector<256x32xf32> -> vector<256x32xf32>
    %107 = arith.addf %98, %106 : vector<256x32xf32>
    %c0_66 = arith.constant 0 : index
    %c0_67 = arith.constant 0 : index
    %108 = vector.load %arg8[%c0_66, %c0_67] : memref<1x32xf32, #tpu.memory_space<vmem>>, vector<1x32xf32>
    %109 = vector.broadcast %108 : vector<1x32xf32> to vector<256x32xf32>
    %110 = arith.mulf %107, %109 : vector<256x32xf32>
    %c0_68 = arith.constant 0 : index
    %c0_69 = arith.constant 0 : index
    %111 = vector.load %arg9[%c0_68, %c0_69] : memref<1x32xf32, #tpu.memory_space<vmem>>, vector<1x32xf32>
    %112 = vector.broadcast %111 : vector<1x32xf32> to vector<256x32xf32>
    %113 = arith.addf %110, %112 : vector<256x32xf32>
    %cst_70 = arith.constant 0.000000e+00 : f32
    %114 = vector.broadcast %cst_70 : f32 to vector<256x32xf32>
    %115 = arith.maximumf %113, %114 : vector<256x32xf32>
    %c0_71 = arith.constant 0 : index
    %c0_72 = arith.constant 0 : index
    %116 = vector.load %arg4[%c0_71, %c0_72] : memref<32x128xf32, #tpu.memory_space<vmem>>, vector<32x128xf32>
    %cst_73 = arith.constant dense<0.000000e+00> : vector<256x128xf32>
    %117 = tpu.matmul %115, %116, %cst_73 {dimension_numbers = #tpu.dot_dimension_numbers<[1], [0], [0], [1], [0, 0, 1, 1], [], []>} : vector<256x32xf32>, vector<32x128xf32>, vector<256x128xf32> -> vector<256x128xf32>
    %c0_74 = arith.constant 0 : index
    %c0_75 = arith.constant 0 : index
    %118 = vector.load %arg10[%c0_74, %c0_75] : memref<1x128xf32, #tpu.memory_space<vmem>>, vector<1x128xf32>
    %119 = vector.broadcast %118 : vector<1x128xf32> to vector<256x128xf32>
    %120 = arith.mulf %117, %119 : vector<256x128xf32>
    %c0_76 = arith.constant 0 : index
    %c0_77 = arith.constant 0 : index
    %121 = vector.load %arg11[%c0_76, %c0_77] : memref<1x128xf32, #tpu.memory_space<vmem>>, vector<1x128xf32>
    %122 = vector.broadcast %121 : vector<1x128xf32> to vector<256x128xf32>
    %123 = arith.addf %120, %122 : vector<256x128xf32>
    %c0_78 = arith.constant 0 : index
    %c0_79 = arith.constant 0 : index
    %124 = vector.load %arg5[%c0_78, %c0_79] : memref<16x128xf32, #tpu.memory_space<vmem>>, vector<16x128xf32>
    %cst_80 = arith.constant dense<0.000000e+00> : vector<256x128xf32>
    %125 = tpu.matmul %1, %124, %cst_80 {dimension_numbers = #tpu.dot_dimension_numbers<[1], [0], [0], [1], [0, 0, 1, 1], [], []>} : vector<256x16xf32>, vector<16x128xf32>, vector<256x128xf32> -> vector<256x128xf32>
    %c0_81 = arith.constant 0 : index
    %c0_82 = arith.constant 0 : index
    %126 = vector.load %arg12[%c0_81, %c0_82] : memref<1x128xf32, #tpu.memory_space<vmem>>, vector<1x128xf32>
    %127 = vector.broadcast %126 : vector<1x128xf32> to vector<256x128xf32>
    %128 = arith.mulf %125, %127 : vector<256x128xf32>
    %c0_83 = arith.constant 0 : index
    %c0_84 = arith.constant 0 : index
    %129 = vector.load %arg13[%c0_83, %c0_84] : memref<1x128xf32, #tpu.memory_space<vmem>>, vector<1x128xf32>
    %130 = vector.broadcast %129 : vector<1x128xf32> to vector<256x128xf32>
    %131 = arith.addf %128, %130 : vector<256x128xf32>
    %132 = arith.addf %123, %131 : vector<256x128xf32>
    %cst_85 = arith.constant 0.000000e+00 : f32
    %133 = vector.broadcast %cst_85 : f32 to vector<256x128xf32>
    %134 = arith.maximumf %132, %133 : vector<256x128xf32>
    %c0_86 = arith.constant 0 : index
    %c0_87 = arith.constant 0 : index
    %c0_88 = arith.constant 0 : index
    %135 = vector.load %arg14[%c0_86, %c0_87, %c0_88] : memref<1x256x128xf32, #tpu.memory_space<vmem>>, vector<1x256x128xf32>
    %136 = vector.shape_cast %135 : vector<1x256x128xf32> to vector<256x128xf32>
    %137 = vector.shape_cast %134 : vector<256x128xf32> to vector<1x256x128xf32>
    tpu.vector_store %arg14[%c0_86, %c0_87, %c0_88], %137 {strides = array<i32>} : memref<1x256x128xf32, #tpu.memory_space<vmem>>, vector<1x256x128xf32>,
    return
  }
  func.func @transform_0(%arg0: i32) -> (i32, i32, i32) {
    %c0_i32 = arith.constant 0 : i32
    %c0_i32_0 = arith.constant 0 : i32
    %c0_i32_1 = arith.constant 0 : i32
    return %arg0, %c0_i32, %c0_i32_0 : i32, i32, i32
  }
  func.func @transform_1(%arg0: i32) -> (i32, i32) {
    %c0_i32 = arith.constant 0 : i32
    %c0_i32_0 = arith.constant 0 : i32
    %c0_i32_1 = arith.constant 0 : i32
    return %c0_i32, %c0_i32_0 : i32, i32
  }
  func.func @transform_2(%arg0: i32) -> (i32, i32, i32) {
    %c0_i32 = arith.constant 0 : i32
    %c0_i32_0 = arith.constant 0 : i32
    %c0_i32_1 = arith.constant 0 : i32
    %c0_i32_2 = arith.constant 0 : i32
    return %c0_i32, %c0_i32_0, %c0_i32_1 : i32, i32, i32
  }
  func.func @transform_3(%arg0: i32) -> (i32, i32) {
    %c0_i32 = arith.constant 0 : i32
    %c0_i32_0 = arith.constant 0 : i32
    %c0_i32_1 = arith.constant 0 : i32
    return %c0_i32, %c0_i32_0 : i32, i32
  }
  func.func @transform_4(%arg0: i32) -> (i32, i32) {
    %c0_i32 = arith.constant 0 : i32
    %c0_i32_0 = arith.constant 0 : i32
    %c0_i32_1 = arith.constant 0 : i32
    return %c0_i32, %c0_i32_0 : i32, i32
  }
  func.func @transform_5(%arg0: i32) -> (i32, i32) {
    %c0_i32 = arith.constant 0 : i32
    %c0_i32_0 = arith.constant 0 : i32
    %c0_i32_1 = arith.constant 0 : i32
    return %c0_i32, %c0_i32_0 : i32, i32
  }
  func.func @transform_6(%arg0: i32) -> (i32, i32) {
    %c0_i32 = arith.constant 0 : i32
    %c0_i32_0 = arith.constant 0 : i32
    %c0_i32_1 = arith.constant 0 : i32
    return %c0_i32, %c0_i32_0 : i32, i32
  }
  func.func @transform_7(%arg0: i32) -> (i32, i32) {
    %c0_i32 = arith.constant 0 : i32
    %c0_i32_0 = arith.constant 0 : i32
    %c0_i32_1 = arith.constant 0 : i32
    return %c0_i32, %c0_i32_0 : i32, i32
  }
  func.func @transform_8(%arg0: i32) -> (i32, i32) {
    %c0_i32 = arith.constant 0 : i32
    %c0_i32_0 = arith.constant 0 : i32
    %c0_i32_1 = arith.constant 0 : i32
    return %c0_i32, %c0_i32_0 : i32, i32
  }
  func.func @transform_9(%arg0: i32) -> (i32, i32) {
    %c0_i32 = arith.constant 0 : i32
    %c0_i32_0 = arith.constant 0 : i32
    %c0_i32_1 = arith.constant 0 : i32
    return %c0_i32, %c0_i32_0 : i32, i32
  }
  func.func @transform_10(%arg0: i32) -> (i32, i32) {
    %c0_i32 = arith.constant 0 : i32
    %c0_i32_0 = arith.constant 0 : i32
    %c0_i32_1 = arith.constant 0 : i32
    return %c0_i32, %c0_i32_0 : i32, i32
  }
  func.func @transform_11(%arg0: i32) -> (i32, i32) {
    %c0_i32 = arith.constant 0 : i32
    %c0_i32_0 = arith.constant 0 : i32
    %c0_i32_1 = arith.constant 0 : i32
    return %c0_i32, %c0_i32_0 : i32, i32
  }
  func.func @transform_12(%arg0: i32) -> (i32, i32) {
    %c0_i32 = arith.constant 0 : i32
    %c0_i32_0 = arith.constant 0 : i32
    %c0_i32_1 = arith.constant 0 : i32
    return %c0_i32, %c0_i32_0 : i32, i32
  }
  func.func @transform_13(%arg0: i32) -> (i32, i32, i32) {
    %c0_i32 = arith.constant 0 : i32
    %c0_i32_0 = arith.constant 0 : i32
    %c0_i32_1 = arith.constant 0 : i32
    return %arg0, %c0_i32, %c0_i32_0 : i32, i32, i32
  }
}

</mosaic_0001>

<llo_original>
// kernel: tpu_custom_call.1
$region0: #{tpu_custom_call.1}
  #allocation0 [shape = 'u32[]', space=smem, size = 0x4, offset = 0x4, fixed_abs, tag = 'smem constant byte address 0x4 - core index']
  #allocation1 [shape = 'u32[144,128]{1,0:T(1,128)}', space=vmem, size = 0x12000, scoped, tag = 'internal scratch']
  #allocation2 [shape = 'f32[304,32]{1,0:T(8,128)}', space=vmem, size = 0x26000, scoped, tag = 'scratch operand']
  %s0 = inlined_call_operand.vmem [shape: f32[2,256,16], index: 0, kind: input, shape index: {}]
  %s1 = inlined_call_operand.vmem [shape: f32[16,32], index: 1, kind: input, shape index: {}]
  %s2 = inlined_call_operand.vmem [shape: f32[9,32,32], index: 2, kind: input, shape index: {}]
  %s3 = inlined_call_operand.vmem [shape: f32[32,128], index: 3, kind: input, shape index: {}]
  %s4 = inlined_call_operand.vmem [shape: f32[16,128], index: 4, kind: input, shape index: {}]
  %s5 = inlined_call_operand.vmem [shape: f32[1,32], index: 5, kind: input, shape index: {}]
  %s6 = inlined_call_operand.vmem [shape: f32[1,32], index: 6, kind: input, shape index: {}]
  %s7 = inlined_call_operand.vmem [shape: f32[1,32], index: 7, kind: input, shape index: {}]
  %s8 = inlined_call_operand.vmem [shape: f32[1,32], index: 8, kind: input, shape index: {}]
  %s9 = inlined_call_operand.vmem [shape: f32[1,128], index: 9, kind: input, shape index: {}]
  %s10 = inlined_call_operand.vmem [shape: f32[1,128], index: 10, kind: input, shape index: {}]
  %s11 = inlined_call_operand.vmem [shape: f32[1,128], index: 11, kind: input, shape index: {}]
  %s12 = inlined_call_operand.vmem [shape: f32[1,128], index: 12, kind: input, shape index: {}]
  %s13 = inlined_call_operand.hbm [shape: f32[2,256,128], index: 13, kind: output, shape index: {}]
  %s14 = sld [smem:[#allocation0]]
  $region85: #{tpu_custom_call.1} parent=0
    _
  %s16 = ssub.s32 1, %s14
  %s17 = scalar_select 0, %s16, %s14
  $region1: #{tpu_custom_call.1} parent=0
    #allocation3 [shape = 'u8[262144]{0}', space=vmem, size = 0x40000, scoped, tag = 'output window, operand 0']
    #allocation4 [shape = 's32[2]{0}', space=sflag, size = 0x8, scoped, tag = 'scoped memory for tpu_custom_call.1']
    %18 = vsyncpa [#allocation4], 0
    %s19 = scalar_lea.sflag [#allocation4], 1
    %20 = vsyncpa %s19, 0
    loop: start=0, step=1, limit=4
    $region2: #{tpu_custom_call.1} parent=1 // loop_pre_header
      _
    $region3: #{tpu_custom_call.1} parent=1 // loop_header
      %s22 = sphi 0, %s26
      %p23 = scmp.ge.s32.totalorder %s22, 4
      %s32 = sphi 0, %s34
      %s35 = sphi 0, %s32
      %s36 = sphi 0, %s35
      %s52 = sphi 0, %s36
      %s56 = sphi 0, %s56
      %s58 = sphi 0, %s56
      %s59 = sphi 0, %s58
      %s73 = sphi 0, %s59
      %s77 = sphi 0, %s77
      %s79 = sphi 0, %s77
      %s80 = sphi 0, %s79
      %s94 = sphi 0, %s80
      %s98 = sphi 0, %s98
      %s100 = sphi 0, %s98
      %s101 = sphi 0, %s100
      %s115 = sphi 0, %s101
      %s119 = sphi 0, %s119
      %s121 = sphi 0, %s119
      %s122 = sphi 0, %s121
      %s136 = sphi 0, %s122
      %s140 = sphi 0, %s140
      %s142 = sphi 0, %s140
      %s143 = sphi 0, %s142
      %s157 = sphi 0, %s143
      %s161 = sphi 0, %s161
      %s163 = sphi 0, %s161
      %s164 = sphi 0, %s163
      %s178 = sphi 0, %s164
      %s182 = sphi 0, %s182
      %s184 = sphi 0, %s182
      %s185 = sphi 0, %s184
      %s199 = sphi 0, %s185
      %s203 = sphi 0, %s203
      %s205 = sphi 0, %s203
      %s206 = sphi 0, %s205
      %s220 = sphi 0, %s206
      %s224 = sphi 0, %s224
      %s226 = sphi 0, %s224
      %s227 = sphi 0, %s226
      %s241 = sphi 0, %s227
      %s245 = sphi 0, %s245
      %s247 = sphi 0, %s245
      %s248 = sphi 0, %s247
      %s262 = sphi 0, %s248
      %s266 = sphi 0, %s266
      %s268 = sphi 0, %s266
      %s269 = sphi 0, %s268
      %s283 = sphi 0, %s269
      %s287 = sphi 0, %s287
      %s289 = sphi 0, %s287
      %s290 = sphi 0, %s289
      %s304 = sphi 0, %s290
      %s310 = sphi 0, %s312
      %s313 = sphi 0, %s310
      %s314 = sphi 0, %s313
      %s330 = sphi 0, %s314
    $region4: #{tpu_custom_call.1} parent=1 // loop_header_branch
      %25 = sbr.rel (%p23) target = $region8
    $region5: #{tpu_custom_call.1} parent=1 // loop_body
      %s27 = ssub.s32 %s22, 1
      %s28 = ssub.s32 %s22, 2
      %s29 = sadd.s32 %s22, 1
      %s30 = ssub.s32 %s22, %s29
      %p31 = scmp.eq.s32.totalorder %s30, 0
      %s33 = sadd.s32 %s32, 1
      %s34 = scalar_select %p31, %s32, %s33
      %p37 = pneg %p31
      %p38 = scmp.eq.s32.totalorder %s22, 1
      %p39 = por %p37, %p38
      %p40 = scmp.ne.s32.totalorder %s32, %s35
      %p41 = scmp.eq.s32.totalorder %s22, 0
      %p42 = por %p40, %p41
      %p43 = scmp.ne.s32.totalorder %s32, %s35
      %p44 = scmp.eq.s32.totalorder %s27, 1
      %p45 = por %p43, %p44
      %p46 = scmp.ne.s32.totalorder %s35, %s36
      %p47 = scmp.eq.s32.totalorder %s27, 0
      %p48 = por %p46, %p47
      %p49 = scmp.ne.s32.totalorder %s35, %s36
      %p50 = scmp.eq.s32.totalorder %s28, 1
      %p51 = por %p49, %p50
      %p53 = scmp.ne.s32.totalorder %s36, %s52
      %p54 = scmp.eq.s32.totalorder %s28, 0
      %p55 = por %p53, %p54
      %s57 = sadd.s32 %s56, 1
      %p60 = scmp.eq.s32.totalorder %s22, 1
      %p61 = scmp.ne.s32.totalorder %s56, %s58
      %p62 = scmp.eq.s32.totalorder %s22, 0
      %p63 = por %p61, %p62
      %p64 = scmp.ne.s32.totalorder %s56, %s58
      %p65 = scmp.eq.s32.totalorder %s27, 1
      %p66 = por %p64, %p65
      %p67 = scmp.ne.s32.totalorder %s58, %s59
      %p68 = scmp.eq.s32.totalorder %s27, 0
      %p69 = por %p67, %p68
      %p70 = scmp.ne.s32.totalorder %s58, %s59
      %p71 = scmp.eq.s32.totalorder %s28, 1
      %p72 = por %p70, %p71
      %p74 = scmp.ne.s32.totalorder %s59, %s73
      %p75 = scmp.eq.s32.totalorder %s28, 0
      %p76 = por %p74, %p75
      %s78 = sadd.s32 %s77, 1
      %p81 = scmp.eq.s32.totalorder %s22, 1
      %p82 = scmp.ne.s32.totalorder %s77, %s79
      %p83 = scmp.eq.s32.totalorder %s22, 0
      %p84 = por %p82, %p83
      %p85 = scmp.ne.s32.totalorder %s77, %s79
      %p86 = scmp.eq.s32.totalorder %s27, 1
      %p87 = por %p85, %p86
      %p88 = scmp.ne.s32.totalorder %s79, %s80
      %p89 = scmp.eq.s32.totalorder %s27, 0
      %p90 = por %p88, %p89
      %p91 = scmp.ne.s32.totalorder %s79, %s80
      %p92 = scmp.eq.s32.totalorder %s28, 1
      %p93 = por %p91, %p92
      %p95 = scmp.ne.s32.totalorder %s80, %s94
      %p96 = scmp.eq.s32.totalorder %s28, 0
      %p97 = por %p95, %p96
      %s99 = sadd.s32 %s98, 1
      %p102 = scmp.eq.s32.totalorder %s22, 1
      %p103 = scmp.ne.s32.totalorder %s98, %s100
      %p104 = scmp.eq.s32.totalorder %s22, 0
      %p105 = por %p103, %p104
      %p106 = scmp.ne.s32.totalorder %s98, %s100
      %p107 = scmp.eq.s32.totalorder %s27, 1
      %p108 = por %p106, %p107
      %p109 = scmp.ne.s32.totalorder %s100, %s101
      %p110 = scmp.eq.s32.totalorder %s27, 0
      %p111 = por %p109, %p110
      %p112 = scmp.ne.s32.totalorder %s100, %s101
      %p113 = scmp.eq.s32.totalorder %s28, 1
      %p114 = por %p112, %p113
      %p116 = scmp.ne.s32.totalorder %s101, %s115
      %p117 = scmp.eq.s32.totalorder %s28, 0
      %p118 = por %p116, %p117
      %s120 = sadd.s32 %s119, 1
      %p123 = scmp.eq.s32.totalorder %s22, 1
      %p124 = scmp.ne.s32.totalorder %s119, %s121
      %p125 = scmp.eq.s32.totalorder %s22, 0
      %p126 = por %p124, %p125
      %p127 = scmp.ne.s32.totalorder %s119, %s121
      %p128 = scmp.eq.s32.totalorder %s27, 1
      %p129 = por %p127, %p128
      %p130 = scmp.ne.s32.totalorder %s121, %s122
      %p131 = scmp.eq.s32.totalorder %s27, 0
      %p132 = por %p130, %p131
      %p133 = scmp.ne.s32.totalorder %s121, %s122
      %p134 = scmp.eq.s32.totalorder %s28, 1
      %p135 = por %p133, %p134
      %p137 = scmp.ne.s32.totalorder %s122, %s136
      %p138 = scmp.eq.s32.totalorder %s28, 0
      %p139 = por %p137, %p138
      %s141 = sadd.s32 %s140, 1
      %p144 = scmp.eq.s32.totalorder %s22, 1
      %p145 = scmp.ne.s32.totalorder %s140, %s142
      %p146 = scmp.eq.s32.totalorder %s22, 0
      %p147 = por %p145, %p146
      %p148 = scmp.ne.s32.totalorder %s140, %s142
      %p149 = scmp.eq.s32.totalorder %s27, 1
      %p150 = por %p148, %p149
      %p151 = scmp.ne.s32.totalorder %s142, %s143
      %p152 = scmp.eq.s32.totalorder %s27, 0
      %p153 = por %p151, %p152
      %p154 = scmp.ne.s32.totalorder %s142, %s143
      %p155 = scmp.eq.s32.totalorder %s28, 1
      %p156 = por %p154, %p155
      %p158 = scmp.ne.s32.totalorder %s143, %s157
      %p159 = scmp.eq.s32.totalorder %s28, 0
      %p160 = por %p158, %p159
      %s162 = sadd.s32 %s161, 1
      %p165 = scmp.eq.s32.totalorder %s22, 1
      %p166 = scmp.ne.s32.totalorder %s161, %s163
      %p167 = scmp.eq.s32.totalorder %s22, 0
      %p168 = por %p166, %p167
      %p169 = scmp.ne.s32.totalorder %s161, %s163
      %p170 = scmp.eq.s32.totalorder %s27, 1
      %p171 = por %p169, %p170
      %p172 = scmp.ne.s32.totalorder %s163, %s164
      %p173 = scmp.eq.s32.totalorder %s27, 0
      %p174 = por %p172, %p173
      %p175 = scmp.ne.s32.totalorder %s163, %s164
      %p176 = scmp.eq.s32.totalorder %s28, 1
      %p177 = por %p175, %p176
      %p179 = scmp.ne.s32.totalorder %s164, %s178
      %p180 = scmp.eq.s32.totalorder %s28, 0
      %p181 = por %p179, %p180
      %s183 = sadd.s32 %s182, 1
      %p186 = scmp.eq.s32.totalorder %s22, 1
      %p187 = scmp.ne.s32.totalorder %s182, %s184
      %p188 = scmp.eq.s32.totalorder %s22, 0
      %p189 = por %p187, %p188
      %p190 = scmp.ne.s32.totalorder %s182, %s184
      %p191 = scmp.eq.s32.totalorder %s27, 1
      %p192 = por %p190, %p191
      %p193 = scmp.ne.s32.totalorder %s184, %s185
      %p194 = scmp.eq.s32.totalorder %s27, 0
      %p195 = por %p193, %p194
      %p196 = scmp.ne.s32.totalorder %s184, %s185
      %p197 = scmp.eq.s32.totalorder %s28, 1
      %p198 = por %p196, %p197
      %p200 = scmp.ne.s32.totalorder %s185, %s199
      %p201 = scmp.eq.s32.totalorder %s28, 0
      %p202 = por %p200, %p201
      %s204 = sadd.s32 %s203, 1
      %p207 = scmp.eq.s32.totalorder %s22, 1
      %p208 = scmp.ne.s32.totalorder %s203, %s205
      %p209 = scmp.eq.s32.totalorder %s22, 0
      %p210 = por %p208, %p209
      %p211 = scmp.ne.s32.totalorder %s203, %s205
      %p212 = scmp.eq.s32.totalorder %s27, 1
      %p213 = por %p211, %p212
      %p214 = scmp.ne.s32.totalorder %s205, %s206
      %p215 = scmp.eq.s32.totalorder %s27, 0
      %p216 = por %p214, %p215
      %p217 = scmp.ne.s32.totalorder %s205, %s206
      %p218 = scmp.eq.s32.totalorder %s28, 1
      %p219 = por %p217, %p218
      %p221 = scmp.ne.s32.totalorder %s206, %s220
      %p222 = scmp.eq.s32.totalorder %s28, 0
      %p223 = por %p221, %p222
      %s225 = sadd.s32 %s224, 1
      %p228 = scmp.eq.s32.totalorder %s22, 1
      %p229 = scmp.ne.s32.totalorder %s224, %s226
      %p230 = scmp.eq.s32.totalorder %s22, 0
      %p231 = por %p229, %p230
      %p232 = scmp.ne.s32.totalorder %s224, %s226
      %p233 = scmp.eq.s32.totalorder %s27, 1
      %p234 = por %p232, %p233
      %p235 = scmp.ne.s32.totalorder %s226, %s227
      %p236 = scmp.eq.s32.totalorder %s27, 0
      %p237 = por %p235, %p236
      %p238 = scmp.ne.s32.totalorder %s226, %s227
      %p239 = scmp.eq.s32.totalorder %s28, 1
      %p240 = por %p238, %p239
      %p242 = scmp.ne.s32.totalorder %s227, %s241
      %p243 = scmp.eq.s32.totalorder %s28, 0
      %p244 = por %p242, %p243
      %s246 = sadd.s32 %s245, 1
      %p249 = scmp.eq.s32.totalorder %s22, 1
      %p250 = scmp.ne.s32.totalorder %s245, %s247
      %p251 = scmp.eq.s32.totalorder %s22, 0
      %p252 = por %p250, %p251
      %p253 = scmp.ne.s32.totalorder %s245, %s247
      %p254 = scmp.eq.s32.totalorder %s27, 1
      %p255 = por %p253, %p254
      %p256 = scmp.ne.s32.totalorder %s247, %s248
      %p257 = scmp.eq.s32.totalorder %s27, 0
      %p258 = por %p256, %p257
      %p259 = scmp.ne.s32.totalorder %s247, %s248
      %p260 = scmp.eq.s32.totalorder %s28, 1
      %p261 = por %p259, %p260
      %p263 = scmp.ne.s32.totalorder %s248, %s262
      %p264 = scmp.eq.s32.totalorder %s28, 0
      %p265 = por %p263, %p264
      %s267 = sadd.s32 %s266, 1
      %p270 = scmp.eq.s32.totalorder %s22, 1
      %p271 = scmp.ne.s32.totalorder %s266, %s268
      %p272 = scmp.eq.s32.totalorder %s22, 0
      %p273 = por %p271, %p272
      %p274 = scmp.ne.s32.totalorder %s266, %s268
      %p275 = scmp.eq.s32.totalorder %s27, 1
      %p276 = por %p274, %p275
      %p277 = scmp.ne.s32.totalorder %s268, %s269
      %p278 = scmp.eq.s32.totalorder %s27, 0
      %p279 = por %p277, %p278
      %p280 = scmp.ne.s32.totalorder %s268, %s269
      %p281 = scmp.eq.s32.totalorder %s28, 1
      %p282 = por %p280, %p281
      %p284 = scmp.ne.s32.totalorder %s269, %s283
      %p285 = scmp.eq.s32.totalorder %s28, 0
      %p286 = por %p284, %p285
      %s288 = sadd.s32 %s287, 1
      %p291 = scmp.eq.s32.totalorder %s22, 1
      %p292 = scmp.ne.s32.totalorder %s287, %s289
      %p293 = scmp.eq.s32.totalorder %s22, 0
      %p294 = por %p292, %p293
      %p295 = scmp.ne.s32.totalorder %s287, %s289
      %p296 = scmp.eq.s32.totalorder %s27, 1
      %p297 = por %p295, %p296
      %p298 = scmp.ne.s32.totalorder %s289, %s290
      %p299 = scmp.eq.s32.totalorder %s27, 0
      %p300 = por %p298, %p299
      %p301 = scmp.ne.s32.totalorder %s289, %s290
      %p302 = scmp.eq.s32.totalorder %s28, 1
      %p303 = por %p301, %p302
      %p305 = scmp.ne.s32.totalorder %s290, %s304
      %p306 = scmp.eq.s32.totalorder %s28, 0
      %p307 = por %p305, %p306
      %s308 = ssub.s32 %s22, %s29
      %p309 = scmp.eq.s32.totalorder %s308, 0
      %s311 = sadd.s32 %s310, 1
      %s312 = scalar_select %p309, %s310, %s311
      %p315 = pneg %p309
      %p316 = scmp.eq.s32.totalorder %s22, 1
      %p317 = por %p315, %p316
      %p318 = scmp.ne.s32.totalorder %s310, %s313
      %p319 = scmp.eq.s32.totalorder %s22, 0
      %p320 = por %p318, %p319
      %p321 = scmp.ne.s32.totalorder %s310, %s313
      %p322 = scmp.eq.s32.totalorder %s27, 1
      %p323 = por %p321, %p322
      %p324 = scmp.ne.s32.totalorder %s313, %s314
      %p325 = scmp.eq.s32.totalorder %s27, 0
      %p326 = por %p324, %p325
      %p327 = scmp.ne.s32.totalorder %s313, %s314
      %p328 = scmp.eq.s32.totalorder %s28, 1
      %p329 = por %p327, %p328
      %p331 = scmp.ne.s32.totalorder %s314, %s330
      %p332 = scmp.eq.s32.totalorder %s28, 0
      %p333 = por %p331, %p332
      %p334 = scmp.le.s32.totalorder 1, %s22
      %p335 = scmp.lt.s32.totalorder %s22, 3
      %p336 = pnand %p334, %p335
      %p337 = pneg %p336
      // Predicated region
      $region9: #{tpu_custom_call.1} parent=5 // pred_check
        _
      $region10: #{tpu_custom_call.1} parent=5 // pred_check_branch
        %339 = sbr.rel (%p336) target = $region12
      $region11: #{tpu_custom_call.1} parent=5 // pred_region
        %s340 = ssub.s32 %s22, 1
        // Predicated region
        $region13: #{tpu_custom_call.1} parent=11 // pred_check
          %p341 = pneg %p69
        $region14: #{tpu_custom_call.1} parent=11 // pred_check_branch
          %343 = sbr.rel (%p341) target = $region16
        $region15: #{tpu_custom_call.1} parent=11 // pred_region
          _
        $region16: #{tpu_custom_call.1} parent=11 // pred_fallthru
          _
        // Predicated region
        $region17: #{tpu_custom_call.1} parent=11 // pred_check
          %p344 = pneg %p90
        $region18: #{tpu_custom_call.1} parent=11 // pred_check_branch
          %346 = sbr.rel (%p344) target = $region20
        $region19: #{tpu_custom_call.1} parent=11 // pred_region
          _
        $region20: #{tpu_custom_call.1} parent=11 // pred_fallthru
          _
        // Predicated region
        $region21: #{tpu_custom_call.1} parent=11 // pred_check
          %p347 = pneg %p111
        $region22: #{tpu_custom_call.1} parent=11 // pred_check_branch
          %349 = sbr.rel (%p347) target = $region24
        $region23: #{tpu_custom_call.1} parent=11 // pred_region
          _
        $region24: #{tpu_custom_call.1} parent=11 // pred_fallthru
          _
        // Predicated region
        $region25: #{tpu_custom_call.1} parent=11 // pred_check
          %p350 = pneg %p132
        $region26: #{tpu_custom_call.1} parent=11 // pred_check_branch
          %352 = sbr.rel (%p350) target = $region28
        $region27: #{tpu_custom_call.1} parent=11 // pred_region
          _
        $region28: #{tpu_custom_call.1} parent=11 // pred_fallthru
          _
        // Predicated region
        $region29: #{tpu_custom_call.1} parent=11 // pred_check
          %p353 = pneg %p153
        $region30: #{tpu_custom_call.1} parent=11 // pred_check_branch
          %355 = sbr.rel (%p353) target = $region32
        $region31: #{tpu_custom_call.1} parent=11 // pred_region
          _
        $region32: #{tpu_custom_call.1} parent=11 // pred_fallthru
          _
        // Predicated region
        $region33: #{tpu_custom_call.1} parent=11 // pred_check
          %p356 = pneg %p174
        $region34: #{tpu_custom_call.1} parent=11 // pred_check_branch
          %358 = sbr.rel (%p356) target = $region36
        $region35: #{tpu_custom_call.1} parent=11 // pred_region
          _
        $region36: #{tpu_custom_call.1} parent=11 // pred_fallthru
          _
        // Predicated region
        $region37: #{tpu_custom_call.1} parent=11 // pred_check
          %p359 = pneg %p195
        $region38: #{tpu_custom_call.1} parent=11 // pred_check_branch
          %361 = sbr.rel (%p359) target = $region40
        $region39: #{tpu_custom_call.1} parent=11 // pred_region
          _
        $region40: #{tpu_custom_call.1} parent=11 // pred_fallthru
          _
        // Predicated region
        $region41: #{tpu_custom_call.1} parent=11 // pred_check
          %p362 = pneg %p216
        $region42: #{tpu_custom_call.1} parent=11 // pred_check_branch
          %364 = sbr.rel (%p362) target = $region44
        $region43: #{tpu_custom_call.1} parent=11 // pred_region
          _
        $region44: #{tpu_custom_call.1} parent=11 // pred_fallthru
          _
        // Predicated region
        $region45: #{tpu_custom_call.1} parent=11 // pred_check
          %p365 = pneg %p237
        $region46: #{tpu_custom_call.1} parent=11 // pred_check_branch
          %367 = sbr.rel (%p365) target = $region48
        $region47: #{tpu_custom_call.1} parent=11 // pred_region
          _
        $region48: #{tpu_custom_call.1} parent=11 // pred_fallthru
          _
        // Predicated region
        $region49: #{tpu_custom_call.1} parent=11 // pred_check
          %p368 = pneg %p258
        $region50: #{tpu_custom_call.1} parent=11 // pred_check_branch
          %370 = sbr.rel (%p368) target = $region52
        $region51: #{tpu_custom_call.1} parent=11 // pred_region
          _
        $region52: #{tpu_custom_call.1} parent=11 // pred_fallthru
          _
        // Predicated region
        $region53: #{tpu_custom_call.1} parent=11 // pred_check
          %p371 = pneg %p279
        $region54: #{tpu_custom_call.1} parent=11 // pred_check_branch
          %373 = sbr.rel (%p371) target = $region56
        $region55: #{tpu_custom_call.1} parent=11 // pred_region
          _
        $region56: #{tpu_custom_call.1} parent=11 // pred_fallthru
          _
        // Predicated region
        $region57: #{tpu_custom_call.1} parent=11 // pred_check
          %p374 = pneg %p300
        $region58: #{tpu_custom_call.1} parent=11 // pred_check_branch
          %376 = sbr.rel (%p374) target = $region60
        $region59: #{tpu_custom_call.1} parent=11 // pred_region
          _
        $region60: #{tpu_custom_call.1} parent=11 // pred_fallthru
          _
      $region12: #{tpu_custom_call.1} parent=5 // pred_fallthru
        _
      %p377 = scmp.lt.s32.totalorder %s22, 2
      // Predicated region
      $region61: #{tpu_custom_call.1} parent=5 // pred_check
        %p378 = pneg %p377
      $region62: #{tpu_custom_call.1} parent=5 // pred_check_branch
        %380 = sbr.rel (%p378) target = $region64
      $region63: #{tpu_custom_call.1} parent=5 // pred_region
        // Predicated region
        $region65: #{tpu_custom_call.1} parent=63 // pred_check
          %p381 = pneg %p42
        $region66: #{tpu_custom_call.1} parent=63 // pred_check_branch
          %383 = sbr.rel (%p381) target = $region68
        $region67: #{tpu_custom_call.1} parent=63 // pred_region
          %p384 = scmp.lt.s32.totalorder %s22, 1
          %s385 = scalar_select %p384, %s22, 1
          %s386 = smul.addr %s385, 32
          %s387 = smul.addr %s386, 8
          %s388 = scalar_lea.vmem %s0, %s387
        $region68: #{tpu_custom_call.1} parent=63 // pred_fallthru
          _
      $region64: #{tpu_custom_call.1} parent=5 // pred_fallthru
        _
      %p389 = scmp.le.s32.totalorder 1, %s22
      %p390 = scmp.lt.s32.totalorder %s22, 3
      %p391 = pnand %p389, %p390
      %p392 = pneg %p391
      // Predicated region
      $region69: #{tpu_custom_call.1} parent=5 // pred_check
        _
      $region70: #{tpu_custom_call.1} parent=5 // pred_check_branch
        %394 = sbr.rel (%p391) target = $region72
      $region71: #{tpu_custom_call.1} parent=5 // pred_region
        %s395 = ssub.s32 %s22, 1
        %p396 = scmp.lt.s32.totalorder %s27, 1
        %s397 = scalar_select %p396, %s27, 1
        %s398 = smul.addr %s397, 32
        %s399 = smul.addr %s398, 8
        %s400 = scalar_lea.vmem %s0, %s399
        %p401 = pneg %p48
        %p402 = pneg %p45
        %p403 = pneg %p69
        %p404 = pneg %p66
        %p405 = pneg %p90
        %p406 = pneg %p87
        %p407 = pneg %p111
        %p408 = pneg %p108
        %p409 = pneg %p132
        %p410 = pneg %p129
        %p411 = pneg %p153
        %p412 = pneg %p150
        %p413 = pneg %p174
        %p414 = pneg %p171
        %p415 = pneg %p195
        %p416 = pneg %p192
        %p417 = pneg %p216
        %p418 = pneg %p213
        %p419 = pneg %p237
        %p420 = pneg %p234
        %p421 = pneg %p258
        %p422 = pneg %p255
        %p423 = pneg %p279
        %p424 = pneg %p276
        %p425 = pneg %p300
        %p426 = pneg %p297
        %p427 = pneg %p326
        %p428 = pneg %p323
        %s429 = sand.u32 %s313, 1
        %s430 = scalar_lea.sflag [#allocation4], %s429
        %s431 = sand.u32 %s313, 1
        %s432 = smul.addr %s431, 256
        %s433 = scalar_lea.vmem [#allocation3], %s432
        %p434 = scmp.lt.s32.totalorder %s27, 1
        %s435 = scalar_select %p434, %s27, 1
        %s436 = smul.addr %s435, 32
        %s437 = smul.addr %s436, 8
        %s438 = scalar_lea.vmem %s0, %s437
        %v439 = vld [vmem:[%s438] sm:$0xff]
        %v440 = vld [vmem:[%s438 + $0x8] sm:$0xff]
        %v441 = vld [vmem:[%s438 + $0x10] sm:$0xff]
        %v442 = vld [vmem:[%s438 + $0x18] sm:$0xff]
        %v443 = vld [vmem:[%s438 + $0x20] sm:$0xff]
        %v444 = vld [vmem:[%s438 + $0x28] sm:$0xff]
        %v445 = vld [vmem:[%s438 + $0x30] sm:$0xff]
        %v446 = vld [vmem:[%s438 + $0x38] sm:$0xff]
        %v447 = vld [vmem:[%s438 + $0x40] sm:$0xff]
        %v448 = vld [vmem:[%s438 + $0x48] sm:$0xff]
        %v449 = vld [vmem:[%s438 + $0x50] sm:$0xff]
        %v450 = vld [vmem:[%s438 + $0x58] sm:$0xff]
        %v451 = vld [vmem:[%s438 + $0x60] sm:$0xff]
        %v452 = vld [vmem:[%s438 + $0x68] sm:$0xff]
        %v453 = vld [vmem:[%s438 + $0x70] sm:$0xff]
        %v454 = vld [vmem:[%s438 + $0x78] sm:$0xff]
        %v455 = vld [vmem:[%s438 + $0x80] sm:$0xff]
        %v456 = vld [vmem:[%s438 + $0x88] sm:$0xff]
        %v457 = vld [vmem:[%s438 + $0x90] sm:$0xff]
        %v458 = vld [vmem:[%s438 + $0x98] sm:$0xff]
        %v459 = vld [vmem:[%s438 + $0xa0] sm:$0xff]
        %v460 = vld [vmem:[%s438 + $0xa8] sm:$0xff]
        %v461 = vld [vmem:[%s438 + $0xb0] sm:$0xff]
        %v462 = vld [vmem:[%s438 + $0xb8] sm:$0xff]
        %v463 = vld [vmem:[%s438 + $0xc0] sm:$0xff]
        %v464 = vld [vmem:[%s438 + $0xc8] sm:$0xff]
        %v465 = vld [vmem:[%s438 + $0xd0] sm:$0xff]
        %v466 = vld [vmem:[%s438 + $0xd8] sm:$0xff]
        %v467 = vld [vmem:[%s438 + $0xe0] sm:$0xff]
        %v468 = vld [vmem:[%s438 + $0xe8] sm:$0xff]
        %v469 = vld [vmem:[%s438 + $0xf0] sm:$0xff]
        %v470 = vld [vmem:[%s438 + $0xf8] sm:$0xff]
        %v471 = vld [vmem:[%s1] sm:$0xff]
        %v472 = vld [vmem:[%s1 + $0x8] sm:$0xff]
        %vm473 = vcmask 130048
        %v475 = vsel %vm473, %v439, 0
        %v478 = vsel %vm473, %v440, 0
        %v481 = vsel %vm473, %v441, 0
        %v484 = vsel %vm473, %v442, 0
        %v487 = vsel %vm473, %v443, 0
        %v490 = vsel %vm473, %v444, 0
        %v493 = vsel %vm473, %v445, 0
        %v496 = vsel %vm473, %v446, 0
        %v499 = vsel %vm473, %v447, 0
        %v502 = vsel %vm473, %v448, 0
        %v505 = vsel %vm473, %v449, 0
        %v508 = vsel %vm473, %v450, 0
        %v511 = vsel %vm473, %v451, 0
        %v514 = vsel %vm473, %v452, 0
        %v517 = vsel %vm473, %v453, 0
        %v520 = vsel %vm473, %v454, 0
        %v523 = vsel %vm473, %v455, 0
        %v526 = vsel %vm473, %v456, 0
        %v529 = vsel %vm473, %v457, 0
        %v532 = vsel %vm473, %v458, 0
        %v535 = vsel %vm473, %v459, 0
        %v538 = vsel %vm473, %v460, 0
        %v541 = vsel %vm473, %v461, 0
        %v544 = vsel %vm473, %v462, 0
        %v547 = vsel %vm473, %v463, 0
        %v550 = vsel %vm473, %v464, 0
        %v553 = vsel %vm473, %v465, 0
        %v556 = vsel %vm473, %v466, 0
        %v559 = vsel %vm473, %v467, 0
        %v562 = vsel %vm473, %v468, 0
        %v565 = vsel %vm473, %v469, 0
        %v568 = vsel %vm473, %v470, 0
        %570 = vmatprep.subr.mxu0 0.0
        %571 = vmatpush1.msra.mxu0 %v471
        %572 = vmatprep.subr.mxu0 0.0
        %573 = vmatpush1.msra.mxu0 %v472
        %574 = vmatprep.subr.mxu0 0.0
        %575 = vmatpush1.msra.mxu0 0.0
        %576 = vmatprep.subr.mxu0 0.0
        %577 = vmatpush1.msra.mxu0 0.0
        %578 = vmatprep.subr.mxu0 0.0
        %579 = vmatpush1.msra.mxu0 0.0
        %580 = vmatprep.subr.mxu0 0.0
        %581 = vmatpush1.msra.mxu0 0.0
        %582 = vmatprep.subr.mxu0 0.0
        %583 = vmatpush1.msra.mxu0 0.0
        %584 = vmatprep.subr.mxu0 0.0
        %585 = vmatpush1.msra.mxu0 0.0
        %586 = vmatprep.subr.mxu0 0.0
        %587 = vmatpush1.msra.mxu0 0.0
        %588 = vmatprep.subr.mxu0 0.0
        %589 = vmatpush1.msra.mxu0 0.0
        %590 = vmatprep.subr.mxu0 0.0
        %591 = vmatpush1.msra.mxu0 0.0
        %592 = vmatprep.subr.mxu0 0.0
        %593 = vmatpush1.msra.mxu0 0.0
        %594 = vmatprep.subr.mxu0 0.0
        %595 = vmatpush1.msra.mxu0 0.0
        %596 = vmatprep.subr.mxu0 0.0
        %597 = vmatpush1.msra.mxu0 0.0
        %598 = vmatprep.subr.mxu0 0.0
        %599 = vmatpush1.msra.mxu0 0.0
        %600 = vmatprep.subr.mxu0 0.0
        %601 = vmatpush1.msra.mxu0 0.0
        %602 = vmatprep.subr.mxu0 0.0
        %603 = vmatpush1.msra.mxu0 0.0
        %604 = vmatprep.subr.mxu0 0.0
        %605 = vmatpush1.msra.mxu0 0.0
        %606 = vmatprep.subr.mxu0 0.0
        %607 = vmatpush1.msra.mxu0 0.0
        %608 = vmatprep.subr.mxu0 0.0
        %609 = vmatpush1.msra.mxu0 0.0
        %610 = vmatprep.subr.mxu0 0.0
        %611 = vmatpush1.msra.mxu0 0.0
        %612 = vmatprep.subr.mxu0 0.0
        %613 = vmatpush1.msra.mxu0 0.0
        %614 = vmatprep.subr.mxu0 0.0
        %615 = vmatpush1.msra.mxu0 0.0
        %616 = vmatprep.subr.mxu0 0.0
        %617 = vmatpush1.msra.mxu0 0.0
        %618 = vmatprep.subr.mxu0 0.0
        %619 = vmatpush1.msra.mxu0 0.0
        %620 = vmatprep.subr.mxu0 0.0
        %621 = vmatpush1.msra.mxu0 0.0
        %622 = vmatprep.subr.mxu0 0.0
        %623 = vmatpush1.msra.mxu0 0.0
        %624 = vmatprep.subr.mxu0 0.0
        %625 = vmatpush1.msra.mxu0 0.0
        %626 = vmatprep.subr.mxu0 0.0
        %627 = vmatpush1.msra.mxu0 0.0
        %628 = vmatprep.subr.mxu0 0.0
        %629 = vmatpush1.msra.mxu0 0.0
        %630 = vmatprep.subr.mxu0 0.0
        %631 = vmatpush1.msra.mxu0 0.0
        %632 = vmatprep.subr.mxu0 0.0
        %633 = vmatpush1.msra.mxu0 0.0
        %634 = vmatprep.mubr.f32.mxu0 0.0
        %635 = vmatmul.mubr.f32.gmra.mrb[0].mxu0 %v475
        %v636 = vpop.f32.mrb[0].mxu0
        %v637 = vadd.f32 0.0, %v636
        %v638 = vpop.f32.mrb[0].mxu0
        %639 = vmatprep.mubr.f32.mxu0 0.0
        %640 = vmatmul.mubr.f32.gmra.mrb[0].mxu0 %v478
        %v641 = vpop.f32.mrb[0].mxu0
        %v642 = vadd.f32 0.0, %v641
        %v643 = vpop.f32.mrb[0].mxu0
        %644 = vmatprep.mubr.f32.mxu0 0.0
        %645 = vmatmul.mubr.f32.gmra.mrb[0].mxu0 %v481
        %v646 = vpop.f32.mrb[0].mxu0
        %v647 = vadd.f32 0.0, %v646
        %v648 = vpop.f32.mrb[0].mxu0
        %649 = vmatprep.mubr.f32.mxu0 0.0
        %650 = vmatmul.mubr.f32.gmra.mrb[0].mxu0 %v484
        %v651 = vpop.f32.mrb[0].mxu0
        %v652 = vadd.f32 0.0, %v651
        %v653 = vpop.f32.mrb[0].mxu0
        %654 = vmatprep.mubr.f32.mxu0 0.0
        %655 = vmatmul.mubr.f32.gmra.mrb[0].mxu0 %v487
        %v656 = vpop.f32.mrb[0].mxu0
        %v657 = vadd.f32 0.0, %v656
        %v658 = vpop.f32.mrb[0].mxu0
        %659 = vmatprep.mubr.f32.mxu0 0.0
        %660 = vmatmul.mubr.f32.gmra.mrb[0].mxu0 %v490
        %v661 = vpop.f32.mrb[0].mxu0
        %v662 = vadd.f32 0.0, %v661
        %v663 = vpop.f32.mrb[0].mxu0
        %664 = vmatprep.mubr.f32.mxu0 0.0
        %665 = vmatmul.mubr.f32.gmra.mrb[0].mxu0 %v493
        %v666 = vpop.f32.mrb[0].mxu0
        %v667 = vadd.f32 0.0, %v666
        %v668 = vpop.f32.mrb[0].mxu0
        %669 = vmatprep.mubr.f32.mxu0 0.0
        %670 = vmatmul.mubr.f32.gmra.mrb[0].mxu0 %v496
        %v671 = vpop.f32.mrb[0].mxu0
        %v672 = vadd.f32 0.0, %v671
        %v673 = vpop.f32.mrb[0].mxu0
        %674 = vmatprep.mubr.f32.mxu0 0.0
        %675 = vmatmul.mubr.f32.gmra.mrb[0].mxu0 %v499
        %v676 = vpop.f32.mrb[0].mxu0
        %v677 = vadd.f32 0.0, %v676
        %v678 = vpop.f32.mrb[0].mxu0
        %679 = vmatprep.mubr.f32.mxu0 0.0
        %680 = vmatmul.mubr.f32.gmra.mrb[0].mxu0 %v502
        %v681 = vpop.f32.mrb[0].mxu0
        %v682 = vadd.f32 0.0, %v681
        %v683 = vpop.f32.mrb[0].mxu0
        %684 = vmatprep.mubr.f32.mxu0 0.0
        %685 = vmatmul.mubr.f32.gmra.mrb[0].mxu0 %v505
        %v686 = vpop.f32.mrb[0].mxu0
        %v687 = vadd.f32 0.0, %v686
        %v688 = vpop.f32.mrb[0].mxu0
        %689 = vmatprep.mubr.f32.mxu0 0.0
        %690 = vmatmul.mubr.f32.gmra.mrb[0].mxu0 %v508
        %v691 = vpop.f32.mrb[0].mxu0
        %v692 = vadd.f32 0.0, %v691
        %v693 = vpop.f32.mrb[0].mxu0
        %694 = vmatprep.mubr.f32.mxu0 0.0
        %695 = vmatmul.mubr.f32.gmra.mrb[0].mxu0 %v511
        %v696 = vpop.f32.mrb[0].mxu0
        %v697 = vadd.f32 0.0, %v696
        %v698 = vpop.f32.mrb[0].mxu0
        %699 = vmatprep.mubr.f32.mxu0 0.0
        %700 = vmatmul.mubr.f32.gmra.mrb[0].mxu0 %v514
        %v701 = vpop.f32.mrb[0].mxu0
        %v702 = vadd.f32 0.0, %v701
        %v703 = vpop.f32.mrb[0].mxu0
        %704 = vmatprep.mubr.f32.mxu0 0.0
        %705 = vmatmul.mubr.f32.gmra.mrb[0].mxu0 %v517
        %v706 = vpop.f32.mrb[0].mxu0
        %v707 = vadd.f32 0.0, %v706
        %v708 = vpop.f32.mrb[0].mxu0
        %709 = vmatprep.mubr.f32.mxu0 0.0
        %710 = vmatmul.mubr.f32.gmra.mrb[0].mxu0 %v520
        %v711 = vpop.f32.mrb[0].mxu0
        %v712 = vadd.f32 0.0, %v711
        %v713 = vpop.f32.mrb[0].mxu0
        %714 = vmatprep.mubr.f32.mxu0 0.0
        %715 = vmatmul.mubr.f32.gmra.mrb[0].mxu0 %v523
        %v716 = vpop.f32.mrb[0].mxu0
        %v717 = vadd.f32 0.0, %v716
        %v718 = vpop.f32.mrb[0].mxu0
        %719 = vmatprep.mubr.f32.mxu0 0.0
        %720 = vmatmul.mubr.f32.gmra.mrb[0].mxu0 %v526
        %v721 = vpop.f32.mrb[0].mxu0
        %v722 = vadd.f32 0.0, %v721
        %v723 = vpop.f32.mrb[0].mxu0
        %724 = vmatprep.mubr.f32.mxu0 0.0
        %725 = vmatmul.mubr.f32.gmra.mrb[0].mxu0 %v529
        %v726 = vpop.f32.mrb[0].mxu0
        %v727 = vadd.f32 0.0, %v726
        %v728 = vpop.f32.mrb[0].mxu0
        %729 = vmatprep.mubr.f32.mxu0 0.0
        %730 = vmatmul.mubr.f32.gmra.mrb[0].mxu0 %v532
        %v731 = vpop.f32.mrb[0].mxu0
        %v732 = vadd.f32 0.0, %v731
        %v733 = vpop.f32.mrb[0].mxu0
        %734 = vmatprep.mubr.f32.mxu0 0.0
        %735 = vmatmul.mubr.f32.gmra.mrb[0].mxu0 %v535
        %v736 = vpop.f32.mrb[0].mxu0
        %v737 = vadd.f32 0.0, %v736
        %v738 = vpop.f32.mrb[0].mxu0
        %739 = vmatprep.mubr.f32.mxu0 0.0
        %740 = vmatmul.mubr.f32.gmra.mrb[0].mxu0 %v538
        %v741 = vpop.f32.mrb[0].mxu0
        %v742 = vadd.f32 0.0, %v741
        %v743 = vpop.f32.mrb[0].mxu0
        %744 = vmatprep.mubr.f32.mxu0 0.0
        %745 = vmatmul.mubr.f32.gmra.mrb[0].mxu0 %v541
        %v746 = vpop.f32.mrb[0].mxu0
        %v747 = vadd.f32 0.0, %v746
        %v748 = vpop.f32.mrb[0].mxu0
        %749 = vmatprep.mubr.f32.mxu0 0.0
        %750 = vmatmul.mubr.f32.gmra.mrb[0].mxu0 %v544
        %v751 = vpop.f32.mrb[0].mxu0
        %v752 = vadd.f32 0.0, %v751
        %v753 = vpop.f32.mrb[0].mxu0
        %754 = vmatprep.mubr.f32.mxu0 0.0
        %755 = vmatmul.mubr.f32.gmra.mrb[0].mxu0 %v547
        %v756 = vpop.f32.mrb[0].mxu0
        %v757 = vadd.f32 0.0, %v756
        %v758 = vpop.f32.mrb[0].mxu0
        %759 = vmatprep.mubr.f32.mxu0 0.0
        %760 = vmatmul.mubr.f32.gmra.mrb[0].mxu0 %v550
        %v761 = vpop.f32.mrb[0].mxu0
        %v762 = vadd.f32 0.0, %v761
        %v763 = vpop.f32.mrb[0].mxu0
        %764 = vmatprep.mubr.f32.mxu0 0.0
        %765 = vmatmul.mubr.f32.gmra.mrb[0].mxu0 %v553
        %v766 = vpop.f32.mrb[0].mxu0
        %v767 = vadd.f32 0.0, %v766
        %v768 = vpop.f32.mrb[0].mxu0
        %769 = vmatprep.mubr.f32.mxu0 0.0
        %770 = vmatmul.mubr.f32.gmra.mrb[0].mxu0 %v556
        %v771 = vpop.f32.mrb[0].mxu0
        %v772 = vadd.f32 0.0, %v771
        %v773 = vpop.f32.mrb[0].mxu0
        %774 = vmatprep.mubr.f32.mxu0 0.0
        %775 = vmatmul.mubr.f32.gmra.mrb[0].mxu0 %v559
        %v776 = vpop.f32.mrb[0].mxu0
        %v777 = vadd.f32 0.0, %v776
        %v778 = vpop.f32.mrb[0].mxu0
        %779 = vmatprep.mubr.f32.mxu0 0.0
        %780 = vmatmul.mubr.f32.gmra.mrb[0].mxu0 %v562
        %v781 = vpop.f32.mrb[0].mxu0
        %v782 = vadd.f32 0.0, %v781
        %v783 = vpop.f32.mrb[0].mxu0
        %784 = vmatprep.mubr.f32.mxu0 0.0
        %785 = vmatmul.mubr.f32.gmra.mrb[0].mxu0 %v565
        %v786 = vpop.f32.mrb[0].mxu0
        %v787 = vadd.f32 0.0, %v786
        %v788 = vpop.f32.mrb[0].mxu0
        %789 = vmatprep.mubr.f32.mxu0 0.0
        %790 = vmatmul.mubr.f32.gmra.mrb[0].mxu0 %v568
        %v791 = vpop.f32.mrb[0].mxu0
        %v792 = vadd.f32 0.0, %v791
        %v793 = vpop.f32.mrb[0].mxu0
        %794 = vdwg.mxu0
        %v795 = vld [vmem:[%s5] sm:$0x1]
        %v797 = vlaneseq
        %v798 = vshrl.u32 %v797, 7
        %v799 = vsub.s32 0, %v798
        %v800 = vrot.slane %v795, %v799
        %v802 = vmul.f32 %v637, %v800
        %v803 = vmul.f32 %v642, %v800
        %v804 = vmul.f32 %v647, %v800
        %v805 = vmul.f32 %v652, %v800
        %v806 = vmul.f32 %v657, %v800
        %v807 = vmul.f32 %v662, %v800
        %v808 = vmul.f32 %v667, %v800
        %v809 = vmul.f32 %v672, %v800
        %v810 = vmul.f32 %v677, %v800
        %v811 = vmul.f32 %v682, %v800
        %v812 = vmul.f32 %v687, %v800
        %v813 = vmul.f32 %v692, %v800
        %v814 = vmul.f32 %v697, %v800
        %v815 = vmul.f32 %v702, %v800
        %v816 = vmul.f32 %v707, %v800
        %v817 = vmul.f32 %v712, %v800
        %v818 = vmul.f32 %v717, %v800
        %v819 = vmul.f32 %v722, %v800
        %v820 = vmul.f32 %v727, %v800
        %v821 = vmul.f32 %v732, %v800
        %v822 = vmul.f32 %v737, %v800
        %v823 = vmul.f32 %v742, %v800
        %v824 = vmul.f32 %v747, %v800
        %v825 = vmul.f32 %v752, %v800
        %v826 = vmul.f32 %v757, %v800
        %v827 = vmul.f32 %v762, %v800
        %v828 = vmul.f32 %v767, %v800
        %v829 = vmul.f32 %v772, %v800
        %v830 = vmul.f32 %v777, %v800
        %v831 = vmul.f32 %v782, %v800
        %v832 = vmul.f32 %v787, %v800
        %v833 = vmul.f32 %v792, %v800
        %v834 = vld [vmem:[%s6] sm:$0x1]
        %v836 = vlaneseq
        %v837 = vshrl.u32 %v836, 7
        %v838 = vsub.s32 0, %v837
        %v839 = vrot.slane %v834, %v838
        %v841 = vadd.f32 %v802, %v839
        %v842 = vadd.f32 %v803, %v839
        %v843 = vadd.f32 %v804, %v839
        %v844 = vadd.f32 %v805, %v839
        %v845 = vadd.f32 %v806, %v839
        %v846 = vadd.f32 %v807, %v839
        %v847 = vadd.f32 %v808, %v839
        %v848 = vadd.f32 %v809, %v839
        %v849 = vadd.f32 %v810, %v839
        %v850 = vadd.f32 %v811, %v839
        %v851 = vadd.f32 %v812, %v839
        %v852 = vadd.f32 %v813, %v839
        %v853 = vadd.f32 %v814, %v839
        %v854 = vadd.f32 %v815, %v839
        %v855 = vadd.f32 %v816, %v839
        %v856 = vadd.f32 %v817, %v839
        %v857 = vadd.f32 %v818, %v839
        %v858 = vadd.f32 %v819, %v839
        %v859 = vadd.f32 %v820, %v839
        %v860 = vadd.f32 %v821, %v839
        %v861 = vadd.f32 %v822, %v839
        %v862 = vadd.f32 %v823, %v839
        %v863 = vadd.f32 %v824, %v839
        %v864 = vadd.f32 %v825, %v839
        %v865 = vadd.f32 %v826, %v839
        %v866 = vadd.f32 %v827, %v839
        %v867 = vadd.f32 %v828, %v839
        %v868 = vadd.f32 %v829, %v839
        %v869 = vadd.f32 %v830, %v839
        %v870 = vadd.f32 %v831, %v839
        %v871 = vadd.f32 %v832, %v839
        %v872 = vadd.f32 %v833, %v839
        %v873 = vmax.f32 %v841, 0.0
        %v874 = vmax.f32 %v842, 0.0
        %v875 = vmax.f32 %v843, 0.0
        %v876 = vmax.f32 %v844, 0.0
        %v877 = vmax.f32 %v845, 0.0
        %v878 = vmax.f32 %v846, 0.0
        %v879 = vmax.f32 %v847, 0.0
        %v880 = vmax.f32 %v848, 0.0
        %v881 = vmax.f32 %v849, 0.0
        %v882 = vmax.f32 %v850, 0.0
        %v883 = vmax.f32 %v851, 0.0
        %v884 = vmax.f32 %v852, 0.0
        %v885 = vmax.f32 %v853, 0.0
        %v886 = vmax.f32 %v854, 0.0
        %v887 = vmax.f32 %v855, 0.0
        %v888 = vmax.f32 %v856, 0.0
        %v889 = vmax.f32 %v857, 0.0
        %v890 = vmax.f32 %v858, 0.0
        %v891 = vmax.f32 %v859, 0.0
        %v892 = vmax.f32 %v860, 0.0
        %v893 = vmax.f32 %v861, 0.0
        %v894 = vmax.f32 %v862, 0.0
        %v895 = vmax.f32 %v863, 0.0
        %v896 = vmax.f32 %v864, 0.0
        %v897 = vmax.f32 %v865, 0.0
        %v898 = vmax.f32 %v866, 0.0
        %v899 = vmax.f32 %v867, 0.0
        %v900 = vmax.f32 %v868, 0.0
        %v901 = vmax.f32 %v869, 0.0
        %v902 = vmax.f32 %v870, 0.0
        %v903 = vmax.f32 %v871, 0.0
        %v904 = vmax.f32 %v872, 0.0
        %vm905 = vcmask 261120
        %906 = vst.msk [vmem:[#allocation2] sm:$0xff] %vm905, 0.0
        %907 = vst.msk [vmem:[#allocation2 + $0x8] sm:$0xff] %vm905, 0.0
        %908 = vst.msk [vmem:[#allocation2 + $0x10] sm:$0xff] %vm905, 0.0
        %909 = vst.msk [vmem:[#allocation2 + $0x18] sm:$0xff] %vm905, %v873
        %910 = vst.msk [vmem:[#allocation2 + $0x20] sm:$0xff] %vm905, %v874
        %911 = vst.msk [vmem:[#allocation2 + $0x28] sm:$0xff] %vm905, %v875
        %912 = vst.msk [vmem:[#allocation2 + $0x30] sm:$0xff] %vm905, %v876
        %913 = vst.msk [vmem:[#allocation2 + $0x38] sm:$0xff] %vm905, %v877
        %914 = vst.msk [vmem:[#allocation2 + $0x40] sm:$0xff] %vm905, %v878
        %915 = vst.msk [vmem:[#allocation2 + $0x48] sm:$0xff] %vm905, %v879
        %916 = vst.msk [vmem:[#allocation2 + $0x50] sm:$0xff] %vm905, %v880
        %917 = vst.msk [vmem:[#allocation2 + $0x58] sm:$0xff] %vm905, %v881
        %918 = vst.msk [vmem:[#allocation2 + $0x60] sm:$0xff] %vm905, %v882
        %919 = vst.msk [vmem:[#allocation2 + $0x68] sm:$0xff] %vm905, %v883
        %920 = vst.msk [vmem:[#allocation2 + $0x70] sm:$0xff] %vm905, %v884
        %921 = vst.msk [vmem:[#allocation2 + $0x78] sm:$0xff] %vm905, %v885
        %922 = vst.msk [vmem:[#allocation2 + $0x80] sm:$0xff] %vm905, %v886
        %923 = vst.msk [vmem:[#allocation2 + $0x88] sm:$0xff] %vm905, %v887
        %924 = vst.msk [vmem:[#allocation2 + $0x90] sm:$0xff] %vm905, %v888
        %925 = vst.msk [vmem:[#allocation2 + $0x98] sm:$0xff] %vm905, %v889
        %926 = vst.msk [vmem:[#allocation2 + $0xa0] sm:$0xff] %vm905, %v890
        %927 = vst.msk [vmem:[#allocation2 + $0xa8] sm:$0xff] %vm905, %v891
        %928 = vst.msk [vmem:[#allocation2 + $0xb0] sm:$0xff] %vm905, %v892
        %929 = vst.msk [vmem:[#allocation2 + $0xb8] sm:$0xff] %vm905, %v893
        %930 = vst.msk [vmem:[#allocation2 + $0xc0] sm:$0xff] %vm905, %v894
        %931 = vst.msk [vmem:[#allocation2 + $0xc8] sm:$0xff] %vm905, %v895
        %932 = vst.msk [vmem:[#allocation2 + $0xd0] sm:$0xff] %vm905, %v896
        %933 = vst.msk [vmem:[#allocation2 + $0xd8] sm:$0xff] %vm905, %v897
        %934 = vst.msk [vmem:[#allocation2 + $0xe0] sm:$0xff] %vm905, %v898
        %935 = vst.msk [vmem:[#allocation2 + $0xe8] sm:$0xff] %vm905, %v899
        %936 = vst.msk [vmem:[#allocation2 + $0xf0] sm:$0xff] %vm905, %v900
        %937 = vst.msk [vmem:[#allocation2 + $0xf8] sm:$0xff] %vm905, %v901
        %938 = vst.msk [vmem:[#allocation2 + $0x100] sm:$0xff] %vm905, %v902
        %939 = vst.msk [vmem:[#allocation2 + $0x108] sm:$0xff] %vm905, %v903
        %940 = vst.msk [vmem:[#allocation2 + $0x110] sm:$0xff] %vm905, %v904
        %941 = vst.msk [vmem:[#allocation2 + $0x118] sm:$0xff] %vm905, 0.0
        %942 = vst.msk [vmem:[#allocation2 + $0x120] sm:$0xff] %vm905, 0.0
        %943 = vst.msk [vmem:[#allocation2 + $0x128] sm:$0xff] %vm905, 0.0
        %v944 = vlaneseq
        %v945 = vshrl.u32 %v944, 7
        %v946 = vadd.s32 %v945, 8
        %v947 = vadd.s32 %v945, 16
        %v948 = vadd.s32 %v945, 24
        %v949 = vadd.s32 %v945, 32
        %v950 = vadd.s32 %v945, 40
        %v951 = vadd.s32 %v945, 48
        %v952 = vadd.s32 %v945, 56
        %v953 = vadd.s32 %v945, 64
        %v954 = vadd.s32 %v945, 72
        %v955 = vadd.s32 %v945, 80
        %v956 = vadd.s32 %v945, 88
        %v957 = vadd.s32 %v945, 96
        %v958 = vadd.s32 %v945, 104
        %v959 = vadd.s32 %v945, 112
        %v960 = vadd.s32 %v945, 120
        %v961 = vadd.s32 %v945, 128
        %v962 = vadd.s32 %v945, 136
        %v963 = vadd.s32 %v945, 144
        %v964 = vadd.s32 %v945, 152
        %v965 = vadd.s32 %v945, 160
        %v966 = vadd.s32 %v945, 168
        %v967 = vadd.s32 %v945, 176
        %v968 = vadd.s32 %v945, 184
        %v969 = vadd.s32 %v945, 192
        %v970 = vadd.s32 %v945, 200
        %v971 = vadd.s32 %v945, 208
        %v972 = vadd.s32 %v945, 216
        %v973 = vadd.s32 %v945, 224
        %v974 = vadd.s32 %v945, 232
        %v975 = vadd.s32 %v945, 240
        %v976 = vadd.s32 %v945, 248
        %vm977 = vcmp.lt.s32.totalorder %v945, 0
        %v978 = vsub.s32 0, %v945
        %v979 = vsel %vm977, %v978, %v945
        %v980 = vshrl.u32 %v979, 4
        %v981 = vand.u32 %v979, 15
        %v982 = vsub.s32 0, %v981
        %v983 = vsel %vm977, %v982, %v981
        %vm984 = vcmp.lt.s32.totalorder %v946, 0
        %v985 = vsub.s32 0, %v946
        %v986 = vsel %vm984, %v985, %v946
        %v987 = vshrl.u32 %v986, 4
        %v988 = vand.u32 %v986, 15
        %v989 = vsub.s32 0, %v988
        %v990 = vsel %vm984, %v989, %v988
        %vm991 = vcmp.lt.s32.totalorder %v947, 0
        %v992 = vsub.s32 0, %v947
        %v993 = vsel %vm991, %v992, %v947
        %v994 = vshrl.u32 %v993, 4
        %v995 = vand.u32 %v993, 15
        %v996 = vsub.s32 0, %v995
        %v997 = vsel %vm991, %v996, %v995
        %vm998 = vcmp.lt.s32.totalorder %v948, 0
        %v999 = vsub.s32 0, %v948
        %v1000 = vsel %vm998, %v999, %v948
        %v1001 = vshrl.u32 %v1000, 4
        %v1002 = vand.u32 %v1000, 15
        %v1003 = vsub.s32 0, %v1002
        %v1004 = vsel %vm998, %v1003, %v1002
        %vm1005 = vcmp.lt.s32.totalorder %v949, 0
        %v1006 = vsub.s32 0, %v949
        %v1007 = vsel %vm1005, %v1006, %v949
        %v1008 = vshrl.u32 %v1007, 4
        %v1009 = vand.u32 %v1007, 15
        %v1010 = vsub.s32 0, %v1009
        %v1011 = vsel %vm1005, %v1010, %v1009
        %vm1012 = vcmp.lt.s32.totalorder %v950, 0
        %v1013 = vsub.s32 0, %v950
        %v1014 = vsel %vm1012, %v1013, %v950
        %v1015 = vshrl.u32 %v1014, 4
        %v1016 = vand.u32 %v1014, 15
        %v1017 = vsub.s32 0, %v1016
        %v1018 = vsel %vm1012, %v1017, %v1016
        %vm1019 = vcmp.lt.s32.totalorder %v951, 0
        %v1020 = vsub.s32 0, %v951
        %v1021 = vsel %vm1019, %v1020, %v951
        %v1022 = vshrl.u32 %v1021, 4
        %v1023 = vand.u32 %v1021, 15
        %v1024 = vsub.s32 0, %v1023
        %v1025 = vsel %vm1019, %v1024, %v1023
        %vm1026 = vcmp.lt.s32.totalorder %v952, 0
        %v1027 = vsub.s32 0, %v952
        %v1028 = vsel %vm1026, %v1027, %v952
        %v1029 = vshrl.u32 %v1028, 4
        %v1030 = vand.u32 %v1028, 15
        %v1031 = vsub.s32 0, %v1030
        %v1032 = vsel %vm1026, %v1031, %v1030
        %vm1033 = vcmp.lt.s32.totalorder %v953, 0
        %v1034 = vsub.s32 0, %v953
        %v1035 = vsel %vm1033, %v1034, %v953
        %v1036 = vshrl.u32 %v1035, 4
        %v1037 = vand.u32 %v1035, 15
        %v1038 = vsub.s32 0, %v1037
        %v1039 = vsel %vm1033, %v1038, %v1037
        %vm1040 = vcmp.lt.s32.totalorder %v954, 0
        %v1041 = vsub.s32 0, %v954
        %v1042 = vsel %vm1040, %v1041, %v954
        %v1043 = vshrl.u32 %v1042, 4
        %v1044 = vand.u32 %v1042, 15
        %v1045 = vsub.s32 0, %v1044
        %v1046 = vsel %vm1040, %v1045, %v1044
        %vm1047 = vcmp.lt.s32.totalorder %v955, 0
        %v1048 = vsub.s32 0, %v955
        %v1049 = vsel %vm1047, %v1048, %v955
        %v1050 = vshrl.u32 %v1049, 4
        %v1051 = vand.u32 %v1049, 15
        %v1052 = vsub.s32 0, %v1051
        %v1053 = vsel %vm1047, %v1052, %v1051
        %vm1054 = vcmp.lt.s32.totalorder %v956, 0
        %v1055 = vsub.s32 0, %v956
        %v1056 = vsel %vm1054, %v1055, %v956
        %v1057 = vshrl.u32 %v1056, 4
        %v1058 = vand.u32 %v1056, 15
        %v1059 = vsub.s32 0, %v1058
        %v1060 = vsel %vm1054, %v1059, %v1058
        %vm1061 = vcmp.lt.s32.totalorder %v957, 0
        %v1062 = vsub.s32 0, %v957
        %v1063 = vsel %vm1061, %v1062, %v957
        %v1064 = vshrl.u32 %v1063, 4
        %v1065 = vand.u32 %v1063, 15
        %v1066 = vsub.s32 0, %v1065
        %v1067 = vsel %vm1061, %v1066, %v1065
        %vm1068 = vcmp.lt.s32.totalorder %v958, 0
        %v1069 = vsub.s32 0, %v958
        %v1070 = vsel %vm1068, %v1069, %v958
        %v1071 = vshrl.u32 %v1070, 4
        %v1072 = vand.u32 %v1070, 15
        %v1073 = vsub.s32 0, %v1072
        %v1074 = vsel %vm1068, %v1073, %v1072
        %vm1075 = vcmp.lt.s32.totalorder %v959, 0
        %v1076 = vsub.s32 0, %v959
        %v1077 = vsel %vm1075, %v1076, %v959
        %v1078 = vshrl.u32 %v1077, 4
        %v1079 = vand.u32 %v1077, 15
        %v1080 = vsub.s32 0, %v1079
        %v1081 = vsel %vm1075, %v1080, %v1079
        %vm1082 = vcmp.lt.s32.totalorder %v960, 0
        %v1083 = vsub.s32 0, %v960
        %v1084 = vsel %vm1082, %v1083, %v960
        %v1085 = vshrl.u32 %v1084, 4
        %v1086 = vand.u32 %v1084, 15
        %v1087 = vsub.s32 0, %v1086
        %v1088 = vsel %vm1082, %v1087, %v1086
        %vm1089 = vcmp.lt.s32.totalorder %v961, 0
        %v1090 = vsub.s32 0, %v961
        %v1091 = vsel %vm1089, %v1090, %v961
        %v1092 = vshrl.u32 %v1091, 4
        %v1093 = vand.u32 %v1091, 15
        %v1094 = vsub.s32 0, %v1093
        %v1095 = vsel %vm1089, %v1094, %v1093
        %vm1096 = vcmp.lt.s32.totalorder %v962, 0
        %v1097 = vsub.s32 0, %v962
        %v1098 = vsel %vm1096, %v1097, %v962
        %v1099 = vshrl.u32 %v1098, 4
        %v1100 = vand.u32 %v1098, 15
        %v1101 = vsub.s32 0, %v1100
        %v1102 = vsel %vm1096, %v1101, %v1100
        %vm1103 = vcmp.lt.s32.totalorder %v963, 0
        %v1104 = vsub.s32 0, %v963
        %v1105 = vsel %vm1103, %v1104, %v963
        %v1106 = vshrl.u32 %v1105, 4
        %v1107 = vand.u32 %v1105, 15
        %v1108 = vsub.s32 0, %v1107
        %v1109 = vsel %vm1103, %v1108, %v1107
        %vm1110 = vcmp.lt.s32.totalorder %v964, 0
        %v1111 = vsub.s32 0, %v964
        %v1112 = vsel %vm1110, %v1111, %v964
        %v1113 = vshrl.u32 %v1112, 4
        %v1114 = vand.u32 %v1112, 15
        %v1115 = vsub.s32 0, %v1114
        %v1116 = vsel %vm1110, %v1115, %v1114
        %vm1117 = vcmp.lt.s32.totalorder %v965, 0
        %v1118 = vsub.s32 0, %v965
        %v1119 = vsel %vm1117, %v1118, %v965
        %v1120 = vshrl.u32 %v1119, 4
        %v1121 = vand.u32 %v1119, 15
        %v1122 = vsub.s32 0, %v1121
        %v1123 = vsel %vm1117, %v1122, %v1121
        %vm1124 = vcmp.lt.s32.totalorder %v966, 0
        %v1125 = vsub.s32 0, %v966
        %v1126 = vsel %vm1124, %v1125, %v966
        %v1127 = vshrl.u32 %v1126, 4
        %v1128 = vand.u32 %v1126, 15
        %v1129 = vsub.s32 0, %v1128
        %v1130 = vsel %vm1124, %v1129, %v1128
        %vm1131 = vcmp.lt.s32.totalorder %v967, 0
        %v1132 = vsub.s32 0, %v967
        %v1133 = vsel %vm1131, %v1132, %v967
        %v1134 = vshrl.u32 %v1133, 4
        %v1135 = vand.u32 %v1133, 15
        %v1136 = vsub.s32 0, %v1135
        %v1137 = vsel %vm1131, %v1136, %v1135
        %vm1138 = vcmp.lt.s32.totalorder %v968, 0
        %v1139 = vsub.s32 0, %v968
        %v1140 = vsel %vm1138, %v1139, %v968
        %v1141 = vshrl.u32 %v1140, 4
        %v1142 = vand.u32 %v1140, 15
        %v1143 = vsub.s32 0, %v1142
        %v1144 = vsel %vm1138, %v1143, %v1142
        %vm1145 = vcmp.lt.s32.totalorder %v969, 0
        %v1146 = vsub.s32 0, %v969
        %v1147 = vsel %vm1145, %v1146, %v969
        %v1148 = vshrl.u32 %v1147, 4
        %v1149 = vand.u32 %v1147, 15
        %v1150 = vsub.s32 0, %v1149
        %v1151 = vsel %vm1145, %v1150, %v1149
        %vm1152 = vcmp.lt.s32.totalorder %v970, 0
        %v1153 = vsub.s32 0, %v970
        %v1154 = vsel %vm1152, %v1153, %v970
        %v1155 = vshrl.u32 %v1154, 4
        %v1156 = vand.u32 %v1154, 15
        %v1157 = vsub.s32 0, %v1156
        %v1158 = vsel %vm1152, %v1157, %v1156
        %vm1159 = vcmp.lt.s32.totalorder %v971, 0
        %v1160 = vsub.s32 0, %v971
        %v1161 = vsel %vm1159, %v1160, %v971
        %v1162 = vshrl.u32 %v1161, 4
        %v1163 = vand.u32 %v1161, 15
        %v1164 = vsub.s32 0, %v1163
        %v1165 = vsel %vm1159, %v1164, %v1163
        %vm1166 = vcmp.lt.s32.totalorder %v972, 0
        %v1167 = vsub.s32 0, %v972
        %v1168 = vsel %vm1166, %v1167, %v972
        %v1169 = vshrl.u32 %v1168, 4
        %v1170 = vand.u32 %v1168, 15
        %v1171 = vsub.s32 0, %v1170
        %v1172 = vsel %vm1166, %v1171, %v1170
        %vm1173 = vcmp.lt.s32.totalorder %v973, 0
        %v1174 = vsub.s32 0, %v973
        %v1175 = vsel %vm1173, %v1174, %v973
        %v1176 = vshrl.u32 %v1175, 4
        %v1177 = vand.u32 %v1175, 15
        %v1178 = vsub.s32 0, %v1177
        %v1179 = vsel %vm1173, %v1178, %v1177
        %vm1180 = vcmp.lt.s32.totalorder %v974, 0
        %v1181 = vsub.s32 0, %v974
        %v1182 = vsel %vm1180, %v1181, %v974
        %v1183 = vshrl.u32 %v1182, 4
        %v1184 = vand.u32 %v1182, 15
        %v1185 = vsub.s32 0, %v1184
        %v1186 = vsel %vm1180, %v1185, %v1184
        %vm1187 = vcmp.lt.s32.totalorder %v975, 0
        %v1188 = vsub.s32 0, %v975
        %v1189 = vsel %vm1187, %v1188, %v975
        %v1190 = vshrl.u32 %v1189, 4
        %v1191 = vand.u32 %v1189, 15
        %v1192 = vsub.s32 0, %v1191
        %v1193 = vsel %vm1187, %v1192, %v1191
        %vm1194 = vcmp.lt.s32.totalorder %v976, 0
        %v1195 = vsub.s32 0, %v976
        %v1196 = vsel %vm1194, %v1195, %v976
        %v1197 = vshrl.u32 %v1196, 4
        %v1198 = vand.u32 %v1196, 15
        %v1199 = vsub.s32 0, %v1198
        %v1200 = vsel %vm1194, %v1199, %v1198
        %vm1201 = vcmp.ne.s32.totalorder %v983, 0
        %vm1202 = vcmp.ne.s32.totalorder %v990, 0
        %vm1203 = vcmp.ne.s32.totalorder %v997, 0
        %vm1204 = vcmp.ne.s32.totalorder %v1004, 0
        %vm1205 = vcmp.ne.s32.totalorder %v1011, 0
        %vm1206 = vcmp.ne.s32.totalorder %v1018, 0
        %vm1207 = vcmp.ne.s32.totalorder %v1025, 0
        %vm1208 = vcmp.ne.s32.totalorder %v1032, 0
        %vm1209 = vcmp.ne.s32.totalorder %v1039, 0
        %vm1210 = vcmp.ne.s32.totalorder %v1046, 0
        %vm1211 = vcmp.ne.s32.totalorder %v1053, 0
        %vm1212 = vcmp.ne.s32.totalorder %v1060, 0
        %vm1213 = vcmp.ne.s32.totalorder %v1067, 0
        %vm1214 = vcmp.ne.s32.totalorder %v1074, 0
        %vm1215 = vcmp.ne.s32.totalorder %v1081, 0
        %vm1216 = vcmp.ne.s32.totalorder %v1088, 0
        %vm1217 = vcmp.ne.s32.totalorder %v1095, 0
        %vm1218 = vcmp.ne.s32.totalorder %v1102, 0
        %vm1219 = vcmp.ne.s32.totalorder %v1109, 0
        %vm1220 = vcmp.ne.s32.totalorder %v1116, 0
        %vm1221 = vcmp.ne.s32.totalorder %v1123, 0
        %vm1222 = vcmp.ne.s32.totalorder %v1130, 0
        %vm1223 = vcmp.ne.s32.totalorder %v1137, 0
        %vm1224 = vcmp.ne.s32.totalorder %v1144, 0
        %vm1225 = vcmp.ne.s32.totalorder %v1151, 0
        %vm1226 = vcmp.ne.s32.totalorder %v1158, 0
        %vm1227 = vcmp.ne.s32.totalorder %v1165, 0
        %vm1228 = vcmp.ne.s32.totalorder %v1172, 0
        %vm1229 = vcmp.ne.s32.totalorder %v1179, 0
        %vm1230 = vcmp.ne.s32.totalorder %v1186, 0
        %vm1231 = vcmp.ne.s32.totalorder %v1193, 0
        %vm1232 = vcmp.ne.s32.totalorder %v1200, 0
        %vm1233 = vcmp.lt.s32.totalorder %v983, 0
        %vm1234 = vcmp.lt.s32.totalorder %v990, 0
        %vm1235 = vcmp.lt.s32.totalorder %v997, 0
        %vm1236 = vcmp.lt.s32.totalorder %v1004, 0
        %vm1237 = vcmp.lt.s32.totalorder %v1011, 0
        %vm1238 = vcmp.lt.s32.totalorder %v1018, 0
        %vm1239 = vcmp.lt.s32.totalorder %v1025, 0
        %vm1240 = vcmp.lt.s32.totalorder %v1032, 0
        %vm1241 = vcmp.lt.s32.totalorder %v1039, 0
        %vm1242 = vcmp.lt.s32.totalorder %v1046, 0
        %vm1243 = vcmp.lt.s32.totalorder %v1053, 0
        %vm1244 = vcmp.lt.s32.totalorder %v1060, 0
        %vm1245 = vcmp.lt.s32.totalorder %v1067, 0
        %vm1246 = vcmp.lt.s32.totalorder %v1074, 0
        %vm1247 = vcmp.lt.s32.totalorder %v1081, 0
        %vm1248 = vcmp.lt.s32.totalorder %v1088, 0
        %vm1249 = vcmp.lt.s32.totalorder %v1095, 0
        %vm1250 = vcmp.lt.s32.totalorder %v1102, 0
        %vm1251 = vcmp.lt.s32.totalorder %v1109, 0
        %vm1252 = vcmp.lt.s32.totalorder %v1116, 0
        %vm1253 = vcmp.lt.s32.totalorder %v1123, 0
        %vm1254 = vcmp.lt.s32.totalorder %v1130, 0
        %vm1255 = vcmp.lt.s32.totalorder %v1137, 0
        %vm1256 = vcmp.lt.s32.totalorder %v1144, 0
        %vm1257 = vcmp.lt.s32.totalorder %v1151, 0
        %vm1258 = vcmp.lt.s32.totalorder %v1158, 0
        %vm1259 = vcmp.lt.s32.totalorder %v1165, 0
        %vm1260 = vcmp.lt.s32.totalorder %v1172, 0
        %vm1261 = vcmp.lt.s32.totalorder %v1179, 0
        %vm1262 = vcmp.lt.s32.totalorder %v1186, 0
        %vm1263 = vcmp.lt.s32.totalorder %v1193, 0
        %vm1264 = vcmp.lt.s32.totalorder %v1200, 0
        %vm1265 = vmand %vm1233, %vm1201
        %vm1266 = vmand %vm1234, %vm1202
        %vm1267 = vmand %vm1235, %vm1203
        %vm1268 = vmand %vm1236, %vm1204
        %vm1269 = vmand %vm1237, %vm1205
        %vm1270 = vmand %vm1238, %vm1206
        %vm1271 = vmand %vm1239, %vm1207
        %vm1272 = vmand %vm1240, %vm1208
        %vm1273 = vmand %vm1241, %vm1209
        %vm1274 = vmand %vm1242, %vm1210
        %vm1275 = vmand %vm1243, %vm1211
        %vm1276 = vmand %vm1244, %vm1212
        %vm1277 = vmand %vm1245, %vm1213
        %vm1278 = vmand %vm1246, %vm1214
        %vm1279 = vmand %vm1247, %vm1215
        %vm1280 = vmand %vm1248, %vm1216
        %vm1281 = vmand %vm1249, %vm1217
        %vm1282 = vmand %vm1250, %vm1218
        %vm1283 = vmand %vm1251, %vm1219
        %vm1284 = vmand %vm1252, %vm1220
        %vm1285 = vmand %vm1253, %vm1221
        %vm1286 = vmand %vm1254, %vm1222
        %vm1287 = vmand %vm1255, %vm1223
        %vm1288 = vmand %vm1256, %vm1224
        %vm1289 = vmand %vm1257, %vm1225
        %vm1290 = vmand %vm1258, %vm1226
        %vm1291 = vmand %vm1259, %vm1227
        %vm1292 = vmand %vm1260, %vm1228
        %vm1293 = vmand %vm1261, %vm1229
        %vm1294 = vmand %vm1262, %vm1230
        %vm1295 = vmand %vm1263, %vm1231
        %vm1296 = vmand %vm1264, %vm1232
        %v1297 = vadd.s32 %v983, 16
        %v1298 = vadd.s32 %v990, 16
        %v1299 = vadd.s32 %v997, 16
        %v1300 = vadd.s32 %v1004, 16
        %v1301 = vadd.s32 %v1011, 16
        %v1302 = vadd.s32 %v1018, 16
        %v1303 = vadd.s32 %v1025, 16
        %v1304 = vadd.s32 %v1032, 16
        %v1305 = vadd.s32 %v1039, 16
        %v1306 = vadd.s32 %v1046, 16
        %v1307 = vadd.s32 %v1053, 16
        %v1308 = vadd.s32 %v1060, 16
        %v1309 = vadd.s32 %v1067, 16
        %v1310 = vadd.s32 %v1074, 16
        %v1311 = vadd.s32 %v1081, 16
        %v1312 = vadd.s32 %v1088, 16
        %v1313 = vadd.s32 %v1095, 16
        %v1314 = vadd.s32 %v1102, 16
        %v1315 = vadd.s32 %v1109, 16
        %v1316 = vadd.s32 %v1116, 16
        %v1317 = vadd.s32 %v1123, 16
        %v1318 = vadd.s32 %v1130, 16
        %v1319 = vadd.s32 %v1137, 16
        %v1320 = vadd.s32 %v1144, 16
        %v1321 = vadd.s32 %v1151, 16
        %v1322 = vadd.s32 %v1158, 16
        %v1323 = vadd.s32 %v1165, 16
        %v1324 = vadd.s32 %v1172, 16
        %v1325 = vadd.s32 %v1179, 16
        %v1326 = vadd.s32 %v1186, 16
        %v1327 = vadd.s32 %v1193, 16
        %v1328 = vadd.s32 %v1200, 16
        %v1329 = vsel %vm1265, %v1297, %v983
        %v1330 = vsel %vm1266, %v1298, %v990
        %v1331 = vsel %vm1267, %v1299, %v997
        %v1332 = vsel %vm1268, %v1300, %v1004
        %v1333 = vsel %vm1269, %v1301, %v1011
        %v1334 = vsel %vm1270, %v1302, %v1018
        %v1335 = vsel %vm1271, %v1303, %v1025
        %v1336 = vsel %vm1272, %v1304, %v1032
        %v1337 = vsel %vm1273, %v1305, %v1039
        %v1338 = vsel %vm1274, %v1306, %v1046
        %v1339 = vsel %vm1275, %v1307, %v1053
        %v1340 = vsel %vm1276, %v1308, %v1060
        %v1341 = vsel %vm1277, %v1309, %v1067
        %v1342 = vsel %vm1278, %v1310, %v1074
        %v1343 = vsel %vm1279, %v1311, %v1081
        %v1344 = vsel %vm1280, %v1312, %v1088
        %v1345 = vsel %vm1281, %v1313, %v1095
        %v1346 = vsel %vm1282, %v1314, %v1102
        %v1347 = vsel %vm1283, %v1315, %v1109
        %v1348 = vsel %vm1284, %v1316, %v1116
        %v1349 = vsel %vm1285, %v1317, %v1123
        %v1350 = vsel %vm1286, %v1318, %v1130
        %v1351 = vsel %vm1287, %v1319, %v1137
        %v1352 = vsel %vm1288, %v1320, %v1144
        %v1353 = vsel %vm1289, %v1321, %v1151
        %v1354 = vsel %vm1290, %v1322, %v1158
        %v1355 = vsel %vm1291, %v1323, %v1165
        %v1356 = vsel %vm1292, %v1324, %v1172
        %v1357 = vsel %vm1293, %v1325, %v1179
        %v1358 = vsel %vm1294, %v1326, %v1186
        %v1359 = vsel %vm1295, %v1327, %v1193
        %v1360 = vsel %vm1296, %v1328, %v1200
        %vm1361 = vcmp.eq.s32.totalorder %v1329, 0
        %vm1362 = vcmp.eq.s32.totalorder %v1330, 0
        %vm1363 = vcmp.eq.s32.totalorder %v1331, 0
        %vm1364 = vcmp.eq.s32.totalorder %v1332, 0
        %vm1365 = vcmp.eq.s32.totalorder %v1333, 0
        %vm1366 = vcmp.eq.s32.totalorder %v1334, 0
        %vm1367 = vcmp.eq.s32.totalorder %v1335, 0
        %vm1368 = vcmp.eq.s32.totalorder %v1336, 0
        %vm1369 = vcmp.eq.s32.totalorder %v1337, 0
        %vm1370 = vcmp.eq.s32.totalorder %v1338, 0
        %vm1371 = vcmp.eq.s32.totalorder %v1339, 0
        %vm1372 = vcmp.eq.s32.totalorder %v1340, 0
        %vm1373 = vcmp.eq.s32.totalorder %v1341, 0
        %vm1374 = vcmp.eq.s32.totalorder %v1342, 0
        %vm1375 = vcmp.eq.s32.totalorder %v1343, 0
        %vm1376 = vcmp.eq.s32.totalorder %v1344, 0
        %vm1377 = vcmp.eq.s32.totalorder %v1345, 0
        %vm1378 = vcmp.eq.s32.totalorder %v1346, 0
        %vm1379 = vcmp.eq.s32.totalorder %v1347, 0
        %vm1380 = vcmp.eq.s32.totalorder %v1348, 0
        %vm1381 = vcmp.eq.s32.totalorder %v1349, 0
        %vm1382 = vcmp.eq.s32.totalorder %v1350, 0
        %vm1383 = vcmp.eq.s32.totalorder %v1351, 0
        %vm1384 = vcmp.eq.s32.totalorder %v1352, 0
        %vm1385 = vcmp.eq.s32.totalorder %v1353, 0
        %vm1386 = vcmp.eq.s32.totalorder %v1354, 0
        %vm1387 = vcmp.eq.s32.totalorder %v1355, 0
        %vm1388 = vcmp.eq.s32.totalorder %v1356, 0
        %vm1389 = vcmp.eq.s32.totalorder %v1357, 0
        %vm1390 = vcmp.eq.s32.totalorder %v1358, 0
        %vm1391 = vcmp.eq.s32.totalorder %v1359, 0
        %vm1392 = vcmp.eq.s32.totalorder %v1360, 0
        %vm1393 = vcmp.eq.s32.totalorder %v1329, 15
        %vm1394 = vcmp.eq.s32.totalorder %v1330, 15
        %vm1395 = vcmp.eq.s32.totalorder %v1331, 15
        %vm1396 = vcmp.eq.s32.totalorder %v1332, 15
        %vm1397 = vcmp.eq.s32.totalorder %v1333, 15
        %vm1398 = vcmp.eq.s32.totalorder %v1334, 15
        %vm1399 = vcmp.eq.s32.totalorder %v1335, 15
        %vm1400 = vcmp.eq.s32.totalorder %v1336, 15
        %vm1401 = vcmp.eq.s32.totalorder %v1337, 15
        %vm1402 = vcmp.eq.s32.totalorder %v1338, 15
        %vm1403 = vcmp.eq.s32.totalorder %v1339, 15
        %vm1404 = vcmp.eq.s32.totalorder %v1340, 15
        %vm1405 = vcmp.eq.s32.totalorder %v1341, 15
        %vm1406 = vcmp.eq.s32.totalorder %v1342, 15
        %vm1407 = vcmp.eq.s32.totalorder %v1343, 15
        %vm1408 = vcmp.eq.s32.totalorder %v1344, 15
        %vm1409 = vcmp.eq.s32.totalorder %v1345, 15
        %vm1410 = vcmp.eq.s32.totalorder %v1346, 15
        %vm1411 = vcmp.eq.s32.totalorder %v1347, 15
        %vm1412 = vcmp.eq.s32.totalorder %v1348, 15
        %vm1413 = vcmp.eq.s32.totalorder %v1349, 15
        %vm1414 = vcmp.eq.s32.totalorder %v1350, 15
        %vm1415 = vcmp.eq.s32.totalorder %v1351, 15
        %vm1416 = vcmp.eq.s32.totalorder %v1352, 15
        %vm1417 = vcmp.eq.s32.totalorder %v1353, 15
        %vm1418 = vcmp.eq.s32.totalorder %v1354, 15
        %vm1419 = vcmp.eq.s32.totalorder %v1355, 15
        %vm1420 = vcmp.eq.s32.totalorder %v1356, 15
        %vm1421 = vcmp.eq.s32.totalorder %v1357, 15
        %vm1422 = vcmp.eq.s32.totalorder %v1358, 15
        %vm1423 = vcmp.eq.s32.totalorder %v1359, 15
        %vm1424 = vcmp.eq.s32.totalorder %v1360, 15
        %v1425 = vld [vmem:[#allocation2 + $0x7] sm:$0xff]
        %v1426 = vld [vmem:[#allocation2 + $0xf] sm:$0xff]
        %v1427 = vld [vmem:[#allocation2 + $0x17] sm:$0xff]
        %v1428 = vld [vmem:[#allocation2 + $0x1f] sm:$0xff]
        %v1429 = vld [vmem:[#allocation2 + $0x27] sm:$0xff]
        %v1430 = vld [vmem:[#allocation2 + $0x2f] sm:$0xff]
        %v1431 = vld [vmem:[#allocation2 + $0x37] sm:$0xff]
        %v1432 = vld [vmem:[#allocation2 + $0x3f] sm:$0xff]
        %v1433 = vld [vmem:[#allocation2 + $0x47] sm:$0xff]
        %v1434 = vld [vmem:[#allocation2 + $0x4f] sm:$0xff]
        %v1435 = vld [vmem:[#allocation2 + $0x57] sm:$0xff]
        %v1436 = vld [vmem:[#allocation2 + $0x5f] sm:$0xff]
        %v1437 = vld [vmem:[#allocation2 + $0x67] sm:$0xff]
        %v1438 = vld [vmem:[#allocation2 + $0x6f] sm:$0xff]
        %v1439 = vld [vmem:[#allocation2 + $0x77] sm:$0xff]
        %v1440 = vld [vmem:[#allocation2 + $0x7f] sm:$0xff]
        %v1441 = vld [vmem:[#allocation2 + $0x87] sm:$0xff]
        %v1442 = vld [vmem:[#allocation2 + $0x8f] sm:$0xff]
        %v1443 = vld [vmem:[#allocation2 + $0x97] sm:$0xff]
        %v1444 = vld [vmem:[#allocation2 + $0x9f] sm:$0xff]
        %v1445 = vld [vmem:[#allocation2 + $0xa7] sm:$0xff]
        %v1446 = vld [vmem:[#allocation2 + $0xaf] sm:$0xff]
        %v1447 = vld [vmem:[#allocation2 + $0xb7] sm:$0xff]
        %v1448 = vld [vmem:[#allocation2 + $0xbf] sm:$0xff]
        %v1449 = vld [vmem:[#allocation2 + $0xc7] sm:$0xff]
        %v1450 = vld [vmem:[#allocation2 + $0xcf] sm:$0xff]
        %v1451 = vld [vmem:[#allocation2 + $0xd7] sm:$0xff]
        %v1452 = vld [vmem:[#allocation2 + $0xdf] sm:$0xff]
        %v1453 = vld [vmem:[#allocation2 + $0xe7] sm:$0xff]
        %v1454 = vld [vmem:[#allocation2 + $0xef] sm:$0xff]
        %v1455 = vld [vmem:[#allocation2 + $0xf7] sm:$0xff]
        %v1456 = vld [vmem:[#allocation2 + $0xff] sm:$0xff]
        %v1457 = vsel %vm1361, 1, 0
        %v1458 = vsel %vm1362, 1, 0
        %v1459 = vsel %vm1363, 1, 0
        %v1460 = vsel %vm1364, 1, 0
        %v1461 = vsel %vm1365, 1, 0
        %v1462 = vsel %vm1366, 1, 0
        %v1463 = vsel %vm1367, 1, 0
        %v1464 = vsel %vm1368, 1, 0
        %v1465 = vsel %vm1369, 1, 0
        %v1466 = vsel %vm1370, 1, 0
        %v1467 = vsel %vm1371, 1, 0
        %v1468 = vsel %vm1372, 1, 0
        %v1469 = vsel %vm1373, 1, 0
        %v1470 = vsel %vm1374, 1, 0
        %v1471 = vsel %vm1375, 1, 0
        %v1472 = vsel %vm1376, 1, 0
        %v1473 = vsel %vm1377, 1, 0
        %v1474 = vsel %vm1378, 1, 0
        %v1475 = vsel %vm1379, 1, 0
        %v1476 = vsel %vm1380, 1, 0
        %v1477 = vsel %vm1381, 1, 0
        %v1478 = vsel %vm1382, 1, 0
        %v1479 = vsel %vm1383, 1, 0
        %v1480 = vsel %vm1384, 1, 0
        %v1481 = vsel %vm1385, 1, 0
        %v1482 = vsel %vm1386, 1, 0
        %v1483 = vsel %vm1387, 1, 0
        %v1484 = vsel %vm1388, 1, 0
        %v1485 = vsel %vm1389, 1, 0
        %v1486 = vsel %vm1390, 1, 0
        %v1487 = vsel %vm1391, 1, 0
        %v1488 = vsel %vm1392, 1, 0
        %vm1489 = vcmp.eq.s32.totalorder %v1457, 1
        %vm1490 = vcmp.eq.s32.totalorder %v1458, 1
        %vm1491 = vcmp.eq.s32.totalorder %v1459, 1
        %vm1492 = vcmp.eq.s32.totalorder %v1460, 1
        %vm1493 = vcmp.eq.s32.totalorder %v1461, 1
        %vm1494 = vcmp.eq.s32.totalorder %v1462, 1
        %vm1495 = vcmp.eq.s32.totalorder %v1463, 1
        %vm1496 = vcmp.eq.s32.totalorder %v1464, 1
        %vm1497 = vcmp.eq.s32.totalorder %v1465, 1
        %vm1498 = vcmp.eq.s32.totalorder %v1466, 1
        %vm1499 = vcmp.eq.s32.totalorder %v1467, 1
        %vm1500 = vcmp.eq.s32.totalorder %v1468, 1
        %vm1501 = vcmp.eq.s32.totalorder %v1469, 1
        %vm1502 = vcmp.eq.s32.totalorder %v1470, 1
        %vm1503 = vcmp.eq.s32.totalorder %v1471, 1
        %vm1504 = vcmp.eq.s32.totalorder %v1472, 1
        %vm1505 = vcmp.eq.s32.totalorder %v1473, 1
        %vm1506 = vcmp.eq.s32.totalorder %v1474, 1
        %vm1507 = vcmp.eq.s32.totalorder %v1475, 1
        %vm1508 = vcmp.eq.s32.totalorder %v1476, 1
        %vm1509 = vcmp.eq.s32.totalorder %v1477, 1
        %vm1510 = vcmp.eq.s32.totalorder %v1478, 1
        %vm1511 = vcmp.eq.s32.totalorder %v1479, 1
        %vm1512 = vcmp.eq.s32.totalorder %v1480, 1
        %vm1513 = vcmp.eq.s32.totalorder %v1481, 1
        %vm1514 = vcmp.eq.s32.totalorder %v1482, 1
        %vm1515 = vcmp.eq.s32.totalorder %v1483, 1
        %vm1516 = vcmp.eq.s32.totalorder %v1484, 1
        %vm1517 = vcmp.eq.s32.totalorder %v1485, 1
        %vm1518 = vcmp.eq.s32.totalorder %v1486, 1
        %vm1519 = vcmp.eq.s32.totalorder %v1487, 1
        %vm1520 = vcmp.eq.s32.totalorder %v1488, 1
        %v1521 = vsel %vm1489, 0.0, %v1425
        %v1522 = vsel %vm1490, 0.0, %v1426
        %v1523 = vsel %vm1491, 0.0, %v1427
        %v1524 = vsel %vm1492, 0.0, %v1428
        %v1525 = vsel %vm1493, 0.0, %v1429
        %v1526 = vsel %vm1494, 0.0, %v1430
        %v1527 = vsel %vm1495, 0.0, %v1431
        %v1528 = vsel %vm1496, 0.0, %v1432
        %v1529 = vsel %vm1497, 0.0, %v1433
        %v1530 = vsel %vm1498, 0.0, %v1434
        %v1531 = vsel %vm1499, 0.0, %v1435
        %v1532 = vsel %vm1500, 0.0, %v1436
        %v1533 = vsel %vm1501, 0.0, %v1437
        %v1534 = vsel %vm1502, 0.0, %v1438
        %v1535 = vsel %vm1503, 0.0, %v1439
        %v1536 = vsel %vm1504, 0.0, %v1440
        %v1537 = vsel %vm1505, 0.0, %v1441
        %v1538 = vsel %vm1506, 0.0, %v1442
        %v1539 = vsel %vm1507, 0.0, %v1443
        %v1540 = vsel %vm1508, 0.0, %v1444
        %v1541 = vsel %vm1509, 0.0, %v1445
        %v1542 = vsel %vm1510, 0.0, %v1446
        %v1543 = vsel %vm1511, 0.0, %v1447
        %v1544 = vsel %vm1512, 0.0, %v1448
        %v1545 = vsel %vm1513, 0.0, %v1449
        %v1546 = vsel %vm1514, 0.0, %v1450
        %v1547 = vsel %vm1515, 0.0, %v1451
        %v1548 = vsel %vm1516, 0.0, %v1452
        %v1549 = vsel %vm1517, 0.0, %v1453
        %v1550 = vsel %vm1518, 0.0, %v1454
        %v1551 = vsel %vm1519, 0.0, %v1455
        %v1552 = vsel %vm1520, 0.0, %v1456
        %v1553 = vld [vmem:[%s2] sm:$0xff]
        %v1554 = vld [vmem:[%s2 + $0x8] sm:$0xff]
        %v1555 = vld [vmem:[%s2 + $0x10] sm:$0xff]
        %v1556 = vld [vmem:[%s2 + $0x18] sm:$0xff]
        %v1557 = vld [vmem:[#allocation2 + $0x8] sm:$0xff]
        %v1558 = vld [vmem:[#allocation2 + $0x10] sm:$0xff]
        %v1559 = vld [vmem:[#allocation2 + $0x18] sm:$0xff]
        %v1560 = vld [vmem:[#allocation2 + $0x20] sm:$0xff]
        %v1561 = vld [vmem:[#allocation2 + $0x28] sm:$0xff]
        %v1562 = vld [vmem:[#allocation2 + $0x30] sm:$0xff]
        %v1563 = vld [vmem:[#allocation2 + $0x38] sm:$0xff]
        %v1564 = vld [vmem:[#allocation2 + $0x40] sm:$0xff]
        %v1565 = vld [vmem:[#allocation2 + $0x48] sm:$0xff]
        %v1566 = vld [vmem:[#allocation2 + $0x50] sm:$0xff]
        %v1567 = vld [vmem:[#allocation2 + $0x58] sm:$0xff]
        %v1568 = vld [vmem:[#allocation2 + $0x60] sm:$0xff]
        %v1569 = vld [vmem:[#allocation2 + $0x68] sm:$0xff]
        %v1570 = vld [vmem:[#allocation2 + $0x70] sm:$0xff]
        %v1571 = vld [vmem:[#allocation2 + $0x78] sm:$0xff]
        %v1572 = vld [vmem:[#allocation2 + $0x80] sm:$0xff]
        %v1573 = vld [vmem:[#allocation2 + $0x88] sm:$0xff]
        %v1574 = vld [vmem:[#allocation2 + $0x90] sm:$0xff]
        %v1575 = vld [vmem:[#allocation2 + $0x98] sm:$0xff]
        %v1576 = vld [vmem:[#allocation2 + $0xa0] sm:$0xff]
        %v1577 = vld [vmem:[#allocation2 + $0xa8] sm:$0xff]
        %v1578 = vld [vmem:[#allocation2 + $0xb0] sm:$0xff]
        %v1579 = vld [vmem:[#allocation2 + $0xb8] sm:$0xff]
        %v1580 = vld [vmem:[#allocation2 + $0xc0] sm:$0xff]
        %v1581 = vld [vmem:[#allocation2 + $0xc8] sm:$0xff]
        %v1582 = vld [vmem:[#allocation2 + $0xd0] sm:$0xff]
        %v1583 = vld [vmem:[#allocation2 + $0xd8] sm:$0xff]
        %v1584 = vld [vmem:[#allocation2 + $0xe0] sm:$0xff]
        %v1585 = vld [vmem:[#allocation2 + $0xe8] sm:$0xff]
        %v1586 = vld [vmem:[#allocation2 + $0xf0] sm:$0xff]
        %v1587 = vld [vmem:[#allocation2 + $0xf8] sm:$0xff]
        %v1588 = vld [vmem:[#allocation2 + $0x100] sm:$0xff]
        %s1589 = scalar_lea.vmem %s2, 32
        %v1590 = vld [vmem:[%s1589] sm:$0xff]
        %v1591 = vld [vmem:[%s1589 + $0x8] sm:$0xff]
        %v1592 = vld [vmem:[%s1589 + $0x10] sm:$0xff]
        %v1593 = vld [vmem:[%s1589 + $0x18] sm:$0xff]
        %v1595 = vsel %vm905, %v1557, 0
        %v1598 = vsel %vm905, %v1558, 0
        %v1601 = vsel %vm905, %v1559, 0
        %v1604 = vsel %vm905, %v1560, 0
        %v1607 = vsel %vm905, %v1561, 0
        %v1610 = vsel %vm905, %v1562, 0
        %v1613 = vsel %vm905, %v1563, 0
        %v1616 = vsel %vm905, %v1564, 0
        %v1619 = vsel %vm905, %v1565, 0
        %v1622 = vsel %vm905, %v1566, 0
        %v1625 = vsel %vm905, %v1567, 0
        %v1628 = vsel %vm905, %v1568, 0
        %v1631 = vsel %vm905, %v1569, 0
        %v1634 = vsel %vm905, %v1570, 0
        %v1637 = vsel %vm905, %v1571, 0
        %v1640 = vsel %vm905, %v1572, 0
        %v1643 = vsel %vm905, %v1573, 0
        %v1646 = vsel %vm905, %v1574, 0
        %v1649 = vsel %vm905, %v1575, 0
        %v1652 = vsel %vm905, %v1576, 0
        %v1655 = vsel %vm905, %v1577, 0
        %v1658 = vsel %vm905, %v1578, 0
        %v1661 = vsel %vm905, %v1579, 0
        %v1664 = vsel %vm905, %v1580, 0
        %v1667 = vsel %vm905, %v1581, 0
        %v1670 = vsel %vm905, %v1582, 0
        %v1673 = vsel %vm905, %v1583, 0
        %v1676 = vsel %vm905, %v1584, 0
        %v1679 = vsel %vm905, %v1585, 0
        %v1682 = vsel %vm905, %v1586, 0
        %v1685 = vsel %vm905, %v1587, 0
        %v1688 = vsel %vm905, %v1588, 0
        %1690 = vmatprep.subr.mxu0 0.0
        %1691 = vmatpush1.msra.mxu0 %v1590
        %1692 = vmatprep.subr.mxu0 0.0
        %1693 = vmatpush1.msra.mxu0 %v1591
        %1694 = vmatprep.subr.mxu0 0.0
        %1695 = vmatpush1.msra.mxu0 %v1592
        %1696 = vmatprep.subr.mxu0 0.0
        %1697 = vmatpush1.msra.mxu0 %v1593
        %1698 = vmatprep.subr.mxu0 0.0
        %1699 = vmatpush1.msra.mxu0 0.0
        %1700 = vmatprep.subr.mxu0 0.0
        %1701 = vmatpush1.msra.mxu0 0.0
        %1702 = vmatprep.subr.mxu0 0.0
        %1703 = vmatpush1.msra.mxu0 0.0
        %1704 = vmatprep.subr.mxu0 0.0
        %1705 = vmatpush1.msra.mxu0 0.0
        %1706 = vmatprep.subr.mxu0 0.0
        %1707 = vmatpush1.msra.mxu0 0.0
        %1708 = vmatprep.subr.mxu0 0.0
        %1709 = vmatpush1.msra.mxu0 0.0
        %1710 = vmatprep.subr.mxu0 0.0
        %1711 = vmatpush1.msra.mxu0 0.0
        %1712 = vmatprep.subr.mxu0 0.0
        %1713 = vmatpush1.msra.mxu0 0.0
        %1714 = vmatprep.subr.mxu0 0.0
        %1715 = vmatpush1.msra.mxu0 0.0
        %1716 = vmatprep.subr.mxu0 0.0
        %1717 = vmatpush1.msra.mxu0 0.0
        %1718 = vmatprep.subr.mxu0 0.0
        %1719 = vmatpush1.msra.mxu0 0.0
        %1720 = vmatprep.subr.mxu0 0.0
        %1721 = vmatpush1.msra.mxu0 0.0
        %1722 = vmatprep.subr.mxu0 0.0
        %1723 = vmatpush1.msra.mxu0 0.0
        %1724 = vmatprep.subr.mxu0 0.0
        %1725 = vmatpush1.msra.mxu0 0.0
        %1726 = vmatprep.subr.mxu0 0.0
        %1727 = vmatpush1.msra.mxu0 0.0
        %1728 = vmatprep.subr.mxu0 0.0
        %1729 = vmatpush1.msra.mxu0 0.0
        %1730 = vmatprep.subr.mxu0 0.0
        %1731 = vmatpush1.msra.mxu0 0.0
        %1732 = vmatprep.subr.mxu0 0.0
        %1733 = vmatpush1.msra.mxu0 0.0
        %1734 = vmatprep.subr.mxu0 0.0
        %1735 = vmatpush1.msra.mxu0 0.0
        %1736 = vmatprep.subr.mxu0 0.0
        %1737 = vmatpush1.msra.mxu0 0.0
        %1738 = vmatprep.subr.mxu0 0.0
        %1739 = vmatpush1.msra.mxu0 0.0
        %1740 = vmatprep.subr.mxu0 0.0
        %1741 = vmatpush1.msra.mxu0 0.0
        %1742 = vmatprep.subr.mxu0 0.0
        %1743 = vmatpush1.msra.mxu0 0.0
        %1744 = vmatprep.subr.mxu0 0.0
        %1745 = vmatpush1.msra.mxu0 0.0
        %1746 = vmatprep.subr.mxu0 0.0
        %1747 = vmatpush1.msra.mxu0 0.0
        %1748 = vmatprep.subr.mxu0 0.0
        %1749 = vmatpush1.msra.mxu0 0.0
        %1750 = vmatprep.subr.mxu0 0.0
        %1751 = vmatpush1.msra.mxu0 0.0
        %1752 = vmatprep.subr.mxu0 0.0
        %1753 = vmatpush1.msra.mxu0 0.0
        %1754 = vmatprep.mubr.f32.mxu0 0.0
        %1755 = vmatmul.mubr.f32.gmra.mrb[0].mxu0 %v1595
        %v1756 = vpop.f32.mrb[0].mxu0
        %v1757 = vadd.f32 0.0, %v1756
        %v1758 = vpop.f32.mrb[0].mxu0
        %1759 = vmatprep.mubr.f32.mxu0 0.0
        %1760 = vmatmul.mubr.f32.gmra.mrb[0].mxu0 %v1598
        %v1761 = vpop.f32.mrb[0].mxu0
        %v1762 = vadd.f32 0.0, %v1761
        %v1763 = vpop.f32.mrb[0].mxu0
        %1764 = vmatprep.mubr.f32.mxu0 0.0
        %1765 = vmatmul.mubr.f32.gmra.mrb[0].mxu0 %v1601
        %v1766 = vpop.f32.mrb[0].mxu0
        %v1767 = vadd.f32 0.0, %v1766
        %v1768 = vpop.f32.mrb[0].mxu0
        %1769 = vmatprep.mubr.f32.mxu0 0.0
        %1770 = vmatmul.mubr.f32.gmra.mrb[0].mxu0 %v1604
        %v1771 = vpop.f32.mrb[0].mxu0
        %v1772 = vadd.f32 0.0, %v1771
        %v1773 = vpop.f32.mrb[0].mxu0
        %1774 = vmatprep.mubr.f32.mxu0 0.0
        %1775 = vmatmul.mubr.f32.gmra.mrb[0].mxu0 %v1607
        %v1776 = vpop.f32.mrb[0].mxu0
        %v1777 = vadd.f32 0.0, %v1776
        %v1778 = vpop.f32.mrb[0].mxu0
        %1779 = vmatprep.mubr.f32.mxu0 0.0
        %1780 = vmatmul.mubr.f32.gmra.mrb[0].mxu0 %v1610
        %v1781 = vpop.f32.mrb[0].mxu0
        %v1782 = vadd.f32 0.0, %v1781
        %v1783 = vpop.f32.mrb[0].mxu0
        %1784 = vmatprep.mubr.f32.mxu0 0.0
        %1785 = vmatmul.mubr.f32.gmra.mrb[0].mxu0 %v1613
        %v1786 = vpop.f32.mrb[0].mxu0
        %v1787 = vadd.f32 0.0, %v1786
        %v1788 = vpop.f32.mrb[0].mxu0
        %1789 = vmatprep.mubr.f32.mxu0 0.0
        %1790 = vmatmul.mubr.f32.gmra.mrb[0].mxu0 %v1616
        %v1791 = vpop.f32.mrb[0].mxu0
        %v1792 = vadd.f32 0.0, %v1791
        %v1793 = vpop.f32.mrb[0].mxu0
        %1794 = vmatprep.mubr.f32.mxu0 0.0
        %1795 = vmatmul.mubr.f32.gmra.mrb[0].mxu0 %v1619
        %v1796 = vpop.f32.mrb[0].mxu0
        %v1797 = vadd.f32 0.0, %v1796
        %v1798 = vpop.f32.mrb[0].mxu0
        %1799 = vmatprep.mubr.f32.mxu0 0.0
        %1800 = vmatmul.mubr.f32.gmra.mrb[0].mxu0 %v1622
        %v1801 = vpop.f32.mrb[0].mxu0
        %v1802 = vadd.f32 0.0, %v1801
        %v1803 = vpop.f32.mrb[0].mxu0
        %1804 = vmatprep.mubr.f32.mxu0 0.0
        %1805 = vmatmul.mubr.f32.gmra.mrb[0].mxu0 %v1625
        %v1806 = vpop.f32.mrb[0].mxu0
        %v1807 = vadd.f32 0.0, %v1806
        %v1808 = vpop.f32.mrb[0].mxu0
        %1809 = vmatprep.mubr.f32.mxu0 0.0
        %1810 = vmatmul.mubr.f32.gmra.mrb[0].mxu0 %v1628
        %v1811 = vpop.f32.mrb[0].mxu0
        %v1812 = vadd.f32 0.0, %v1811
        %v1813 = vpop.f32.mrb[0].mxu0
        %1814 = vmatprep.mubr.f32.mxu0 0.0
        %1815 = vmatmul.mubr.f32.gmra.mrb[0].mxu0 %v1631
        %v1816 = vpop.f32.mrb[0].mxu0
        %v1817 = vadd.f32 0.0, %v1816
        %v1818 = vpop.f32.mrb[0].mxu0
        %1819 = vmatprep.mubr.f32.mxu0 0.0
        %1820 = vmatmul.mubr.f32.gmra.mrb[0].mxu0 %v1634
        %v1821 = vpop.f32.mrb[0].mxu0
        %v1822 = vadd.f32 0.0, %v1821
        %v1823 = vpop.f32.mrb[0].mxu0
        %1824 = vmatprep.mubr.f32.mxu0 0.0
        %1825 = vmatmul.mubr.f32.gmra.mrb[0].mxu0 %v1637
        %v1826 = vpop.f32.mrb[0].mxu0
        %v1827 = vadd.f32 0.0, %v1826
        %v1828 = vpop.f32.mrb[0].mxu0
        %1829 = vmatprep.mubr.f32.mxu0 0.0
        %1830 = vmatmul.mubr.f32.gmra.mrb[0].mxu0 %v1640
        %v1831 = vpop.f32.mrb[0].mxu0
        %v1832 = vadd.f32 0.0, %v1831
        %v1833 = vpop.f32.mrb[0].mxu0
        %1834 = vmatprep.mubr.f32.mxu0 0.0
        %1835 = vmatmul.mubr.f32.gmra.mrb[0].mxu0 %v1643
        %v1836 = vpop.f32.mrb[0].mxu0
        %v1837 = vadd.f32 0.0, %v1836
        %v1838 = vpop.f32.mrb[0].mxu0
        %1839 = vmatprep.mubr.f32.mxu0 0.0
        %1840 = vmatmul.mubr.f32.gmra.mrb[0].mxu0 %v1646
        %v1841 = vpop.f32.mrb[0].mxu0
        %v1842 = vadd.f32 0.0, %v1841
        %v1843 = vpop.f32.mrb[0].mxu0
        %1844 = vmatprep.mubr.f32.mxu0 0.0
        %1845 = vmatmul.mubr.f32.gmra.mrb[0].mxu0 %v1649
        %v1846 = vpop.f32.mrb[0].mxu0
        %v1847 = vadd.f32 0.0, %v1846
        %v1848 = vpop.f32.mrb[0].mxu0
        %1849 = vmatprep.mubr.f32.mxu0 0.0
        %1850 = vmatmul.mubr.f32.gmra.mrb[0].mxu0 %v1652
        %v1851 = vpop.f32.mrb[0].mxu0
        %v1852 = vadd.f32 0.0, %v1851
        %v1853 = vpop.f32.mrb[0].mxu0
        %1854 = vmatprep.mubr.f32.mxu0 0.0
        %1855 = vmatmul.mubr.f32.gmra.mrb[0].mxu0 %v1655
        %v1856 = vpop.f32.mrb[0].mxu0
        %v1857 = vadd.f32 0.0, %v1856
        %v1858 = vpop.f32.mrb[0].mxu0
        %1859 = vmatprep.mubr.f32.mxu0 0.0
        %1860 = vmatmul.mubr.f32.gmra.mrb[0].mxu0 %v1658
        %v1861 = vpop.f32.mrb[0].mxu0
        %v1862 = vadd.f32 0.0, %v1861
        %v1863 = vpop.f32.mrb[0].mxu0
        %1864 = vmatprep.mubr.f32.mxu0 0.0
        %1865 = vmatmul.mubr.f32.gmra.mrb[0].mxu0 %v1661
        %v1866 = vpop.f32.mrb[0].mxu0
        %v1867 = vadd.f32 0.0, %v1866
        %v1868 = vpop.f32.mrb[0].mxu0
        %1869 = vmatprep.mubr.f32.mxu0 0.0
        %1870 = vmatmul.mubr.f32.gmra.mrb[0].mxu0 %v1664
        %v1871 = vpop.f32.mrb[0].mxu0
        %v1872 = vadd.f32 0.0, %v1871
        %v1873 = vpop.f32.mrb[0].mxu0
        %1874 = vmatprep.mubr.f32.mxu0 0.0
        %1875 = vmatmul.mubr.f32.gmra.mrb[0].mxu0 %v1667
        %v1876 = vpop.f32.mrb[0].mxu0
        %v1877 = vadd.f32 0.0, %v1876
        %v1878 = vpop.f32.mrb[0].mxu0
        %1879 = vmatprep.mubr.f32.mxu0 0.0
        %1880 = vmatmul.mubr.f32.gmra.mrb[0].mxu0 %v1670
        %v1881 = vpop.f32.mrb[0].mxu0
        %v1882 = vadd.f32 0.0, %v1881
        %v1883 = vpop.f32.mrb[0].mxu0
        %1884 = vmatprep.mubr.f32.mxu0 0.0
        %1885 = vmatmul.mubr.f32.gmra.mrb[0].mxu0 %v1673
        %v1886 = vpop.f32.mrb[0].mxu0
        %v1887 = vadd.f32 0.0, %v1886
        %v1888 = vpop.f32.mrb[0].mxu0
        %1889 = vmatprep.mubr.f32.mxu0 0.0
        %1890 = vmatmul.mubr.f32.gmra.mrb[0].mxu0 %v1676
        %v1891 = vpop.f32.mrb[0].mxu0
        %v1892 = vadd.f32 0.0, %v1891
        %v1893 = vpop.f32.mrb[0].mxu0
        %1894 = vmatprep.mubr.f32.mxu0 0.0
        %1895 = vmatmul.mubr.f32.gmra.mrb[0].mxu0 %v1679
        %v1896 = vpop.f32.mrb[0].mxu0
        %v1897 = vadd.f32 0.0, %v1896
        %v1898 = vpop.f32.mrb[0].mxu0
        %1899 = vmatprep.mubr.f32.mxu0 0.0
        %1900 = vmatmul.mubr.f32.gmra.mrb[0].mxu0 %v1682
        %v1901 = vpop.f32.mrb[0].mxu0
        %v1902 = vadd.f32 0.0, %v1901
        %v1903 = vpop.f32.mrb[0].mxu0
        %1904 = vmatprep.mubr.f32.mxu0 0.0
        %1905 = vmatmul.mubr.f32.gmra.mrb[0].mxu0 %v1685
        %v1906 = vpop.f32.mrb[0].mxu0
        %v1907 = vadd.f32 0.0, %v1906
        %v1908 = vpop.f32.mrb[0].mxu0
        %1909 = vmatprep.mubr.f32.mxu0 0.0
        %1910 = vmatmul.mubr.f32.gmra.mrb[0].mxu0 %v1688
        %v1911 = vpop.f32.mrb[0].mxu0
        %v1912 = vadd.f32 0.0, %v1911
        %v1913 = vpop.f32.mrb[0].mxu0
        %1914 = vdwg.mxu0
        %v1916 = vsel %vm905, %v1521, 0
        %v1919 = vsel %vm905, %v1522, 0
        %v1922 = vsel %vm905, %v1523, 0
        %v1925 = vsel %vm905, %v1524, 0
        %v1928 = vsel %vm905, %v1525, 0
        %v1931 = vsel %vm905, %v1526, 0
        %v1934 = vsel %vm905, %v1527, 0
        %v1937 = vsel %vm905, %v1528, 0
        %v1940 = vsel %vm905, %v1529, 0
        %v1943 = vsel %vm905, %v1530, 0
        %v1946 = vsel %vm905, %v1531, 0
        %v1949 = vsel %vm905, %v1532, 0
        %v1952 = vsel %vm905, %v1533, 0
        %v1955 = vsel %vm905, %v1534, 0
        %v1958 = vsel %vm905, %v1535, 0
        %v1961 = vsel %vm905, %v1536, 0
        %v1964 = vsel %vm905, %v1537, 0
        %v1967 = vsel %vm905, %v1538, 0
        %v1970 = vsel %vm905, %v1539, 0
        %v1973 = vsel %vm905, %v1540, 0
        %v1976 = vsel %vm905, %v1541, 0
        %v1979 = vsel %vm905, %v1542, 0
        %v1982 = vsel %vm905, %v1543, 0
        %v1985 = vsel %vm905, %v1544, 0
        %v1988 = vsel %vm905, %v1545, 0
        %v1991 = vsel %vm905, %v1546, 0
        %v1994 = vsel %vm905, %v1547, 0
        %v1997 = vsel %vm905, %v1548, 0
        %v2000 = vsel %vm905, %v1549, 0
        %v2003 = vsel %vm905, %v1550, 0
        %v2006 = vsel %vm905, %v1551, 0
        %v2009 = vsel %vm905, %v1552, 0
        %2011 = vmatprep.subr.mxu0 0.0
        %2012 = vmatpush1.msra.mxu0 %v1553
        %2013 = vmatprep.subr.mxu0 0.0
        %2014 = vmatpush1.msra.mxu0 %v1554
        %2015 = vmatprep.subr.mxu0 0.0
        %2016 = vmatpush1.msra.mxu0 %v1555
        %2017 = vmatprep.subr.mxu0 0.0
        %2018 = vmatpush1.msra.mxu0 %v1556
        %2019 = vmatprep.subr.mxu0 0.0
        %2020 = vmatpush1.msra.mxu0 0.0
        %2021 = vmatprep.subr.mxu0 0.0
        %2022 = vmatpush1.msra.mxu0 0.0
        %2023 = vmatprep.subr.mxu0 0.0
        %2024 = vmatpush1.msra.mxu0 0.0
        %2025 = vmatprep.subr.mxu0 0.0
        %2026 = vmatpush1.msra.mxu0 0.0
        %2027 = vmatprep.subr.mxu0 0.0
        %2028 = vmatpush1.msra.mxu0 0.0
        %2029 = vmatprep.subr.mxu0 0.0
        %2030 = vmatpush1.msra.mxu0 0.0
        %2031 = vmatprep.subr.mxu0 0.0
        %2032 = vmatpush1.msra.mxu0 0.0
        %2033 = vmatprep.subr.mxu0 0.0
        %2034 = vmatpush1.msra.mxu0 0.0
        %2035 = vmatprep.subr.mxu0 0.0
        %2036 = vmatpush1.msra.mxu0 0.0
        %2037 = vmatprep.subr.mxu0 0.0
        %2038 = vmatpush1.msra.mxu0 0.0
        %2039 = vmatprep.subr.mxu0 0.0
        %2040 = vmatpush1.msra.mxu0 0.0
        %2041 = vmatprep.subr.mxu0 0.0
        %2042 = vmatpush1.msra.mxu0 0.0
        %2043 = vmatprep.subr.mxu0 0.0
        %2044 = vmatpush1.msra.mxu0 0.0
        %2045 = vmatprep.subr.mxu0 0.0
        %2046 = vmatpush1.msra.mxu0 0.0
        %2047 = vmatprep.subr.mxu0 0.0
        %2048 = vmatpush1.msra.mxu0 0.0
        %2049 = vmatprep.subr.mxu0 0.0
        %2050 = vmatpush1.msra.mxu0 0.0
        %2051 = vmatprep.subr.mxu0 0.0
        %2052 = vmatpush1.msra.mxu0 0.0
        %2053 = vmatprep.subr.mxu0 0.0
        %2054 = vmatpush1.msra.mxu0 0.0
        %2055 = vmatprep.subr.mxu0 0.0
        %2056 = vmatpush1.msra.mxu0 0.0
        %2057 = vmatprep.subr.mxu0 0.0
        %2058 = vmatpush1.msra.mxu0 0.0
        %2059 = vmatprep.subr.mxu0 0.0
        %2060 = vmatpush1.msra.mxu0 0.0
        %2061 = vmatprep.subr.mxu0 0.0
        %2062 = vmatpush1.msra.mxu0 0.0
        %2063 = vmatprep.subr.mxu0 0.0
        %2064 = vmatpush1.msra.mxu0 0.0
        %2065 = vmatprep.subr.mxu0 0.0
        %2066 = vmatpush1.msra.mxu0 0.0
        %2067 = vmatprep.subr.mxu0 0.0
        %2068 = vmatpush1.msra.mxu0 0.0
        %2069 = vmatprep.subr.mxu0 0.0
        %2070 = vmatpush1.msra.mxu0 0.0
        %2071 = vmatprep.subr.mxu0 0.0
        %2072 = vmatpush1.msra.mxu0 0.0
        %2073 = vmatprep.subr.mxu0 0.0
        %2074 = vmatpush1.msra.mxu0 0.0
        %2075 = vmatprep.mubr.f32.mxu0 0.0
        %2076 = vmatmul.mubr.f32.gmra.mrb[0].mxu0 %v1916
        %v2077 = vpop.f32.mrb[0].mxu0
        %v2078 = vadd.f32 %v1757, %v2077
        %v2079 = vpop.f32.mrb[0].mxu0
        %2080 = vmatprep.mubr.f32.mxu0 0.0
        %2081 = vmatmul.mubr.f32.gmra.mrb[0].mxu0 %v1919
        %v2082 = vpop.f32.mrb[0].mxu0
        %v2083 = vadd.f32 %v1762, %v2082
        %v2084 = vpop.f32.mrb[0].mxu0
        %2085 = vmatprep.mubr.f32.mxu0 0.0
        %2086 = vmatmul.mubr.f32.gmra.mrb[0].mxu0 %v1922
        %v2087 = vpop.f32.mrb[0].mxu0
        %v2088 = vadd.f32 %v1767, %v2087
        %v2089 = vpop.f32.mrb[0].mxu0
        %2090 = vmatprep.mubr.f32.mxu0 0.0
        %2091 = vmatmul.mubr.f32.gmra.mrb[0].mxu0 %v1925
        %v2092 = vpop.f32.mrb[0].mxu0
        %v2093 = vadd.f32 %v1772, %v2092
        %v2094 = vpop.f32.mrb[0].mxu0
        %2095 = vmatprep.mubr.f32.mxu0 0.0
        %2096 = vmatmul.mubr.f32.gmra.mrb[0].mxu0 %v1928
        %v2097 = vpop.f32.mrb[0].mxu0
        %v2098 = vadd.f32 %v1777, %v2097
        %v2099 = vpop.f32.mrb[0].mxu0
        %2100 = vmatprep.mubr.f32.mxu0 0.0
        %2101 = vmatmul.mubr.f32.gmra.mrb[0].mxu0 %v1931
        %v2102 = vpop.f32.mrb[0].mxu0
        %v2103 = vadd.f32 %v1782, %v2102
        %v2104 = vpop.f32.mrb[0].mxu0
        %2105 = vmatprep.mubr.f32.mxu0 0.0
        %2106 = vmatmul.mubr.f32.gmra.mrb[0].mxu0 %v1934
        %v2107 = vpop.f32.mrb[0].mxu0
        %v2108 = vadd.f32 %v1787, %v2107
        %v2109 = vpop.f32.mrb[0].mxu0
        %2110 = vmatprep.mubr.f32.mxu0 0.0
        %2111 = vmatmul.mubr.f32.gmra.mrb[0].mxu0 %v1937
        %v2112 = vpop.f32.mrb[0].mxu0
        %v2113 = vadd.f32 %v1792, %v2112
        %v2114 = vpop.f32.mrb[0].mxu0
        %2115 = vmatprep.mubr.f32.mxu0 0.0
        %2116 = vmatmul.mubr.f32.gmra.mrb[0].mxu0 %v1940
        %v2117 = vpop.f32.mrb[0].mxu0
        %v2118 = vadd.f32 %v1797, %v2117
        %v2119 = vpop.f32.mrb[0].mxu0
        %2120 = vmatprep.mubr.f32.mxu0 0.0
        %2121 = vmatmul.mubr.f32.gmra.mrb[0].mxu0 %v1943
        %v2122 = vpop.f32.mrb[0].mxu0
        %v2123 = vadd.f32 %v1802, %v2122
        %v2124 = vpop.f32.mrb[0].mxu0
        %2125 = vmatprep.mubr.f32.mxu0 0.0
        %2126 = vmatmul.mubr.f32.gmra.mrb[0].mxu0 %v1946
        %v2127 = vpop.f32.mrb[0].mxu0
        %v2128 = vadd.f32 %v1807, %v2127
        %v2129 = vpop.f32.mrb[0].mxu0
        %2130 = vmatprep.mubr.f32.mxu0 0.0
        %2131 = vmatmul.mubr.f32.gmra.mrb[0].mxu0 %v1949
        %v2132 = vpop.f32.mrb[0].mxu0
        %v2133 = vadd.f32 %v1812, %v2132
        %v2134 = vpop.f32.mrb[0].mxu0
        %2135 = vmatprep.mubr.f32.mxu0 0.0
        %2136 = vmatmul.mubr.f32.gmra.mrb[0].mxu0 %v1952
        %v2137 = vpop.f32.mrb[0].mxu0
        %v2138 = vadd.f32 %v1817, %v2137
        %v2139 = vpop.f32.mrb[0].mxu0
        %2140 = vmatprep.mubr.f32.mxu0 0.0
        %2141 = vmatmul.mubr.f32.gmra.mrb[0].mxu0 %v1955
        %v2142 = vpop.f32.mrb[0].mxu0
        %v2143 = vadd.f32 %v1822, %v2142
        %v2144 = vpop.f32.mrb[0].mxu0
        %2145 = vmatprep.mubr.f32.mxu0 0.0
        %2146 = vmatmul.mubr.f32.gmra.mrb[0].mxu0 %v1958
        %v2147 = vpop.f32.mrb[0].mxu0
        %v2148 = vadd.f32 %v1827, %v2147
        %v2149 = vpop.f32.mrb[0].mxu0
        %2150 = vmatprep.mubr.f32.mxu0 0.0
        %2151 = vmatmul.mubr.f32.gmra.mrb[0].mxu0 %v1961
        %v2152 = vpop.f32.mrb[0].mxu0
        %v2153 = vadd.f32 %v1832, %v2152
        %v2154 = vpop.f32.mrb[0].mxu0
        %2155 = vmatprep.mubr.f32.mxu0 0.0
        %2156 = vmatmul.mubr.f32.gmra.mrb[0].mxu0 %v1964
        %v2157 = vpop.f32.mrb[0].mxu0
        %v2158 = vadd.f32 %v1837, %v2157
        %v2159 = vpop.f32.mrb[0].mxu0
        %2160 = vmatprep.mubr.f32.mxu0 0.0
        %2161 = vmatmul.mubr.f32.gmra.mrb[0].mxu0 %v1967
        %v2162 = vpop.f32.mrb[0].mxu0
        %v2163 = vadd.f32 %v1842, %v2162
        %v2164 = vpop.f32.mrb[0].mxu0
        %2165 = vmatprep.mubr.f32.mxu0 0.0
        %2166 = vmatmul.mubr.f32.gmra.mrb[0].mxu0 %v1970
        %v2167 = vpop.f32.mrb[0].mxu0
        %v2168 = vadd.f32 %v1847, %v2167
        %v2169 = vpop.f32.mrb[0].mxu0
        %2170 = vmatprep.mubr.f32.mxu0 0.0
        %2171 = vmatmul.mubr.f32.gmra.mrb[0].mxu0 %v1973
        %v2172 = vpop.f32.mrb[0].mxu0
        %v2173 = vadd.f32 %v1852, %v2172
        %v2174 = vpop.f32.mrb[0].mxu0
        %2175 = vmatprep.mubr.f32.mxu0 0.0
        %2176 = vmatmul.mubr.f32.gmra.mrb[0].mxu0 %v1976
        %v2177 = vpop.f32.mrb[0].mxu0
        %v2178 = vadd.f32 %v1857, %v2177
        %v2179 = vpop.f32.mrb[0].mxu0
        %2180 = vmatprep.mubr.f32.mxu0 0.0
        %2181 = vmatmul.mubr.f32.gmra.mrb[0].mxu0 %v1979
        %v2182 = vpop.f32.mrb[0].mxu0
        %v2183 = vadd.f32 %v1862, %v2182
        %v2184 = vpop.f32.mrb[0].mxu0
        %2185 = vmatprep.mubr.f32.mxu0 0.0
        %2186 = vmatmul.mubr.f32.gmra.mrb[0].mxu0 %v1982
        %v2187 = vpop.f32.mrb[0].mxu0
        %v2188 = vadd.f32 %v1867, %v2187
        %v2189 = vpop.f32.mrb[0].mxu0
        %2190 = vmatprep.mubr.f32.mxu0 0.0
        %2191 = vmatmul.mubr.f32.gmra.mrb[0].mxu0 %v1985
        %v2192 = vpop.f32.mrb[0].mxu0
        %v2193 = vadd.f32 %v1872, %v2192
        %v2194 = vpop.f32.mrb[0].mxu0
        %2195 = vmatprep.mubr.f32.mxu0 0.0
        %2196 = vmatmul.mubr.f32.gmra.mrb[0].mxu0 %v1988
        %v2197 = vpop.f32.mrb[0].mxu0
        %v2198 = vadd.f32 %v1877, %v2197
        %v2199 = vpop.f32.mrb[0].mxu0
        %2200 = vmatprep.mubr.f32.mxu0 0.0
        %2201 = vmatmul.mubr.f32.gmra.mrb[0].mxu0 %v1991
        %v2202 = vpop.f32.mrb[0].mxu0
        %v2203 = vadd.f32 %v1882, %v2202
        %v2204 = vpop.f32.mrb[0].mxu0
        %2205 = vmatprep.mubr.f32.mxu0 0.0
        %2206 = vmatmul.mubr.f32.gmra.mrb[0].mxu0 %v1994
        %v2207 = vpop.f32.mrb[0].mxu0
        %v2208 = vadd.f32 %v1887, %v2207
        %v2209 = vpop.f32.mrb[0].mxu0
        %2210 = vmatprep.mubr.f32.mxu0 0.0
        %2211 = vmatmul.mubr.f32.gmra.mrb[0].mxu0 %v1997
        %v2212 = vpop.f32.mrb[0].mxu0
        %v2213 = vadd.f32 %v1892, %v2212
        %v2214 = vpop.f32.mrb[0].mxu0
        %2215 = vmatprep.mubr.f32.mxu0 0.0
        %2216 = vmatmul.mubr.f32.gmra.mrb[0].mxu0 %v2000
        %v2217 = vpop.f32.mrb[0].mxu0
        %v2218 = vadd.f32 %v1897, %v2217
        %v2219 = vpop.f32.mrb[0].mxu0
        %2220 = vmatprep.mubr.f32.mxu0 0.0
        %2221 = vmatmul.mubr.f32.gmra.mrb[0].mxu0 %v2003
        %v2222 = vpop.f32.mrb[0].mxu0
        %v2223 = vadd.f32 %v1902, %v2222
        %v2224 = vpop.f32.mrb[0].mxu0
        %2225 = vmatprep.mubr.f32.mxu0 0.0
        %2226 = vmatmul.mubr.f32.gmra.mrb[0].mxu0 %v2006
        %v2227 = vpop.f32.mrb[0].mxu0
        %v2228 = vadd.f32 %v1907, %v2227
        %v2229 = vpop.f32.mrb[0].mxu0
        %2230 = vmatprep.mubr.f32.mxu0 0.0
        %2231 = vmatmul.mubr.f32.gmra.mrb[0].mxu0 %v2009
        %v2232 = vpop.f32.mrb[0].mxu0
        %v2233 = vadd.f32 %v1912, %v2232
        %v2234 = vpop.f32.mrb[0].mxu0
        %2235 = vdwg.mxu0
        %v2236 = vld [vmem:[#allocation2 + $0x9] sm:$0xff]
        %v2237 = vld [vmem:[#allocation2 + $0x11] sm:$0xff]
        %v2238 = vld [vmem:[#allocation2 + $0x19] sm:$0xff]
        %v2239 = vld [vmem:[#allocation2 + $0x21] sm:$0xff]
        %v2240 = vld [vmem:[#allocation2 + $0x29] sm:$0xff]
        %v2241 = vld [vmem:[#allocation2 + $0x31] sm:$0xff]
        %v2242 = vld [vmem:[#allocation2 + $0x39] sm:$0xff]
        %v2243 = vld [vmem:[#allocation2 + $0x41] sm:$0xff]
        %v2244 = vld [vmem:[#allocation2 + $0x49] sm:$0xff]
        %v2245 = vld [vmem:[#allocation2 + $0x51] sm:$0xff]
        %v2246 = vld [vmem:[#allocation2 + $0x59] sm:$0xff]
        %v2247 = vld [vmem:[#allocation2 + $0x61] sm:$0xff]
        %v2248 = vld [vmem:[#allocation2 + $0x69] sm:$0xff]
        %v2249 = vld [vmem:[#allocation2 + $0x71] sm:$0xff]
        %v2250 = vld [vmem:[#allocation2 + $0x79] sm:$0xff]
        %v2251 = vld [vmem:[#allocation2 + $0x81] sm:$0xff]
        %v2252 = vld [vmem:[#allocation2 + $0x89] sm:$0xff]
        %v2253 = vld [vmem:[#allocation2 + $0x91] sm:$0xff]
        %v2254 = vld [vmem:[#allocation2 + $0x99] sm:$0xff]
        %v2255 = vld [vmem:[#allocation2 + $0xa1] sm:$0xff]
        %v2256 = vld [vmem:[#allocation2 + $0xa9] sm:$0xff]
        %v2257 = vld [vmem:[#allocation2 + $0xb1] sm:$0xff]
        %v2258 = vld [vmem:[#allocation2 + $0xb9] sm:$0xff]
        %v2259 = vld [vmem:[#allocation2 + $0xc1] sm:$0xff]
        %v2260 = vld [vmem:[#allocation2 + $0xc9] sm:$0xff]
        %v2261 = vld [vmem:[#allocation2 + $0xd1] sm:$0xff]
        %v2262 = vld [vmem:[#allocation2 + $0xd9] sm:$0xff]
        %v2263 = vld [vmem:[#allocation2 + $0xe1] sm:$0xff]
        %v2264 = vld [vmem:[#allocation2 + $0xe9] sm:$0xff]
        %v2265 = vld [vmem:[#allocation2 + $0xf1] sm:$0xff]
        %v2266 = vld [vmem:[#allocation2 + $0xf9] sm:$0xff]
        %v2267 = vld [vmem:[#allocation2 + $0x101] sm:$0xff]
        %v2268 = vsel %vm1393, 1, 0
        %v2269 = vsel %vm1394, 1, 0
        %v2270 = vsel %vm1395, 1, 0
        %v2271 = vsel %vm1396, 1, 0
        %v2272 = vsel %vm1397, 1, 0
        %v2273 = vsel %vm1398, 1, 0
        %v2274 = vsel %vm1399, 1, 0
        %v2275 = vsel %vm1400, 1, 0
        %v2276 = vsel %vm1401, 1, 0
        %v2277 = vsel %vm1402, 1, 0
        %v2278 = vsel %vm1403, 1, 0
        %v2279 = vsel %vm1404, 1, 0
        %v2280 = vsel %vm1405, 1, 0
        %v2281 = vsel %vm1406, 1, 0
        %v2282 = vsel %vm1407, 1, 0
        %v2283 = vsel %vm1408, 1, 0
        %v2284 = vsel %vm1409, 1, 0
        %v2285 = vsel %vm1410, 1, 0
        %v2286 = vsel %vm1411, 1, 0
        %v2287 = vsel %vm1412, 1, 0
        %v2288 = vsel %vm1413, 1, 0
        %v2289 = vsel %vm1414, 1, 0
        %v2290 = vsel %vm1415, 1, 0
        %v2291 = vsel %vm1416, 1, 0
        %v2292 = vsel %vm1417, 1, 0
        %v2293 = vsel %vm1418, 1, 0
        %v2294 = vsel %vm1419, 1, 0
        %v2295 = vsel %vm1420, 1, 0
        %v2296 = vsel %vm1421, 1, 0
        %v2297 = vsel %vm1422, 1, 0
        %v2298 = vsel %vm1423, 1, 0
        %v2299 = vsel %vm1424, 1, 0
        %vm2300 = vcmp.eq.s32.totalorder %v2268, 1
        %vm2301 = vcmp.eq.s32.totalorder %v2269, 1
        %vm2302 = vcmp.eq.s32.totalorder %v2270, 1
        %vm2303 = vcmp.eq.s32.totalorder %v2271, 1
        %vm2304 = vcmp.eq.s32.totalorder %v2272, 1
        %vm2305 = vcmp.eq.s32.totalorder %v2273, 1
        %vm2306 = vcmp.eq.s32.totalorder %v2274, 1
        %vm2307 = vcmp.eq.s32.totalorder %v2275, 1
        %vm2308 = vcmp.eq.s32.totalorder %v2276, 1
        %vm2309 = vcmp.eq.s32.totalorder %v2277, 1
        %vm2310 = vcmp.eq.s32.totalorder %v2278, 1
        %vm2311 = vcmp.eq.s32.totalorder %v2279, 1
        %vm2312 = vcmp.eq.s32.totalorder %v2280, 1
        %vm2313 = vcmp.eq.s32.totalorder %v2281, 1
        %vm2314 = vcmp.eq.s32.totalorder %v2282, 1
        %vm2315 = vcmp.eq.s32.totalorder %v2283, 1
        %vm2316 = vcmp.eq.s32.totalorder %v2284, 1
        %vm2317 = vcmp.eq.s32.totalorder %v2285, 1
        %vm2318 = vcmp.eq.s32.totalorder %v2286, 1
        %vm2319 = vcmp.eq.s32.totalorder %v2287, 1
        %vm2320 = vcmp.eq.s32.totalorder %v2288, 1
        %vm2321 = vcmp.eq.s32.totalorder %v2289, 1
        %vm2322 = vcmp.eq.s32.totalorder %v2290, 1
        %vm2323 = vcmp.eq.s32.totalorder %v2291, 1
        %vm2324 = vcmp.eq.s32.totalorder %v2292, 1
        %vm2325 = vcmp.eq.s32.totalorder %v2293, 1
        %vm2326 = vcmp.eq.s32.totalorder %v2294, 1
        %vm2327 = vcmp.eq.s32.totalorder %v2295, 1
        %vm2328 = vcmp.eq.s32.totalorder %v2296, 1
        %vm2329 = vcmp.eq.s32.totalorder %v2297, 1
        %vm2330 = vcmp.eq.s32.totalorder %v2298, 1
        %vm2331 = vcmp.eq.s32.totalorder %v2299, 1
        %v2332 = vsel %vm2300, 0.0, %v2236
        %v2333 = vsel %vm2301, 0.0, %v2237
        %v2334 = vsel %vm2302, 0.0, %v2238
        %v2335 = vsel %vm2303, 0.0, %v2239
        %v2336 = vsel %vm2304, 0.0, %v2240
        %v2337 = vsel %vm2305, 0.0, %v2241
        %v2338 = vsel %vm2306, 0.0, %v2242
        %v2339 = vsel %vm2307, 0.0, %v2243
        %v2340 = vsel %vm2308, 0.0, %v2244
        %v2341 = vsel %vm2309, 0.0, %v2245
        %v2342 = vsel %vm2310, 0.0, %v2246
        %v2343 = vsel %vm2311, 0.0, %v2247
        %v2344 = vsel %vm2312, 0.0, %v2248
        %v2345 = vsel %vm2313, 0.0, %v2249
        %v2346 = vsel %vm2314, 0.0, %v2250
        %v2347 = vsel %vm2315, 0.0, %v2251
        %v2348 = vsel %vm2316, 0.0, %v2252
        %v2349 = vsel %vm2317, 0.0, %v2253
        %v2350 = vsel %vm2318, 0.0, %v2254
        %v2351 = vsel %vm2319, 0.0, %v2255
        %v2352 = vsel %vm2320, 0.0, %v2256
        %v2353 = vsel %vm2321, 0.0, %v2257
        %v2354 = vsel %vm2322, 0.0, %v2258
        %v2355 = vsel %vm2323, 0.0, %v2259
        %v2356 = vsel %vm2324, 0.0, %v2260
        %v2357 = vsel %vm2325, 0.0, %v2261
        %v2358 = vsel %vm2326, 0.0, %v2262
        %v2359 = vsel %vm2327, 0.0, %v2263
        %v2360 = vsel %vm2328, 0.0, %v2264
        %v2361 = vsel %vm2329, 0.0, %v2265
        %v2362 = vsel %vm2330, 0.0, %v2266
        %v2363 = vsel %vm2331, 0.0, %v2267
        %s2364 = scalar_lea.vmem %s2, 64
        %v2365 = vld [vmem:[%s2364] sm:$0xff]
        %v2366 = vld [vmem:[%s2364 + $0x8] sm:$0xff]
        %v2367 = vld [vmem:[%s2364 + $0x10] sm:$0xff]
        %v2368 = vld [vmem:[%s2364 + $0x18] sm:$0xff]
        %v2370 = vsel %vm905, %v2332, 0
        %v2373 = vsel %vm905, %v2333, 0
        %v2376 = vsel %vm905, %v2334, 0
        %v2379 = vsel %vm905, %v2335, 0
        %v2382 = vsel %vm905, %v2336, 0
        %v2385 = vsel %vm905, %v2337, 0
        %v2388 = vsel %vm905, %v2338, 0
        %v2391 = vsel %vm905, %v2339, 0
        %v2394 = vsel %vm905, %v2340, 0
        %v2397 = vsel %vm905, %v2341, 0
        %v2400 = vsel %vm905, %v2342, 0
        %v2403 = vsel %vm905, %v2343, 0
        %v2406 = vsel %vm905, %v2344, 0
        %v2409 = vsel %vm905, %v2345, 0
        %v2412 = vsel %vm905, %v2346, 0
        %v2415 = vsel %vm905, %v2347, 0
        %v2418 = vsel %vm905, %v2348, 0
        %v2421 = vsel %vm905, %v2349, 0
        %v2424 = vsel %vm905, %v2350, 0
        %v2427 = vsel %vm905, %v2351, 0
        %v2430 = vsel %vm905, %v2352, 0
        %v2433 = vsel %vm905, %v2353, 0
        %v2436 = vsel %vm905, %v2354, 0
        %v2439 = vsel %vm905, %v2355, 0
        %v2442 = vsel %vm905, %v2356, 0
        %v2445 = vsel %vm905, %v2357, 0
        %v2448 = vsel %vm905, %v2358, 0
        %v2451 = vsel %vm905, %v2359, 0
        %v2454 = vsel %vm905, %v2360, 0
        %v2457 = vsel %vm905, %v2361, 0
        %v2460 = vsel %vm905, %v2362, 0
        %v2463 = vsel %vm905, %v2363, 0
        %2465 = vmatprep.subr.mxu0 0.0
        %2466 = vmatpush1.msra.mxu0 %v2365
        %2467 = vmatprep.subr.mxu0 0.0
        %2468 = vmatpush1.msra.mxu0 %v2366
        %2469 = vmatprep.subr.mxu0 0.0
        %2470 = vmatpush1.msra.mxu0 %v2367
        %2471 = vmatprep.subr.mxu0 0.0
        %2472 = vmatpush1.msra.mxu0 %v2368
        %2473 = vmatprep.subr.mxu0 0.0
        %2474 = vmatpush1.msra.mxu0 0.0
        %2475 = vmatprep.subr.mxu0 0.0
        %2476 = vmatpush1.msra.mxu0 0.0
        %2477 = vmatprep.subr.mxu0 0.0
        %2478 = vmatpush1.msra.mxu0 0.0
        %2479 = vmatprep.subr.mxu0 0.0
        %2480 = vmatpush1.msra.mxu0 0.0
        %2481 = vmatprep.subr.mxu0 0.0
        %2482 = vmatpush1.msra.mxu0 0.0
        %2483 = vmatprep.subr.mxu0 0.0
        %2484 = vmatpush1.msra.mxu0 0.0
        %2485 = vmatprep.subr.mxu0 0.0
        %2486 = vmatpush1.msra.mxu0 0.0
        %2487 = vmatprep.subr.mxu0 0.0
        %2488 = vmatpush1.msra.mxu0 0.0
        %2489 = vmatprep.subr.mxu0 0.0
        %2490 = vmatpush1.msra.mxu0 0.0
        %2491 = vmatprep.subr.mxu0 0.0
        %2492 = vmatpush1.msra.mxu0 0.0
        %2493 = vmatprep.subr.mxu0 0.0
        %2494 = vmatpush1.msra.mxu0 0.0
        %2495 = vmatprep.subr.mxu0 0.0
        %2496 = vmatpush1.msra.mxu0 0.0
        %2497 = vmatprep.subr.mxu0 0.0
        %2498 = vmatpush1.msra.mxu0 0.0
        %2499 = vmatprep.subr.mxu0 0.0
        %2500 = vmatpush1.msra.mxu0 0.0
        %2501 = vmatprep.subr.mxu0 0.0
        %2502 = vmatpush1.msra.mxu0 0.0
        %2503 = vmatprep.subr.mxu0 0.0
        %2504 = vmatpush1.msra.mxu0 0.0
        %2505 = vmatprep.subr.mxu0 0.0
        %2506 = vmatpush1.msra.mxu0 0.0
        %2507 = vmatprep.subr.mxu0 0.0
        %2508 = vmatpush1.msra.mxu0 0.0
        %2509 = vmatprep.subr.mxu0 0.0
        %2510 = vmatpush1.msra.mxu0 0.0
        %2511 = vmatprep.subr.mxu0 0.0
        %2512 = vmatpush1.msra.mxu0 0.0
        %2513 = vmatprep.subr.mxu0 0.0
        %2514 = vmatpush1.msra.mxu0 0.0
        %2515 = vmatprep.subr.mxu0 0.0
        %2516 = vmatpush1.msra.mxu0 0.0
        %2517 = vmatprep.subr.mxu0 0.0
        %2518 = vmatpush1.msra.mxu0 0.0
        %2519 = vmatprep.subr.mxu0 0.0
        %2520 = vmatpush1.msra.mxu0 0.0
        %2521 = vmatprep.subr.mxu0 0.0
        %2522 = vmatpush1.msra.mxu0 0.0
        %2523 = vmatprep.subr.mxu0 0.0
        %2524 = vmatpush1.msra.mxu0 0.0
        %2525 = vmatprep.subr.mxu0 0.0
        %2526 = vmatpush1.msra.mxu0 0.0
        %2527 = vmatprep.subr.mxu0 0.0
        %2528 = vmatpush1.msra.mxu0 0.0
        %2529 = vmatprep.mubr.f32.mxu0 0.0
        %2530 = vmatmul.mubr.f32.gmra.mrb[0].mxu0 %v2370
        %v2531 = vpop.f32.mrb[0].mxu0
        %v2532 = vadd.f32 0.0, %v2531
        %v2533 = vpop.f32.mrb[0].mxu0
        %2534 = vmatprep.mubr.f32.mxu0 0.0
        %2535 = vmatmul.mubr.f32.gmra.mrb[0].mxu0 %v2373
        %v2536 = vpop.f32.mrb[0].mxu0
        %v2537 = vadd.f32 0.0, %v2536
        %v2538 = vpop.f32.mrb[0].mxu0
        %2539 = vmatprep.mubr.f32.mxu0 0.0
        %2540 = vmatmul.mubr.f32.gmra.mrb[0].mxu0 %v2376
        %v2541 = vpop.f32.mrb[0].mxu0
        %v2542 = vadd.f32 0.0, %v2541
        %v2543 = vpop.f32.mrb[0].mxu0
        %2544 = vmatprep.mubr.f32.mxu0 0.0
        %2545 = vmatmul.mubr.f32.gmra.mrb[0].mxu0 %v2379
        %v2546 = vpop.f32.mrb[0].mxu0
        %v2547 = vadd.f32 0.0, %v2546
        %v2548 = vpop.f32.mrb[0].mxu0
        %2549 = vmatprep.mubr.f32.mxu0 0.0
        %2550 = vmatmul.mubr.f32.gmra.mrb[0].mxu0 %v2382
        %v2551 = vpop.f32.mrb[0].mxu0
        %v2552 = vadd.f32 0.0, %v2551
        %v2553 = vpop.f32.mrb[0].mxu0
        %2554 = vmatprep.mubr.f32.mxu0 0.0
        %2555 = vmatmul.mubr.f32.gmra.mrb[0].mxu0 %v2385
        %v2556 = vpop.f32.mrb[0].mxu0
        %v2557 = vadd.f32 0.0, %v2556
        %v2558 = vpop.f32.mrb[0].mxu0
        %2559 = vmatprep.mubr.f32.mxu0 0.0
        %2560 = vmatmul.mubr.f32.gmra.mrb[0].mxu0 %v2388
        %v2561 = vpop.f32.mrb[0].mxu0
        %v2562 = vadd.f32 0.0, %v2561
        %v2563 = vpop.f32.mrb[0].mxu0
        %2564 = vmatprep.mubr.f32.mxu0 0.0
        %2565 = vmatmul.mubr.f32.gmra.mrb[0].mxu0 %v2391
        %v2566 = vpop.f32.mrb[0].mxu0
        %v2567 = vadd.f32 0.0, %v2566
        %v2568 = vpop.f32.mrb[0].mxu0
        %2569 = vmatprep.mubr.f32.mxu0 0.0
        %2570 = vmatmul.mubr.f32.gmra.mrb[0].mxu0 %v2394
        %v2571 = vpop.f32.mrb[0].mxu0
        %v2572 = vadd.f32 0.0, %v2571
        %v2573 = vpop.f32.mrb[0].mxu0
        %2574 = vmatprep.mubr.f32.mxu0 0.0
        %2575 = vmatmul.mubr.f32.gmra.mrb[0].mxu0 %v2397
        %v2576 = vpop.f32.mrb[0].mxu0
        %v2577 = vadd.f32 0.0, %v2576
        %v2578 = vpop.f32.mrb[0].mxu0
        %2579 = vmatprep.mubr.f32.mxu0 0.0
        %2580 = vmatmul.mubr.f32.gmra.mrb[0].mxu0 %v2400
        %v2581 = vpop.f32.mrb[0].mxu0
        %v2582 = vadd.f32 0.0, %v2581
        %v2583 = vpop.f32.mrb[0].mxu0
        %2584 = vmatprep.mubr.f32.mxu0 0.0
        %2585 = vmatmul.mubr.f32.gmra.mrb[0].mxu0 %v2403
        %v2586 = vpop.f32.mrb[0].mxu0
        %v2587 = vadd.f32 0.0, %v2586
        %v2588 = vpop.f32.mrb[0].mxu0
        %2589 = vmatprep.mubr.f32.mxu0 0.0
        %2590 = vmatmul.mubr.f32.gmra.mrb[0].mxu0 %v2406
        %v2591 = vpop.f32.mrb[0].mxu0
        %v2592 = vadd.f32 0.0, %v2591
        %v2593 = vpop.f32.mrb[0].mxu0
        %2594 = vmatprep.mubr.f32.mxu0 0.0
        %2595 = vmatmul.mubr.f32.gmra.mrb[0].mxu0 %v2409
        %v2596 = vpop.f32.mrb[0].mxu0
        %v2597 = vadd.f32 0.0, %v2596
        %v2598 = vpop.f32.mrb[0].mxu0
        %2599 = vmatprep.mubr.f32.mxu0 0.0
        %2600 = vmatmul.mubr.f32.gmra.mrb[0].mxu0 %v2412
        %v2601 = vpop.f32.mrb[0].mxu0
        %v2602 = vadd.f32 0.0, %v2601
        %v2603 = vpop.f32.mrb[0].mxu0
        %2604 = vmatprep.mubr.f32.mxu0 0.0
        %2605 = vmatmul.mubr.f32.gmra.mrb[0].mxu0 %v2415
        %v2606 = vpop.f32.mrb[0].mxu0
        %v2607 = vadd.f32 0.0, %v2606
        %v2608 = vpop.f32.mrb[0].mxu0
        %2609 = vmatprep.mubr.f32.mxu0 0.0
        %2610 = vmatmul.mubr.f32.gmra.mrb[0].mxu0 %v2418
        %v2611 = vpop.f32.mrb[0].mxu0
        %v2612 = vadd.f32 0.0, %v2611
        %v2613 = vpop.f32.mrb[0].mxu0
        %2614 = vmatprep.mubr.f32.mxu0 0.0
        %2615 = vmatmul.mubr.f32.gmra.mrb[0].mxu0 %v2421
        %v2616 = vpop.f32.mrb[0].mxu0
        %v2617 = vadd.f32 0.0, %v2616
        %v2618 = vpop.f32.mrb[0].mxu0
        %2619 = vmatprep.mubr.f32.mxu0 0.0
        %2620 = vmatmul.mubr.f32.gmra.mrb[0].mxu0 %v2424
        %v2621 = vpop.f32.mrb[0].mxu0
        %v2622 = vadd.f32 0.0, %v2621
        %v2623 = vpop.f32.mrb[0].mxu0
        %2624 = vmatprep.mubr.f32.mxu0 0.0
        %2625 = vmatmul.mubr.f32.gmra.mrb[0].mxu0 %v2427
        %v2626 = vpop.f32.mrb[0].mxu0
        %v2627 = vadd.f32 0.0, %v2626
        %v2628 = vpop.f32.mrb[0].mxu0
        %2629 = vmatprep.mubr.f32.mxu0 0.0
        %2630 = vmatmul.mubr.f32.gmra.mrb[0].mxu0 %v2430
        %v2631 = vpop.f32.mrb[0].mxu0
        %v2632 = vadd.f32 0.0, %v2631
        %v2633 = vpop.f32.mrb[0].mxu0
        %2634 = vmatprep.mubr.f32.mxu0 0.0
        %2635 = vmatmul.mubr.f32.gmra.mrb[0].mxu0 %v2433
        %v2636 = vpop.f32.mrb[0].mxu0
        %v2637 = vadd.f32 0.0, %v2636
        %v2638 = vpop.f32.mrb[0].mxu0
        %2639 = vmatprep.mubr.f32.mxu0 0.0
        %2640 = vmatmul.mubr.f32.gmra.mrb[0].mxu0 %v2436
        %v2641 = vpop.f32.mrb[0].mxu0
        %v2642 = vadd.f32 0.0, %v2641
        %v2643 = vpop.f32.mrb[0].mxu0
        %2644 = vmatprep.mubr.f32.mxu0 0.0
        %2645 = vmatmul.mubr.f32.gmra.mrb[0].mxu0 %v2439
        %v2646 = vpop.f32.mrb[0].mxu0
        %v2647 = vadd.f32 0.0, %v2646
        %v2648 = vpop.f32.mrb[0].mxu0
        %2649 = vmatprep.mubr.f32.mxu0 0.0
        %2650 = vmatmul.mubr.f32.gmra.mrb[0].mxu0 %v2442
        %v2651 = vpop.f32.mrb[0].mxu0
        %v2652 = vadd.f32 0.0, %v2651
        %v2653 = vpop.f32.mrb[0].mxu0
        %2654 = vmatprep.mubr.f32.mxu0 0.0
        %2655 = vmatmul.mubr.f32.gmra.mrb[0].mxu0 %v2445
        %v2656 = vpop.f32.mrb[0].mxu0
        %v2657 = vadd.f32 0.0, %v2656
        %v2658 = vpop.f32.mrb[0].mxu0
        %2659 = vmatprep.mubr.f32.mxu0 0.0
        %2660 = vmatmul.mubr.f32.gmra.mrb[0].mxu0 %v2448
        %v2661 = vpop.f32.mrb[0].mxu0
        %v2662 = vadd.f32 0.0, %v2661
        %v2663 = vpop.f32.mrb[0].mxu0
        %2664 = vmatprep.mubr.f32.mxu0 0.0
        %2665 = vmatmul.mubr.f32.gmra.mrb[0].mxu0 %v2451
        %v2666 = vpop.f32.mrb[0].mxu0
        %v2667 = vadd.f32 0.0, %v2666
        %v2668 = vpop.f32.mrb[0].mxu0
        %2669 = vmatprep.mubr.f32.mxu0 0.0
        %2670 = vmatmul.mubr.f32.gmra.mrb[0].mxu0 %v2454
        %v2671 = vpop.f32.mrb[0].mxu0
        %v2672 = vadd.f32 0.0, %v2671
        %v2673 = vpop.f32.mrb[0].mxu0
        %2674 = vmatprep.mubr.f32.mxu0 0.0
        %2675 = vmatmul.mubr.f32.gmra.mrb[0].mxu0 %v2457
        %v2676 = vpop.f32.mrb[0].mxu0
        %v2677 = vadd.f32 0.0, %v2676
        %v2678 = vpop.f32.mrb[0].mxu0
        %2679 = vmatprep.mubr.f32.mxu0 0.0
        %2680 = vmatmul.mubr.f32.gmra.mrb[0].mxu0 %v2460
        %v2681 = vpop.f32.mrb[0].mxu0
        %v2682 = vadd.f32 0.0, %v2681
        %v2683 = vpop.f32.mrb[0].mxu0
        %2684 = vmatprep.mubr.f32.mxu0 0.0
        %2685 = vmatmul.mubr.f32.gmra.mrb[0].mxu0 %v2463
        %v2686 = vpop.f32.mrb[0].mxu0
        %v2687 = vadd.f32 0.0, %v2686
        %v2688 = vpop.f32.mrb[0].mxu0
        %2689 = vdwg.mxu0
        %v2690 = vadd.f32 %v2078, %v2532
        %v2691 = vadd.f32 %v2083, %v2537
        %v2692 = vadd.f32 %v2088, %v2542
        %v2693 = vadd.f32 %v2093, %v2547
        %v2694 = vadd.f32 %v2098, %v2552
        %v2695 = vadd.f32 %v2103, %v2557
        %v2696 = vadd.f32 %v2108, %v2562
        %v2697 = vadd.f32 %v2113, %v2567
        %v2698 = vadd.f32 %v2118, %v2572
        %v2699 = vadd.f32 %v2123, %v2577
        %v2700 = vadd.f32 %v2128, %v2582
        %v2701 = vadd.f32 %v2133, %v2587
        %v2702 = vadd.f32 %v2138, %v2592
        %v2703 = vadd.f32 %v2143, %v2597
        %v2704 = vadd.f32 %v2148, %v2602
        %v2705 = vadd.f32 %v2153, %v2607
        %v2706 = vadd.f32 %v2158, %v2612
        %v2707 = vadd.f32 %v2163, %v2617
        %v2708 = vadd.f32 %v2168, %v2622
        %v2709 = vadd.f32 %v2173, %v2627
        %v2710 = vadd.f32 %v2178, %v2632
        %v2711 = vadd.f32 %v2183, %v2637
        %v2712 = vadd.f32 %v2188, %v2642
        %v2713 = vadd.f32 %v2193, %v2647
        %v2714 = vadd.f32 %v2198, %v2652
        %v2715 = vadd.f32 %v2203, %v2657
        %v2716 = vadd.f32 %v2208, %v2662
        %v2717 = vadd.f32 %v2213, %v2667
        %v2718 = vadd.f32 %v2218, %v2672
        %v2719 = vadd.f32 %v2223, %v2677
        %v2720 = vadd.f32 %v2228, %v2682
        %v2721 = vadd.f32 %v2233, %v2687
        %v2722 = vld [vmem:[#allocation2 + $0x17] sm:$0xff]
        %v2723 = vld [vmem:[#allocation2 + $0x1f] sm:$0xff]
        %v2724 = vld [vmem:[#allocation2 + $0x27] sm:$0xff]
        %v2725 = vld [vmem:[#allocation2 + $0x2f] sm:$0xff]
        %v2726 = vld [vmem:[#allocation2 + $0x37] sm:$0xff]
        %v2727 = vld [vmem:[#allocation2 + $0x3f] sm:$0xff]
        %v2728 = vld [vmem:[#allocation2 + $0x47] sm:$0xff]
        %v2729 = vld [vmem:[#allocation2 + $0x4f] sm:$0xff]
        %v2730 = vld [vmem:[#allocation2 + $0x57] sm:$0xff]
        %v2731 = vld [vmem:[#allocation2 + $0x5f] sm:$0xff]
        %v2732 = vld [vmem:[#allocation2 + $0x67] sm:$0xff]
        %v2733 = vld [vmem:[#allocation2 + $0x6f] sm:$0xff]
        %v2734 = vld [vmem:[#allocation2 + $0x77] sm:$0xff]
        %v2735 = vld [vmem:[#allocation2 + $0x7f] sm:$0xff]
        %v2736 = vld [vmem:[#allocation2 + $0x87] sm:$0xff]
        %v2737 = vld [vmem:[#allocation2 + $0x8f] sm:$0xff]
        %v2738 = vld [vmem:[#allocation2 + $0x97] sm:$0xff]
        %v2739 = vld [vmem:[#allocation2 + $0x9f] sm:$0xff]
        %v2740 = vld [vmem:[#allocation2 + $0xa7] sm:$0xff]
        %v2741 = vld [vmem:[#allocation2 + $0xaf] sm:$0xff]
        %v2742 = vld [vmem:[#allocation2 + $0xb7] sm:$0xff]
        %v2743 = vld [vmem:[#allocation2 + $0xbf] sm:$0xff]
        %v2744 = vld [vmem:[#allocation2 + $0xc7] sm:$0xff]
        %v2745 = vld [vmem:[#allocation2 + $0xcf] sm:$0xff]
        %v2746 = vld [vmem:[#allocation2 + $0xd7] sm:$0xff]
        %v2747 = vld [vmem:[#allocation2 + $0xdf] sm:$0xff]
        %v2748 = vld [vmem:[#allocation2 + $0xe7] sm:$0xff]
        %v2749 = vld [vmem:[#allocation2 + $0xef] sm:$0xff]
        %v2750 = vld [vmem:[#allocation2 + $0xf7] sm:$0xff]
        %v2751 = vld [vmem:[#allocation2 + $0xff] sm:$0xff]
        %v2752 = vld [vmem:[#allocation2 + $0x107] sm:$0xff]
        %v2753 = vld [vmem:[#allocation2 + $0x10f] sm:$0xff]
        %v2754 = vsel %vm1489, 0.0, %v2722
        %v2755 = vsel %vm1490, 0.0, %v2723
        %v2756 = vsel %vm1491, 0.0, %v2724
        %v2757 = vsel %vm1492, 0.0, %v2725
        %v2758 = vsel %vm1493, 0.0, %v2726
        %v2759 = vsel %vm1494, 0.0, %v2727
        %v2760 = vsel %vm1495, 0.0, %v2728
        %v2761 = vsel %vm1496, 0.0, %v2729
        %v2762 = vsel %vm1497, 0.0, %v2730
        %v2763 = vsel %vm1498, 0.0, %v2731
        %v2764 = vsel %vm1499, 0.0, %v2732
        %v2765 = vsel %vm1500, 0.0, %v2733
        %v2766 = vsel %vm1501, 0.0, %v2734
        %v2767 = vsel %vm1502, 0.0, %v2735
        %v2768 = vsel %vm1503, 0.0, %v2736
        %v2769 = vsel %vm1504, 0.0, %v2737
        %v2770 = vsel %vm1505, 0.0, %v2738
        %v2771 = vsel %vm1506, 0.0, %v2739
        %v2772 = vsel %vm1507, 0.0, %v2740
        %v2773 = vsel %vm1508, 0.0, %v2741
        %v2774 = vsel %vm1509, 0.0, %v2742
        %v2775 = vsel %vm1510, 0.0, %v2743
        %v2776 = vsel %vm1511, 0.0, %v2744
        %v2777 = vsel %vm1512, 0.0, %v2745
        %v2778 = vsel %vm1513, 0.0, %v2746
        %v2779 = vsel %vm1514, 0.0, %v2747
        %v2780 = vsel %vm1515, 0.0, %v2748
        %v2781 = vsel %vm1516, 0.0, %v2749
        %v2782 = vsel %vm1517, 0.0, %v2750
        %v2783 = vsel %vm1518, 0.0, %v2751
        %v2784 = vsel %vm1519, 0.0, %v2752
        %v2785 = vsel %vm1520, 0.0, %v2753
        %s2786 = scalar_lea.vmem %s2, 96
        %v2787 = vld [vmem:[%s2786] sm:$0xff]
        %v2788 = vld [vmem:[%s2786 + $0x8] sm:$0xff]
        %v2789 = vld [vmem:[%s2786 + $0x10] sm:$0xff]
        %v2790 = vld [vmem:[%s2786 + $0x18] sm:$0xff]
        %v2792 = vsel %vm905, %v2754, 0
        %v2795 = vsel %vm905, %v2755, 0
        %v2798 = vsel %vm905, %v2756, 0
        %v2801 = vsel %vm905, %v2757, 0
        %v2804 = vsel %vm905, %v2758, 0
        %v2807 = vsel %vm905, %v2759, 0
        %v2810 = vsel %vm905, %v2760, 0
        %v2813 = vsel %vm905, %v2761, 0
        %v2816 = vsel %vm905, %v2762, 0
        %v2819 = vsel %vm905, %v2763, 0
        %v2822 = vsel %vm905, %v2764, 0
        %v2825 = vsel %vm905, %v2765, 0
        %v2828 = vsel %vm905, %v2766, 0
        %v2831 = vsel %vm905, %v2767, 0
        %v2834 = vsel %vm905, %v2768, 0
        %v2837 = vsel %vm905, %v2769, 0
        %v2840 = vsel %vm905, %v2770, 0
        %v2843 = vsel %vm905, %v2771, 0
        %v2846 = vsel %vm905, %v2772, 0
        %v2849 = vsel %vm905, %v2773, 0
        %v2852 = vsel %vm905, %v2774, 0
        %v2855 = vsel %vm905, %v2775, 0
        %v2858 = vsel %vm905, %v2776, 0
        %v2861 = vsel %vm905, %v2777, 0
        %v2864 = vsel %vm905, %v2778, 0
        %v2867 = vsel %vm905, %v2779, 0
        %v2870 = vsel %vm905, %v2780, 0
        %v2873 = vsel %vm905, %v2781, 0
        %v2876 = vsel %vm905, %v2782, 0
        %v2879 = vsel %vm905, %v2783, 0
        %v2882 = vsel %vm905, %v2784, 0
        %v2885 = vsel %vm905, %v2785, 0
        %2887 = vmatprep.subr.mxu0 0.0
        %2888 = vmatpush1.msra.mxu0 %v2787
        %2889 = vmatprep.subr.mxu0 0.0
        %2890 = vmatpush1.msra.mxu0 %v2788
        %2891 = vmatprep.subr.mxu0 0.0
        %2892 = vmatpush1.msra.mxu0 %v2789
        %2893 = vmatprep.subr.mxu0 0.0
        %2894 = vmatpush1.msra.mxu0 %v2790
        %2895 = vmatprep.subr.mxu0 0.0
        %2896 = vmatpush1.msra.mxu0 0.0
        %2897 = vmatprep.subr.mxu0 0.0
        %2898 = vmatpush1.msra.mxu0 0.0
        %2899 = vmatprep.subr.mxu0 0.0
        %2900 = vmatpush1.msra.mxu0 0.0
        %2901 = vmatprep.subr.mxu0 0.0
        %2902 = vmatpush1.msra.mxu0 0.0
        %2903 = vmatprep.subr.mxu0 0.0
        %2904 = vmatpush1.msra.mxu0 0.0
        %2905 = vmatprep.subr.mxu0 0.0
        %2906 = vmatpush1.msra.mxu0 0.0
        %2907 = vmatprep.subr.mxu0 0.0
        %2908 = vmatpush1.msra.mxu0 0.0
        %2909 = vmatprep.subr.mxu0 0.0
        %2910 = vmatpush1.msra.mxu0 0.0
        %2911 = vmatprep.subr.mxu0 0.0
        %2912 = vmatpush1.msra.mxu0 0.0
        %2913 = vmatprep.subr.mxu0 0.0
        %2914 = vmatpush1.msra.mxu0 0.0
        %2915 = vmatprep.subr.mxu0 0.0
        %2916 = vmatpush1.msra.mxu0 0.0
        %2917 = vmatprep.subr.mxu0 0.0
        %2918 = vmatpush1.msra.mxu0 0.0
        %2919 = vmatprep.subr.mxu0 0.0
        %2920 = vmatpush1.msra.mxu0 0.0
        %2921 = vmatprep.subr.mxu0 0.0
        %2922 = vmatpush1.msra.mxu0 0.0
        %2923 = vmatprep.subr.mxu0 0.0
        %2924 = vmatpush1.msra.mxu0 0.0
        %2925 = vmatprep.subr.mxu0 0.0
        %2926 = vmatpush1.msra.mxu0 0.0
        %2927 = vmatprep.subr.mxu0 0.0
        %2928 = vmatpush1.msra.mxu0 0.0
        %2929 = vmatprep.subr.mxu0 0.0
        %2930 = vmatpush1.msra.mxu0 0.0
        %2931 = vmatprep.subr.mxu0 0.0
        %2932 = vmatpush1.msra.mxu0 0.0
        %2933 = vmatprep.subr.mxu0 0.0
        %2934 = vmatpush1.msra.mxu0 0.0
        %2935 = vmatprep.subr.mxu0 0.0
        %2936 = vmatpush1.msra.mxu0 0.0
        %2937 = vmatprep.subr.mxu0 0.0
        %2938 = vmatpush1.msra.mxu0 0.0
        %2939 = vmatprep.subr.mxu0 0.0
        %2940 = vmatpush1.msra.mxu0 0.0
        %2941 = vmatprep.subr.mxu0 0.0
        %2942 = vmatpush1.msra.mxu0 0.0
        %2943 = vmatprep.subr.mxu0 0.0
        %2944 = vmatpush1.msra.mxu0 0.0
        %2945 = vmatprep.subr.mxu0 0.0
        %2946 = vmatpush1.msra.mxu0 0.0
        %2947 = vmatprep.subr.mxu0 0.0
        %2948 = vmatpush1.msra.mxu0 0.0
        %2949 = vmatprep.subr.mxu0 0.0
        %2950 = vmatpush1.msra.mxu0 0.0
        %2951 = vmatprep.mubr.f32.mxu0 0.0
        %2952 = vmatmul.mubr.f32.gmra.mrb[0].mxu0 %v2792
        %v2953 = vpop.f32.mrb[0].mxu0
        %v2954 = vadd.f32 0.0, %v2953
        %v2955 = vpop.f32.mrb[0].mxu0
        %2956 = vmatprep.mubr.f32.mxu0 0.0
        %2957 = vmatmul.mubr.f32.gmra.mrb[0].mxu0 %v2795
        %v2958 = vpop.f32.mrb[0].mxu0
        %v2959 = vadd.f32 0.0, %v2958
        %v2960 = vpop.f32.mrb[0].mxu0
        %2961 = vmatprep.mubr.f32.mxu0 0.0
        %2962 = vmatmul.mubr.f32.gmra.mrb[0].mxu0 %v2798
        %v2963 = vpop.f32.mrb[0].mxu0
        %v2964 = vadd.f32 0.0, %v2963
        %v2965 = vpop.f32.mrb[0].mxu0
        %2966 = vmatprep.mubr.f32.mxu0 0.0
        %2967 = vmatmul.mubr.f32.gmra.mrb[0].mxu0 %v2801
        %v2968 = vpop.f32.mrb[0].mxu0
        %v2969 = vadd.f32 0.0, %v2968
        %v2970 = vpop.f32.mrb[0].mxu0
        %2971 = vmatprep.mubr.f32.mxu0 0.0
        %2972 = vmatmul.mubr.f32.gmra.mrb[0].mxu0 %v2804
        %v2973 = vpop.f32.mrb[0].mxu0
        %v2974 = vadd.f32 0.0, %v2973
        %v2975 = vpop.f32.mrb[0].mxu0
        %2976 = vmatprep.mubr.f32.mxu0 0.0
        %2977 = vmatmul.mubr.f32.gmra.mrb[0].mxu0 %v2807
        %v2978 = vpop.f32.mrb[0].mxu0
        %v2979 = vadd.f32 0.0, %v2978
        %v2980 = vpop.f32.mrb[0].mxu0
        %2981 = vmatprep.mubr.f32.mxu0 0.0
        %2982 = vmatmul.mubr.f32.gmra.mrb[0].mxu0 %v2810
        %v2983 = vpop.f32.mrb[0].mxu0
        %v2984 = vadd.f32 0.0, %v2983
        %v2985 = vpop.f32.mrb[0].mxu0
        %2986 = vmatprep.mubr.f32.mxu0 0.0
        %2987 = vmatmul.mubr.f32.gmra.mrb[0].mxu0 %v2813
        %v2988 = vpop.f32.mrb[0].mxu0
        %v2989 = vadd.f32 0.0, %v2988
        %v2990 = vpop.f32.mrb[0].mxu0
        %2991 = vmatprep.mubr.f32.mxu0 0.0
        %2992 = vmatmul.mubr.f32.gmra.mrb[0].mxu0 %v2816
        %v2993 = vpop.f32.mrb[0].mxu0
        %v2994 = vadd.f32 0.0, %v2993
        %v2995 = vpop.f32.mrb[0].mxu0
        %2996 = vmatprep.mubr.f32.mxu0 0.0
        %2997 = vmatmul.mubr.f32.gmra.mrb[0].mxu0 %v2819
        %v2998 = vpop.f32.mrb[0].mxu0
        %v2999 = vadd.f32 0.0, %v2998
        %v3000 = vpop.f32.mrb[0].mxu0
        %3001 = vmatprep.mubr.f32.mxu0 0.0
        %3002 = vmatmul.mubr.f32.gmra.mrb[0].mxu0 %v2822
        %v3003 = vpop.f32.mrb[0].mxu0
        %v3004 = vadd.f32 0.0, %v3003
        %v3005 = vpop.f32.mrb[0].mxu0
        %3006 = vmatprep.mubr.f32.mxu0 0.0
        %3007 = vmatmul.mubr.f32.gmra.mrb[0].mxu0 %v2825
        %v3008 = vpop.f32.mrb[0].mxu0
        %v3009 = vadd.f32 0.0, %v3008
        %v3010 = vpop.f32.mrb[0].mxu0
        %3011 = vmatprep.mubr.f32.mxu0 0.0
        %3012 = vmatmul.mubr.f32.gmra.mrb[0].mxu0 %v2828
        %v3013 = vpop.f32.mrb[0].mxu0
        %v3014 = vadd.f32 0.0, %v3013
        %v3015 = vpop.f32.mrb[0].mxu0
        %3016 = vmatprep.mubr.f32.mxu0 0.0
        %3017 = vmatmul.mubr.f32.gmra.mrb[0].mxu0 %v2831
        %v3018 = vpop.f32.mrb[0].mxu0
        %v3019 = vadd.f32 0.0, %v3018
        %v3020 = vpop.f32.mrb[0].mxu0
        %3021 = vmatprep.mubr.f32.mxu0 0.0
        %3022 = vmatmul.mubr.f32.gmra.mrb[0].mxu0 %v2834
        %v3023 = vpop.f32.mrb[0].mxu0
        %v3024 = vadd.f32 0.0, %v3023
        %v3025 = vpop.f32.mrb[0].mxu0
        %3026 = vmatprep.mubr.f32.mxu0 0.0
        %3027 = vmatmul.mubr.f32.gmra.mrb[0].mxu0 %v2837
        %v3028 = vpop.f32.mrb[0].mxu0
        %v3029 = vadd.f32 0.0, %v3028
        %v3030 = vpop.f32.mrb[0].mxu0
        %3031 = vmatprep.mubr.f32.mxu0 0.0
        %3032 = vmatmul.mubr.f32.gmra.mrb[0].mxu0 %v2840
        %v3033 = vpop.f32.mrb[0].mxu0
        %v3034 = vadd.f32 0.0, %v3033
        %v3035 = vpop.f32.mrb[0].mxu0
        %3036 = vmatprep.mubr.f32.mxu0 0.0
        %3037 = vmatmul.mubr.f32.gmra.mrb[0].mxu0 %v2843
        %v3038 = vpop.f32.mrb[0].mxu0
        %v3039 = vadd.f32 0.0, %v3038
        %v3040 = vpop.f32.mrb[0].mxu0
        %3041 = vmatprep.mubr.f32.mxu0 0.0
        %3042 = vmatmul.mubr.f32.gmra.mrb[0].mxu0 %v2846
        %v3043 = vpop.f32.mrb[0].mxu0
        %v3044 = vadd.f32 0.0, %v3043
        %v3045 = vpop.f32.mrb[0].mxu0
        %3046 = vmatprep.mubr.f32.mxu0 0.0
        %3047 = vmatmul.mubr.f32.gmra.mrb[0].mxu0 %v2849
        %v3048 = vpop.f32.mrb[0].mxu0
        %v3049 = vadd.f32 0.0, %v3048
        %v3050 = vpop.f32.mrb[0].mxu0
        %3051 = vmatprep.mubr.f32.mxu0 0.0
        %3052 = vmatmul.mubr.f32.gmra.mrb[0].mxu0 %v2852
        %v3053 = vpop.f32.mrb[0].mxu0
        %v3054 = vadd.f32 0.0, %v3053
        %v3055 = vpop.f32.mrb[0].mxu0
        %3056 = vmatprep.mubr.f32.mxu0 0.0
        %3057 = vmatmul.mubr.f32.gmra.mrb[0].mxu0 %v2855
        %v3058 = vpop.f32.mrb[0].mxu0
        %v3059 = vadd.f32 0.0, %v3058
        %v3060 = vpop.f32.mrb[0].mxu0
        %3061 = vmatprep.mubr.f32.mxu0 0.0
        %3062 = vmatmul.mubr.f32.gmra.mrb[0].mxu0 %v2858
        %v3063 = vpop.f32.mrb[0].mxu0
        %v3064 = vadd.f32 0.0, %v3063
        %v3065 = vpop.f32.mrb[0].mxu0
        %3066 = vmatprep.mubr.f32.mxu0 0.0
        %3067 = vmatmul.mubr.f32.gmra.mrb[0].mxu0 %v2861
        %v3068 = vpop.f32.mrb[0].mxu0
        %v3069 = vadd.f32 0.0, %v3068
        %v3070 = vpop.f32.mrb[0].mxu0
        %3071 = vmatprep.mubr.f32.mxu0 0.0
        %3072 = vmatmul.mubr.f32.gmra.mrb[0].mxu0 %v2864
        %v3073 = vpop.f32.mrb[0].mxu0
        %v3074 = vadd.f32 0.0, %v3073
        %v3075 = vpop.f32.mrb[0].mxu0
        %3076 = vmatprep.mubr.f32.mxu0 0.0
        %3077 = vmatmul.mubr.f32.gmra.mrb[0].mxu0 %v2867
        %v3078 = vpop.f32.mrb[0].mxu0
        %v3079 = vadd.f32 0.0, %v3078
        %v3080 = vpop.f32.mrb[0].mxu0
        %3081 = vmatprep.mubr.f32.mxu0 0.0
        %3082 = vmatmul.mubr.f32.gmra.mrb[0].mxu0 %v2870
        %v3083 = vpop.f32.mrb[0].mxu0
        %v3084 = vadd.f32 0.0, %v3083
        %v3085 = vpop.f32.mrb[0].mxu0
        %3086 = vmatprep.mubr.f32.mxu0 0.0
        %3087 = vmatmul.mubr.f32.gmra.mrb[0].mxu0 %v2873
        %v3088 = vpop.f32.mrb[0].mxu0
        %v3089 = vadd.f32 0.0, %v3088
        %v3090 = vpop.f32.mrb[0].mxu0
        %3091 = vmatprep.mubr.f32.mxu0 0.0
        %3092 = vmatmul.mubr.f32.gmra.mrb[0].mxu0 %v2876
        %v3093 = vpop.f32.mrb[0].mxu0
        %v3094 = vadd.f32 0.0, %v3093
        %v3095 = vpop.f32.mrb[0].mxu0
        %3096 = vmatprep.mubr.f32.mxu0 0.0
        %3097 = vmatmul.mubr.f32.gmra.mrb[0].mxu0 %v2879
        %v3098 = vpop.f32.mrb[0].mxu0
        %v3099 = vadd.f32 0.0, %v3098
        %v3100 = vpop.f32.mrb[0].mxu0
        %3101 = vmatprep.mubr.f32.mxu0 0.0
        %3102 = vmatmul.mubr.f32.gmra.mrb[0].mxu0 %v2882
        %v3103 = vpop.f32.mrb[0].mxu0
        %v3104 = vadd.f32 0.0, %v3103
        %v3105 = vpop.f32.mrb[0].mxu0
        %3106 = vmatprep.mubr.f32.mxu0 0.0
        %3107 = vmatmul.mubr.f32.gmra.mrb[0].mxu0 %v2885
        %v3108 = vpop.f32.mrb[0].mxu0
        %v3109 = vadd.f32 0.0, %v3108
        %v3110 = vpop.f32.mrb[0].mxu0
        %3111 = vdwg.mxu0
        %v3112 = vadd.f32 %v2690, %v2954
        %v3113 = vadd.f32 %v2691, %v2959
        %v3114 = vadd.f32 %v2692, %v2964
        %v3115 = vadd.f32 %v2693, %v2969
        %v3116 = vadd.f32 %v2694, %v2974
        %v3117 = vadd.f32 %v2695, %v2979
        %v3118 = vadd.f32 %v2696, %v2984
        %v3119 = vadd.f32 %v2697, %v2989
        %v3120 = vadd.f32 %v2698, %v2994
        %v3121 = vadd.f32 %v2699, %v2999
        %v3122 = vadd.f32 %v2700, %v3004
        %v3123 = vadd.f32 %v2701, %v3009
        %v3124 = vadd.f32 %v2702, %v3014
        %v3125 = vadd.f32 %v2703, %v3019
        %v3126 = vadd.f32 %v2704, %v3024
        %v3127 = vadd.f32 %v2705, %v3029
        %v3128 = vadd.f32 %v2706, %v3034
        %v3129 = vadd.f32 %v2707, %v3039
        %v3130 = vadd.f32 %v2708, %v3044
        %v3131 = vadd.f32 %v2709, %v3049
        %v3132 = vadd.f32 %v2710, %v3054
        %v3133 = vadd.f32 %v2711, %v3059
        %v3134 = vadd.f32 %v2712, %v3064
        %v3135 = vadd.f32 %v2713, %v3069
        %v3136 = vadd.f32 %v2714, %v3074
        %v3137 = vadd.f32 %v2715, %v3079
        %v3138 = vadd.f32 %v2716, %v3084
        %v3139 = vadd.f32 %v2717, %v3089
        %v3140 = vadd.f32 %v2718, %v3094
        %v3141 = vadd.f32 %v2719, %v3099
        %v3142 = vadd.f32 %v2720, %v3104
        %v3143 = vadd.f32 %v2721, %v3109
        %v3144 = vld [vmem:[#allocation2 + $0x18] sm:$0xff]
        %v3145 = vld [vmem:[#allocation2 + $0x20] sm:$0xff]
        %v3146 = vld [vmem:[#allocation2 + $0x28] sm:$0xff]
        %v3147 = vld [vmem:[#allocation2 + $0x30] sm:$0xff]
        %v3148 = vld [vmem:[#allocation2 + $0x38] sm:$0xff]
        %v3149 = vld [vmem:[#allocation2 + $0x40] sm:$0xff]
        %v3150 = vld [vmem:[#allocation2 + $0x48] sm:$0xff]
        %v3151 = vld [vmem:[#allocation2 + $0x50] sm:$0xff]
        %v3152 = vld [vmem:[#allocation2 + $0x58] sm:$0xff]
        %v3153 = vld [vmem:[#allocation2 + $0x60] sm:$0xff]
        %v3154 = vld [vmem:[#allocation2 + $0x68] sm:$0xff]
        %v3155 = vld [vmem:[#allocation2 + $0x70] sm:$0xff]
        %v3156 = vld [vmem:[#allocation2 + $0x78] sm:$0xff]
        %v3157 = vld [vmem:[#allocation2 + $0x80] sm:$0xff]
        %v3158 = vld [vmem:[#allocation2 + $0x88] sm:$0xff]
        %v3159 = vld [vmem:[#allocation2 + $0x90] sm:$0xff]
        %v3160 = vld [vmem:[#allocation2 + $0x98] sm:$0xff]
        %v3161 = vld [vmem:[#allocation2 + $0xa0] sm:$0xff]
        %v3162 = vld [vmem:[#allocation2 + $0xa8] sm:$0xff]
        %v3163 = vld [vmem:[#allocation2 + $0xb0] sm:$0xff]
        %v3164 = vld [vmem:[#allocation2 + $0xb8] sm:$0xff]
        %v3165 = vld [vmem:[#allocation2 + $0xc0] sm:$0xff]
        %v3166 = vld [vmem:[#allocation2 + $0xc8] sm:$0xff]
        %v3167 = vld [vmem:[#allocation2 + $0xd0] sm:$0xff]
        %v3168 = vld [vmem:[#allocation2 + $0xd8] sm:$0xff]
        %v3169 = vld [vmem:[#allocation2 + $0xe0] sm:$0xff]
        %v3170 = vld [vmem:[#allocation2 + $0xe8] sm:$0xff]
        %v3171 = vld [vmem:[#allocation2 + $0xf0] sm:$0xff]
        %v3172 = vld [vmem:[#allocation2 + $0xf8] sm:$0xff]
        %v3173 = vld [vmem:[#allocation2 + $0x100] sm:$0xff]
        %v3174 = vld [vmem:[#allocation2 + $0x108] sm:$0xff]
        %v3175 = vld [vmem:[#allocation2 + $0x110] sm:$0xff]
        %s3176 = scalar_lea.vmem %s2, 128
        %v3177 = vld [vmem:[%s3176] sm:$0xff]
        %v3178 = vld [vmem:[%s3176 + $0x8] sm:$0xff]
        %v3179 = vld [vmem:[%s3176 + $0x10] sm:$0xff]
        %v3180 = vld [vmem:[%s3176 + $0x18] sm:$0xff]
        %v3182 = vsel %vm905, %v3144, 0
        %v3185 = vsel %vm905, %v3145, 0
        %v3188 = vsel %vm905, %v3146, 0
        %v3191 = vsel %vm905, %v3147, 0
        %v3194 = vsel %vm905, %v3148, 0
        %v3197 = vsel %vm905, %v3149, 0
        %v3200 = vsel %vm905, %v3150, 0
        %v3203 = vsel %vm905, %v3151, 0
        %v3206 = vsel %vm905, %v3152, 0
        %v3209 = vsel %vm905, %v3153, 0
        %v3212 = vsel %vm905, %v3154, 0
        %v3215 = vsel %vm905, %v3155, 0
        %v3218 = vsel %vm905, %v3156, 0
        %v3221 = vsel %vm905, %v3157, 0
        %v3224 = vsel %vm905, %v3158, 0
        %v3227 = vsel %vm905, %v3159, 0
        %v3230 = vsel %vm905, %v3160, 0
        %v3233 = vsel %vm905, %v3161, 0
        %v3236 = vsel %vm905, %v3162, 0
        %v3239 = vsel %vm905, %v3163, 0
        %v3242 = vsel %vm905, %v3164, 0
        %v3245 = vsel %vm905, %v3165, 0
        %v3248 = vsel %vm905, %v3166, 0
        %v3251 = vsel %vm905, %v3167, 0
        %v3254 = vsel %vm905, %v3168, 0
        %v3257 = vsel %vm905, %v3169, 0
        %v3260 = vsel %vm905, %v3170, 0
        %v3263 = vsel %vm905, %v3171, 0
        %v3266 = vsel %vm905, %v3172, 0
        %v3269 = vsel %vm905, %v3173, 0
        %v3272 = vsel %vm905, %v3174, 0
        %v3275 = vsel %vm905, %v3175, 0
        %3277 = vmatprep.subr.mxu0 0.0
        %3278 = vmatpush1.msra.mxu0 %v3177
        %3279 = vmatprep.subr.mxu0 0.0
        %3280 = vmatpush1.msra.mxu0 %v3178
        %3281 = vmatprep.subr.mxu0 0.0
        %3282 = vmatpush1.msra.mxu0 %v3179
        %3283 = vmatprep.subr.mxu0 0.0
        %3284 = vmatpush1.msra.mxu0 %v3180
        %3285 = vmatprep.subr.mxu0 0.0
        %3286 = vmatpush1.msra.mxu0 0.0
        %3287 = vmatprep.subr.mxu0 0.0
        %3288 = vmatpush1.msra.mxu0 0.0
        %3289 = vmatprep.subr.mxu0 0.0
        %3290 = vmatpush1.msra.mxu0 0.0
        %3291 = vmatprep.subr.mxu0 0.0
        %3292 = vmatpush1.msra.mxu0 0.0
        %3293 = vmatprep.subr.mxu0 0.0
        %3294 = vmatpush1.msra.mxu0 0.0
        %3295 = vmatprep.subr.mxu0 0.0
        %3296 = vmatpush1.msra.mxu0 0.0
        %3297 = vmatprep.subr.mxu0 0.0
        %3298 = vmatpush1.msra.mxu0 0.0
        %3299 = vmatprep.subr.mxu0 0.0
        %3300 = vmatpush1.msra.mxu0 0.0
        %3301 = vmatprep.subr.mxu0 0.0
        %3302 = vmatpush1.msra.mxu0 0.0
        %3303 = vmatprep.subr.mxu0 0.0
        %3304 = vmatpush1.msra.mxu0 0.0
        %3305 = vmatprep.subr.mxu0 0.0
        %3306 = vmatpush1.msra.mxu0 0.0
        %3307 = vmatprep.subr.mxu0 0.0
        %3308 = vmatpush1.msra.mxu0 0.0
        %3309 = vmatprep.subr.mxu0 0.0
        %3310 = vmatpush1.msra.mxu0 0.0
        %3311 = vmatprep.subr.mxu0 0.0
        %3312 = vmatpush1.msra.mxu0 0.0
        %3313 = vmatprep.subr.mxu0 0.0
        %3314 = vmatpush1.msra.mxu0 0.0
        %3315 = vmatprep.subr.mxu0 0.0
        %3316 = vmatpush1.msra.mxu0 0.0
        %3317 = vmatprep.subr.mxu0 0.0
        %3318 = vmatpush1.msra.mxu0 0.0
        %3319 = vmatprep.subr.mxu0 0.0
        %3320 = vmatpush1.msra.mxu0 0.0
        %3321 = vmatprep.subr.mxu0 0.0
        %3322 = vmatpush1.msra.mxu0 0.0
        %3323 = vmatprep.subr.mxu0 0.0
        %3324 = vmatpush1.msra.mxu0 0.0
        %3325 = vmatprep.subr.mxu0 0.0
        %3326 = vmatpush1.msra.mxu0 0.0
        %3327 = vmatprep.subr.mxu0 0.0
        %3328 = vmatpush1.msra.mxu0 0.0
        %3329 = vmatprep.subr.mxu0 0.0
        %3330 = vmatpush1.msra.mxu0 0.0
        %3331 = vmatprep.subr.mxu0 0.0
        %3332 = vmatpush1.msra.mxu0 0.0
        %3333 = vmatprep.subr.mxu0 0.0
        %3334 = vmatpush1.msra.mxu0 0.0
        %3335 = vmatprep.subr.mxu0 0.0
        %3336 = vmatpush1.msra.mxu0 0.0
        %3337 = vmatprep.subr.mxu0 0.0
        %3338 = vmatpush1.msra.mxu0 0.0
        %3339 = vmatprep.subr.mxu0 0.0
        %3340 = vmatpush1.msra.mxu0 0.0
        %3341 = vmatprep.mubr.f32.mxu0 0.0
        %3342 = vmatmul.mubr.f32.gmra.mrb[0].mxu0 %v3182
        %v3343 = vpop.f32.mrb[0].mxu0
        %v3344 = vadd.f32 0.0, %v3343
        %v3345 = vpop.f32.mrb[0].mxu0
        %3346 = vmatprep.mubr.f32.mxu0 0.0
        %3347 = vmatmul.mubr.f32.gmra.mrb[0].mxu0 %v3185
        %v3348 = vpop.f32.mrb[0].mxu0
        %v3349 = vadd.f32 0.0, %v3348
        %v3350 = vpop.f32.mrb[0].mxu0
        %3351 = vmatprep.mubr.f32.mxu0 0.0
        %3352 = vmatmul.mubr.f32.gmra.mrb[0].mxu0 %v3188
        %v3353 = vpop.f32.mrb[0].mxu0
        %v3354 = vadd.f32 0.0, %v3353
        %v3355 = vpop.f32.mrb[0].mxu0
        %3356 = vmatprep.mubr.f32.mxu0 0.0
        %3357 = vmatmul.mubr.f32.gmra.mrb[0].mxu0 %v3191
        %v3358 = vpop.f32.mrb[0].mxu0
        %v3359 = vadd.f32 0.0, %v3358
        %v3360 = vpop.f32.mrb[0].mxu0
        %3361 = vmatprep.mubr.f32.mxu0 0.0
        %3362 = vmatmul.mubr.f32.gmra.mrb[0].mxu0 %v3194
        %v3363 = vpop.f32.mrb[0].mxu0
        %v3364 = vadd.f32 0.0, %v3363
        %v3365 = vpop.f32.mrb[0].mxu0
        %3366 = vmatprep.mubr.f32.mxu0 0.0
        %3367 = vmatmul.mubr.f32.gmra.mrb[0].mxu0 %v3197
        %v3368 = vpop.f32.mrb[0].mxu0
        %v3369 = vadd.f32 0.0, %v3368
        %v3370 = vpop.f32.mrb[0].mxu0
        %3371 = vmatprep.mubr.f32.mxu0 0.0
        %3372 = vmatmul.mubr.f32.gmra.mrb[0].mxu0 %v3200
        %v3373 = vpop.f32.mrb[0].mxu0
        %v3374 = vadd.f32 0.0, %v3373
        %v3375 = vpop.f32.mrb[0].mxu0
        %3376 = vmatprep.mubr.f32.mxu0 0.0
        %3377 = vmatmul.mubr.f32.gmra.mrb[0].mxu0 %v3203
        %v3378 = vpop.f32.mrb[0].mxu0
        %v3379 = vadd.f32 0.0, %v3378
        %v3380 = vpop.f32.mrb[0].mxu0
        %3381 = vmatprep.mubr.f32.mxu0 0.0
        %3382 = vmatmul.mubr.f32.gmra.mrb[0].mxu0 %v3206
        %v3383 = vpop.f32.mrb[0].mxu0
        %v3384 = vadd.f32 0.0, %v3383
        %v3385 = vpop.f32.mrb[0].mxu0
        %3386 = vmatprep.mubr.f32.mxu0 0.0
        %3387 = vmatmul.mubr.f32.gmra.mrb[0].mxu0 %v3209
        %v3388 = vpop.f32.mrb[0].mxu0
        %v3389 = vadd.f32 0.0, %v3388
        %v3390 = vpop.f32.mrb[0].mxu0
        %3391 = vmatprep.mubr.f32.mxu0 0.0
        %3392 = vmatmul.mubr.f32.gmra.mrb[0].mxu0 %v3212
        %v3393 = vpop.f32.mrb[0].mxu0
        %v3394 = vadd.f32 0.0, %v3393
        %v3395 = vpop.f32.mrb[0].mxu0
        %3396 = vmatprep.mubr.f32.mxu0 0.0
        %3397 = vmatmul.mubr.f32.gmra.mrb[0].mxu0 %v3215
        %v3398 = vpop.f32.mrb[0].mxu0
        %v3399 = vadd.f32 0.0, %v3398
        %v3400 = vpop.f32.mrb[0].mxu0
        %3401 = vmatprep.mubr.f32.mxu0 0.0
        %3402 = vmatmul.mubr.f32.gmra.mrb[0].mxu0 %v3218
        %v3403 = vpop.f32.mrb[0].mxu0
        %v3404 = vadd.f32 0.0, %v3403
        %v3405 = vpop.f32.mrb[0].mxu0
        %3406 = vmatprep.mubr.f32.mxu0 0.0
        %3407 = vmatmul.mubr.f32.gmra.mrb[0].mxu0 %v3221
        %v3408 = vpop.f32.mrb[0].mxu0
        %v3409 = vadd.f32 0.0, %v3408
        %v3410 = vpop.f32.mrb[0].mxu0
        %3411 = vmatprep.mubr.f32.mxu0 0.0
        %3412 = vmatmul.mubr.f32.gmra.mrb[0].mxu0 %v3224
        %v3413 = vpop.f32.mrb[0].mxu0
        %v3414 = vadd.f32 0.0, %v3413
        %v3415 = vpop.f32.mrb[0].mxu0
        %3416 = vmatprep.mubr.f32.mxu0 0.0
        %3417 = vmatmul.mubr.f32.gmra.mrb[0].mxu0 %v3227
        %v3418 = vpop.f32.mrb[0].mxu0
        %v3419 = vadd.f32 0.0, %v3418
        %v3420 = vpop.f32.mrb[0].mxu0
        %3421 = vmatprep.mubr.f32.mxu0 0.0
        %3422 = vmatmul.mubr.f32.gmra.mrb[0].mxu0 %v3230
        %v3423 = vpop.f32.mrb[0].mxu0
        %v3424 = vadd.f32 0.0, %v3423
        %v3425 = vpop.f32.mrb[0].mxu0
        %3426 = vmatprep.mubr.f32.mxu0 0.0
        %3427 = vmatmul.mubr.f32.gmra.mrb[0].mxu0 %v3233
        %v3428 = vpop.f32.mrb[0].mxu0
        %v3429 = vadd.f32 0.0, %v3428
        %v3430 = vpop.f32.mrb[0].mxu0
        %3431 = vmatprep.mubr.f32.mxu0 0.0
        %3432 = vmatmul.mubr.f32.gmra.mrb[0].mxu0 %v3236
        %v3433 = vpop.f32.mrb[0].mxu0
        %v3434 = vadd.f32 0.0, %v3433
        %v3435 = vpop.f32.mrb[0].mxu0
        %3436 = vmatprep.mubr.f32.mxu0 0.0
        %3437 = vmatmul.mubr.f32.gmra.mrb[0].mxu0 %v3239
        %v3438 = vpop.f32.mrb[0].mxu0
        %v3439 = vadd.f32 0.0, %v3438
        %v3440 = vpop.f32.mrb[0].mxu0
        %3441 = vmatprep.mubr.f32.mxu0 0.0
        %3442 = vmatmul.mubr.f32.gmra.mrb[0].mxu0 %v3242
        %v3443 = vpop.f32.mrb[0].mxu0
        %v3444 = vadd.f32 0.0, %v3443
        %v3445 = vpop.f32.mrb[0].mxu0
        %3446 = vmatprep.mubr.f32.mxu0 0.0
        %3447 = vmatmul.mubr.f32.gmra.mrb[0].mxu0 %v3245
        %v3448 = vpop.f32.mrb[0].mxu0
        %v3449 = vadd.f32 0.0, %v3448
        %v3450 = vpop.f32.mrb[0].mxu0
        %3451 = vmatprep.mubr.f32.mxu0 0.0
        %3452 = vmatmul.mubr.f32.gmra.mrb[0].mxu0 %v3248
        %v3453 = vpop.f32.mrb[0].mxu0
        %v3454 = vadd.f32 0.0, %v3453
        %v3455 = vpop.f32.mrb[0].mxu0
        %3456 = vmatprep.mubr.f32.mxu0 0.0
        %3457 = vmatmul.mubr.f32.gmra.mrb[0].mxu0 %v3251
        %v3458 = vpop.f32.mrb[0].mxu0
        %v3459 = vadd.f32 0.0, %v3458
        %v3460 = vpop.f32.mrb[0].mxu0
        %3461 = vmatprep.mubr.f32.mxu0 0.0
        %3462 = vmatmul.mubr.f32.gmra.mrb[0].mxu0 %v3254
        %v3463 = vpop.f32.mrb[0].mxu0
        %v3464 = vadd.f32 0.0, %v3463
        %v3465 = vpop.f32.mrb[0].mxu0
        %3466 = vmatprep.mubr.f32.mxu0 0.0
        %3467 = vmatmul.mubr.f32.gmra.mrb[0].mxu0 %v3257
        %v3468 = vpop.f32.mrb[0].mxu0
        %v3469 = vadd.f32 0.0, %v3468
        %v3470 = vpop.f32.mrb[0].mxu0
        %3471 = vmatprep.mubr.f32.mxu0 0.0
        %3472 = vmatmul.mubr.f32.gmra.mrb[0].mxu0 %v3260
        %v3473 = vpop.f32.mrb[0].mxu0
        %v3474 = vadd.f32 0.0, %v3473
        %v3475 = vpop.f32.mrb[0].mxu0
        %3476 = vmatprep.mubr.f32.mxu0 0.0
        %3477 = vmatmul.mubr.f32.gmra.mrb[0].mxu0 %v3263
        %v3478 = vpop.f32.mrb[0].mxu0
        %v3479 = vadd.f32 0.0, %v3478
        %v3480 = vpop.f32.mrb[0].mxu0
        %3481 = vmatprep.mubr.f32.mxu0 0.0
        %3482 = vmatmul.mubr.f32.gmra.mrb[0].mxu0 %v3266
        %v3483 = vpop.f32.mrb[0].mxu0
        %v3484 = vadd.f32 0.0, %v3483
        %v3485 = vpop.f32.mrb[0].mxu0
        %3486 = vmatprep.mubr.f32.mxu0 0.0
        %3487 = vmatmul.mubr.f32.gmra.mrb[0].mxu0 %v3269
        %v3488 = vpop.f32.mrb[0].mxu0
        %v3489 = vadd.f32 0.0, %v3488
        %v3490 = vpop.f32.mrb[0].mxu0
        %3491 = vmatprep.mubr.f32.mxu0 0.0
        %3492 = vmatmul.mubr.f32.gmra.mrb[0].mxu0 %v3272
        %v3493 = vpop.f32.mrb[0].mxu0
        %v3494 = vadd.f32 0.0, %v3493
        %v3495 = vpop.f32.mrb[0].mxu0
        %3496 = vmatprep.mubr.f32.mxu0 0.0
        %3497 = vmatmul.mubr.f32.gmra.mrb[0].mxu0 %v3275
        %v3498 = vpop.f32.mrb[0].mxu0
        %v3499 = vadd.f32 0.0, %v3498
        %v3500 = vpop.f32.mrb[0].mxu0
        %3501 = vdwg.mxu0
        %v3502 = vadd.f32 %v3112, %v3344
        %v3503 = vadd.f32 %v3113, %v3349
        %v3504 = vadd.f32 %v3114, %v3354
        %v3505 = vadd.f32 %v3115, %v3359
        %v3506 = vadd.f32 %v3116, %v3364
        %v3507 = vadd.f32 %v3117, %v3369
        %v3508 = vadd.f32 %v3118, %v3374
        %v3509 = vadd.f32 %v3119, %v3379
        %v3510 = vadd.f32 %v3120, %v3384
        %v3511 = vadd.f32 %v3121, %v3389
        %v3512 = vadd.f32 %v3122, %v3394
        %v3513 = vadd.f32 %v3123, %v3399
        %v3514 = vadd.f32 %v3124, %v3404
        %v3515 = vadd.f32 %v3125, %v3409
        %v3516 = vadd.f32 %v3126, %v3414
        %v3517 = vadd.f32 %v3127, %v3419
        %v3518 = vadd.f32 %v3128, %v3424
        %v3519 = vadd.f32 %v3129, %v3429
        %v3520 = vadd.f32 %v3130, %v3434
        %v3521 = vadd.f32 %v3131, %v3439
        %v3522 = vadd.f32 %v3132, %v3444
        %v3523 = vadd.f32 %v3133, %v3449
        %v3524 = vadd.f32 %v3134, %v3454
        %v3525 = vadd.f32 %v3135, %v3459
        %v3526 = vadd.f32 %v3136, %v3464
        %v3527 = vadd.f32 %v3137, %v3469
        %v3528 = vadd.f32 %v3138, %v3474
        %v3529 = vadd.f32 %v3139, %v3479
        %v3530 = vadd.f32 %v3140, %v3484
        %v3531 = vadd.f32 %v3141, %v3489
        %v3532 = vadd.f32 %v3142, %v3494
        %v3533 = vadd.f32 %v3143, %v3499
        %v3534 = vld [vmem:[#allocation2 + $0x19] sm:$0xff]
        %v3535 = vld [vmem:[#allocation2 + $0x21] sm:$0xff]
        %v3536 = vld [vmem:[#allocation2 + $0x29] sm:$0xff]
        %v3537 = vld [vmem:[#allocation2 + $0x31] sm:$0xff]
        %v3538 = vld [vmem:[#allocation2 + $0x39] sm:$0xff]
        %v3539 = vld [vmem:[#allocation2 + $0x41] sm:$0xff]
        %v3540 = vld [vmem:[#allocation2 + $0x49] sm:$0xff]
        %v3541 = vld [vmem:[#allocation2 + $0x51] sm:$0xff]
        %v3542 = vld [vmem:[#allocation2 + $0x59] sm:$0xff]
        %v3543 = vld [vmem:[#allocation2 + $0x61] sm:$0xff]
        %v3544 = vld [vmem:[#allocation2 + $0x69] sm:$0xff]
        %v3545 = vld [vmem:[#allocation2 + $0x71] sm:$0xff]
        %v3546 = vld [vmem:[#allocation2 + $0x79] sm:$0xff]
        %v3547 = vld [vmem:[#allocation2 + $0x81] sm:$0xff]
        %v3548 = vld [vmem:[#allocation2 + $0x89] sm:$0xff]
        %v3549 = vld [vmem:[#allocation2 + $0x91] sm:$0xff]
        %v3550 = vld [vmem:[#allocation2 + $0x99] sm:$0xff]
        %v3551 = vld [vmem:[#allocation2 + $0xa1] sm:$0xff]
        %v3552 = vld [vmem:[#allocation2 + $0xa9] sm:$0xff]
        %v3553 = vld [vmem:[#allocation2 + $0xb1] sm:$0xff]
        %v3554 = vld [vmem:[#allocation2 + $0xb9] sm:$0xff]
        %v3555 = vld [vmem:[#allocation2 + $0xc1] sm:$0xff]
        %v3556 = vld [vmem:[#allocation2 + $0xc9] sm:$0xff]
        %v3557 = vld [vmem:[#allocation2 + $0xd1] sm:$0xff]
        %v3558 = vld [vmem:[#allocation2 + $0xd9] sm:$0xff]
        %v3559 = vld [vmem:[#allocation2 + $0xe1] sm:$0xff]
        %v3560 = vld [vmem:[#allocation2 + $0xe9] sm:$0xff]
        %v3561 = vld [vmem:[#allocation2 + $0xf1] sm:$0xff]
        %v3562 = vld [vmem:[#allocation2 + $0xf9] sm:$0xff]
        %v3563 = vld [vmem:[#allocation2 + $0x101] sm:$0xff]
        %v3564 = vld [vmem:[#allocation2 + $0x109] sm:$0xff]
        %v3565 = vld [vmem:[#allocation2 + $0x111] sm:$0xff]
        %v3566 = vsel %vm2300, 0.0, %v3534
        %v3567 = vsel %vm2301, 0.0, %v3535
        %v3568 = vsel %vm2302, 0.0, %v3536
        %v3569 = vsel %vm2303, 0.0, %v3537
        %v3570 = vsel %vm2304, 0.0, %v3538
        %v3571 = vsel %vm2305, 0.0, %v3539
        %v3572 = vsel %vm2306, 0.0, %v3540
        %v3573 = vsel %vm2307, 0.0, %v3541
        %v3574 = vsel %vm2308, 0.0, %v3542
        %v3575 = vsel %vm2309, 0.0, %v3543
        %v3576 = vsel %vm2310, 0.0, %v3544
        %v3577 = vsel %vm2311, 0.0, %v3545
        %v3578 = vsel %vm2312, 0.0, %v3546
        %v3579 = vsel %vm2313, 0.0, %v3547
        %v3580 = vsel %vm2314, 0.0, %v3548
        %v3581 = vsel %vm2315, 0.0, %v3549
        %v3582 = vsel %vm2316, 0.0, %v3550
        %v3583 = vsel %vm2317, 0.0, %v3551
        %v3584 = vsel %vm2318, 0.0, %v3552
        %v3585 = vsel %vm2319, 0.0, %v3553
        %v3586 = vsel %vm2320, 0.0, %v3554
        %v3587 = vsel %vm2321, 0.0, %v3555
        %v3588 = vsel %vm2322, 0.0, %v3556
        %v3589 = vsel %vm2323, 0.0, %v3557
        %v3590 = vsel %vm2324, 0.0, %v3558
        %v3591 = vsel %vm2325, 0.0, %v3559
        %v3592 = vsel %vm2326, 0.0, %v3560
        %v3593 = vsel %vm2327, 0.0, %v3561
        %v3594 = vsel %vm2328, 0.0, %v3562
        %v3595 = vsel %vm2329, 0.0, %v3563
        %v3596 = vsel %vm2330, 0.0, %v3564
        %v3597 = vsel %vm2331, 0.0, %v3565
        %s3598 = scalar_lea.vmem %s2, 160
        %v3599 = vld [vmem:[%s3598] sm:$0xff]
        %v3600 = vld [vmem:[%s3598 + $0x8] sm:$0xff]
        %v3601 = vld [vmem:[%s3598 + $0x10] sm:$0xff]
        %v3602 = vld [vmem:[%s3598 + $0x18] sm:$0xff]
        %v3604 = vsel %vm905, %v3566, 0
        %v3607 = vsel %vm905, %v3567, 0
        %v3610 = vsel %vm905, %v3568, 0
        %v3613 = vsel %vm905, %v3569, 0
        %v3616 = vsel %vm905, %v3570, 0
        %v3619 = vsel %vm905, %v3571, 0
        %v3622 = vsel %vm905, %v3572, 0
        %v3625 = vsel %vm905, %v3573, 0
        %v3628 = vsel %vm905, %v3574, 0
        %v3631 = vsel %vm905, %v3575, 0
        %v3634 = vsel %vm905, %v3576, 0
        %v3637 = vsel %vm905, %v3577, 0
        %v3640 = vsel %vm905, %v3578, 0
        %v3643 = vsel %vm905, %v3579, 0
        %v3646 = vsel %vm905, %v3580, 0
        %v3649 = vsel %vm905, %v3581, 0
        %v3652 = vsel %vm905, %v3582, 0
        %v3655 = vsel %vm905, %v3583, 0
        %v3658 = vsel %vm905, %v3584, 0
        %v3661 = vsel %vm905, %v3585, 0
        %v3664 = vsel %vm905, %v3586, 0
        %v3667 = vsel %vm905, %v3587, 0
        %v3670 = vsel %vm905, %v3588, 0
        %v3673 = vsel %vm905, %v3589, 0
        %v3676 = vsel %vm905, %v3590, 0
        %v3679 = vsel %vm905, %v3591, 0
        %v3682 = vsel %vm905, %v3592, 0
        %v3685 = vsel %vm905, %v3593, 0
        %v3688 = vsel %vm905, %v3594, 0
        %v3691 = vsel %vm905, %v3595, 0
        %v3694 = vsel %vm905, %v3596, 0
        %v3697 = vsel %vm905, %v3597, 0
        %3699 = vmatprep.subr.mxu0 0.0
        %3700 = vmatpush1.msra.mxu0 %v3599
        %3701 = vmatprep.subr.mxu0 0.0
        %3702 = vmatpush1.msra.mxu0 %v3600
        %3703 = vmatprep.subr.mxu0 0.0
        %3704 = vmatpush1.msra.mxu0 %v3601
        %3705 = vmatprep.subr.mxu0 0.0
        %3706 = vmatpush1.msra.mxu0 %v3602
        %3707 = vmatprep.subr.mxu0 0.0
        %3708 = vmatpush1.msra.mxu0 0.0
        %3709 = vmatprep.subr.mxu0 0.0
        %3710 = vmatpush1.msra.mxu0 0.0
        %3711 = vmatprep.subr.mxu0 0.0
        %3712 = vmatpush1.msra.mxu0 0.0
        %3713 = vmatprep.subr.mxu0 0.0
        %3714 = vmatpush1.msra.mxu0 0.0
        %3715 = vmatprep.subr.mxu0 0.0
        %3716 = vmatpush1.msra.mxu0 0.0
        %3717 = vmatprep.subr.mxu0 0.0
        %3718 = vmatpush1.msra.mxu0 0.0
        %3719 = vmatprep.subr.mxu0 0.0
        %3720 = vmatpush1.msra.mxu0 0.0
        %3721 = vmatprep.subr.mxu0 0.0
        %3722 = vmatpush1.msra.mxu0 0.0
        %3723 = vmatprep.subr.mxu0 0.0
        %3724 = vmatpush1.msra.mxu0 0.0
        %3725 = vmatprep.subr.mxu0 0.0
        %3726 = vmatpush1.msra.mxu0 0.0
        %3727 = vmatprep.subr.mxu0 0.0
        %3728 = vmatpush1.msra.mxu0 0.0
        %3729 = vmatprep.subr.mxu0 0.0
        %3730 = vmatpush1.msra.mxu0 0.0
        %3731 = vmatprep.subr.mxu0 0.0
        %3732 = vmatpush1.msra.mxu0 0.0
        %3733 = vmatprep.subr.mxu0 0.0
        %3734 = vmatpush1.msra.mxu0 0.0
        %3735 = vmatprep.subr.mxu0 0.0
        %3736 = vmatpush1.msra.mxu0 0.0
        %3737 = vmatprep.subr.mxu0 0.0
        %3738 = vmatpush1.msra.mxu0 0.0
        %3739 = vmatprep.subr.mxu0 0.0
        %3740 = vmatpush1.msra.mxu0 0.0
        %3741 = vmatprep.subr.mxu0 0.0
        %3742 = vmatpush1.msra.mxu0 0.0
        %3743 = vmatprep.subr.mxu0 0.0
        %3744 = vmatpush1.msra.mxu0 0.0
        %3745 = vmatprep.subr.mxu0 0.0
        %3746 = vmatpush1.msra.mxu0 0.0
        %3747 = vmatprep.subr.mxu0 0.0
        %3748 = vmatpush1.msra.mxu0 0.0
        %3749 = vmatprep.subr.mxu0 0.0
        %3750 = vmatpush1.msra.mxu0 0.0
        %3751 = vmatprep.subr.mxu0 0.0
        %3752 = vmatpush1.msra.mxu0 0.0
        %3753 = vmatprep.subr.mxu0 0.0
        %3754 = vmatpush1.msra.mxu0 0.0
        %3755 = vmatprep.subr.mxu0 0.0
        %3756 = vmatpush1.msra.mxu0 0.0
        %3757 = vmatprep.subr.mxu0 0.0
        %3758 = vmatpush1.msra.mxu0 0.0
        %3759 = vmatprep.subr.mxu0 0.0
        %3760 = vmatpush1.msra.mxu0 0.0
        %3761 = vmatprep.subr.mxu0 0.0
        %3762 = vmatpush1.msra.mxu0 0.0
        %3763 = vmatprep.mubr.f32.mxu0 0.0
        %3764 = vmatmul.mubr.f32.gmra.mrb[0].mxu0 %v3604
        %v3765 = vpop.f32.mrb[0].mxu0
        %v3766 = vadd.f32 0.0, %v3765
        %v3767 = vpop.f32.mrb[0].mxu0
        %3768 = vmatprep.mubr.f32.mxu0 0.0
        %3769 = vmatmul.mubr.f32.gmra.mrb[0].mxu0 %v3607
        %v3770 = vpop.f32.mrb[0].mxu0
        %v3771 = vadd.f32 0.0, %v3770
        %v3772 = vpop.f32.mrb[0].mxu0
        %3773 = vmatprep.mubr.f32.mxu0 0.0
        %3774 = vmatmul.mubr.f32.gmra.mrb[0].mxu0 %v3610
        %v3775 = vpop.f32.mrb[0].mxu0
        %v3776 = vadd.f32 0.0, %v3775
        %v3777 = vpop.f32.mrb[0].mxu0
        %3778 = vmatprep.mubr.f32.mxu0 0.0
        %3779 = vmatmul.mubr.f32.gmra.mrb[0].mxu0 %v3613
        %v3780 = vpop.f32.mrb[0].mxu0
        %v3781 = vadd.f32 0.0, %v3780
        %v3782 = vpop.f32.mrb[0].mxu0
        %3783 = vmatprep.mubr.f32.mxu0 0.0
        %3784 = vmatmul.mubr.f32.gmra.mrb[0].mxu0 %v3616
        %v3785 = vpop.f32.mrb[0].mxu0
        %v3786 = vadd.f32 0.0, %v3785
        %v3787 = vpop.f32.mrb[0].mxu0
        %3788 = vmatprep.mubr.f32.mxu0 0.0
        %3789 = vmatmul.mubr.f32.gmra.mrb[0].mxu0 %v3619
        %v3790 = vpop.f32.mrb[0].mxu0
        %v3791 = vadd.f32 0.0, %v3790
        %v3792 = vpop.f32.mrb[0].mxu0
        %3793 = vmatprep.mubr.f32.mxu0 0.0
        %3794 = vmatmul.mubr.f32.gmra.mrb[0].mxu0 %v3622
        %v3795 = vpop.f32.mrb[0].mxu0
        %v3796 = vadd.f32 0.0, %v3795
        %v3797 = vpop.f32.mrb[0].mxu0
        %3798 = vmatprep.mubr.f32.mxu0 0.0
        %3799 = vmatmul.mubr.f32.gmra.mrb[0].mxu0 %v3625
        %v3800 = vpop.f32.mrb[0].mxu0
        %v3801 = vadd.f32 0.0, %v3800
        %v3802 = vpop.f32.mrb[0].mxu0
        %3803 = vmatprep.mubr.f32.mxu0 0.0
        %3804 = vmatmul.mubr.f32.gmra.mrb[0].mxu0 %v3628
        %v3805 = vpop.f32.mrb[0].mxu0
        %v3806 = vadd.f32 0.0, %v3805
        %v3807 = vpop.f32.mrb[0].mxu0
        %3808 = vmatprep.mubr.f32.mxu0 0.0
        %3809 = vmatmul.mubr.f32.gmra.mrb[0].mxu0 %v3631
        %v3810 = vpop.f32.mrb[0].mxu0
        %v3811 = vadd.f32 0.0, %v3810
        %v3812 = vpop.f32.mrb[0].mxu0
        %3813 = vmatprep.mubr.f32.mxu0 0.0
        %3814 = vmatmul.mubr.f32.gmra.mrb[0].mxu0 %v3634
        %v3815 = vpop.f32.mrb[0].mxu0
        %v3816 = vadd.f32 0.0, %v3815
        %v3817 = vpop.f32.mrb[0].mxu0
        %3818 = vmatprep.mubr.f32.mxu0 0.0
        %3819 = vmatmul.mubr.f32.gmra.mrb[0].mxu0 %v3637
        %v3820 = vpop.f32.mrb[0].mxu0
        %v3821 = vadd.f32 0.0, %v3820
        %v3822 = vpop.f32.mrb[0].mxu0
        %3823 = vmatprep.mubr.f32.mxu0 0.0
        %3824 = vmatmul.mubr.f32.gmra.mrb[0].mxu0 %v3640
        %v3825 = vpop.f32.mrb[0].mxu0
        %v3826 = vadd.f32 0.0, %v3825
        %v3827 = vpop.f32.mrb[0].mxu0
        %3828 = vmatprep.mubr.f32.mxu0 0.0
        %3829 = vmatmul.mubr.f32.gmra.mrb[0].mxu0 %v3643
        %v3830 = vpop.f32.mrb[0].mxu0
        %v3831 = vadd.f32 0.0, %v3830
        %v3832 = vpop.f32.mrb[0].mxu0
        %3833 = vmatprep.mubr.f32.mxu0 0.0
        %3834 = vmatmul.mubr.f32.gmra.mrb[0].mxu0 %v3646
        %v3835 = vpop.f32.mrb[0].mxu0
        %v3836 = vadd.f32 0.0, %v3835
        %v3837 = vpop.f32.mrb[0].mxu0
        %3838 = vmatprep.mubr.f32.mxu0 0.0
        %3839 = vmatmul.mubr.f32.gmra.mrb[0].mxu0 %v3649
        %v3840 = vpop.f32.mrb[0].mxu0
        %v3841 = vadd.f32 0.0, %v3840
        %v3842 = vpop.f32.mrb[0].mxu0
        %3843 = vmatprep.mubr.f32.mxu0 0.0
        %3844 = vmatmul.mubr.f32.gmra.mrb[0].mxu0 %v3652
        %v3845 = vpop.f32.mrb[0].mxu0
        %v3846 = vadd.f32 0.0, %v3845
        %v3847 = vpop.f32.mrb[0].mxu0
        %3848 = vmatprep.mubr.f32.mxu0 0.0
        %3849 = vmatmul.mubr.f32.gmra.mrb[0].mxu0 %v3655
        %v3850 = vpop.f32.mrb[0].mxu0
        %v3851 = vadd.f32 0.0, %v3850
        %v3852 = vpop.f32.mrb[0].mxu0
        %3853 = vmatprep.mubr.f32.mxu0 0.0
        %3854 = vmatmul.mubr.f32.gmra.mrb[0].mxu0 %v3658
        %v3855 = vpop.f32.mrb[0].mxu0
        %v3856 = vadd.f32 0.0, %v3855
        %v3857 = vpop.f32.mrb[0].mxu0
        %3858 = vmatprep.mubr.f32.mxu0 0.0
        %3859 = vmatmul.mubr.f32.gmra.mrb[0].mxu0 %v3661
        %v3860 = vpop.f32.mrb[0].mxu0
        %v3861 = vadd.f32 0.0, %v3860
        %v3862 = vpop.f32.mrb[0].mxu0
        %3863 = vmatprep.mubr.f32.mxu0 0.0
        %3864 = vmatmul.mubr.f32.gmra.mrb[0].mxu0 %v3664
        %v3865 = vpop.f32.mrb[0].mxu0
        %v3866 = vadd.f32 0.0, %v3865
        %v3867 = vpop.f32.mrb[0].mxu0
        %3868 = vmatprep.mubr.f32.mxu0 0.0
        %3869 = vmatmul.mubr.f32.gmra.mrb[0].mxu0 %v3667
        %v3870 = vpop.f32.mrb[0].mxu0
        %v3871 = vadd.f32 0.0, %v3870
        %v3872 = vpop.f32.mrb[0].mxu0
        %3873 = vmatprep.mubr.f32.mxu0 0.0
        %3874 = vmatmul.mubr.f32.gmra.mrb[0].mxu0 %v3670
        %v3875 = vpop.f32.mrb[0].mxu0
        %v3876 = vadd.f32 0.0, %v3875
        %v3877 = vpop.f32.mrb[0].mxu0
        %3878 = vmatprep.mubr.f32.mxu0 0.0
        %3879 = vmatmul.mubr.f32.gmra.mrb[0].mxu0 %v3673
        %v3880 = vpop.f32.mrb[0].mxu0
        %v3881 = vadd.f32 0.0, %v3880
        %v3882 = vpop.f32.mrb[0].mxu0
        %3883 = vmatprep.mubr.f32.mxu0 0.0
        %3884 = vmatmul.mubr.f32.gmra.mrb[0].mxu0 %v3676
        %v3885 = vpop.f32.mrb[0].mxu0
        %v3886 = vadd.f32 0.0, %v3885
        %v3887 = vpop.f32.mrb[0].mxu0
        %3888 = vmatprep.mubr.f32.mxu0 0.0
        %3889 = vmatmul.mubr.f32.gmra.mrb[0].mxu0 %v3679
        %v3890 = vpop.f32.mrb[0].mxu0
        %v3891 = vadd.f32 0.0, %v3890
        %v3892 = vpop.f32.mrb[0].mxu0
        %3893 = vmatprep.mubr.f32.mxu0 0.0
        %3894 = vmatmul.mubr.f32.gmra.mrb[0].mxu0 %v3682
        %v3895 = vpop.f32.mrb[0].mxu0
        %v3896 = vadd.f32 0.0, %v3895
        %v3897 = vpop.f32.mrb[0].mxu0
        %3898 = vmatprep.mubr.f32.mxu0 0.0
        %3899 = vmatmul.mubr.f32.gmra.mrb[0].mxu0 %v3685
        %v3900 = vpop.f32.mrb[0].mxu0
        %v3901 = vadd.f32 0.0, %v3900
        %v3902 = vpop.f32.mrb[0].mxu0
        %3903 = vmatprep.mubr.f32.mxu0 0.0
        %3904 = vmatmul.mubr.f32.gmra.mrb[0].mxu0 %v3688
        %v3905 = vpop.f32.mrb[0].mxu0
        %v3906 = vadd.f32 0.0, %v3905
        %v3907 = vpop.f32.mrb[0].mxu0
        %3908 = vmatprep.mubr.f32.mxu0 0.0
        %3909 = vmatmul.mubr.f32.gmra.mrb[0].mxu0 %v3691
        %v3910 = vpop.f32.mrb[0].mxu0
        %v3911 = vadd.f32 0.0, %v3910
        %v3912 = vpop.f32.mrb[0].mxu0
        %3913 = vmatprep.mubr.f32.mxu0 0.0
        %3914 = vmatmul.mubr.f32.gmra.mrb[0].mxu0 %v3694
        %v3915 = vpop.f32.mrb[0].mxu0
        %v3916 = vadd.f32 0.0, %v3915
        %v3917 = vpop.f32.mrb[0].mxu0
        %3918 = vmatprep.mubr.f32.mxu0 0.0
        %3919 = vmatmul.mubr.f32.gmra.mrb[0].mxu0 %v3697
        %v3920 = vpop.f32.mrb[0].mxu0
        %v3921 = vadd.f32 0.0, %v3920
        %v3922 = vpop.f32.mrb[0].mxu0
        %3923 = vdwg.mxu0
        %v3924 = vadd.f32 %v3502, %v3766
        %v3925 = vadd.f32 %v3503, %v3771
        %v3926 = vadd.f32 %v3504, %v3776
        %v3927 = vadd.f32 %v3505, %v3781
        %v3928 = vadd.f32 %v3506, %v3786
        %v3929 = vadd.f32 %v3507, %v3791
        %v3930 = vadd.f32 %v3508, %v3796
        %v3931 = vadd.f32 %v3509, %v3801
        %v3932 = vadd.f32 %v3510, %v3806
        %v3933 = vadd.f32 %v3511, %v3811
        %v3934 = vadd.f32 %v3512, %v3816
        %v3935 = vadd.f32 %v3513, %v3821
        %v3936 = vadd.f32 %v3514, %v3826
        %v3937 = vadd.f32 %v3515, %v3831
        %v3938 = vadd.f32 %v3516, %v3836
        %v3939 = vadd.f32 %v3517, %v3841
        %v3940 = vadd.f32 %v3518, %v3846
        %v3941 = vadd.f32 %v3519, %v3851
        %v3942 = vadd.f32 %v3520, %v3856
        %v3943 = vadd.f32 %v3521, %v3861
        %v3944 = vadd.f32 %v3522, %v3866
        %v3945 = vadd.f32 %v3523, %v3871
        %v3946 = vadd.f32 %v3524, %v3876
        %v3947 = vadd.f32 %v3525, %v3881
        %v3948 = vadd.f32 %v3526, %v3886
        %v3949 = vadd.f32 %v3527, %v3891
        %v3950 = vadd.f32 %v3528, %v3896
        %v3951 = vadd.f32 %v3529, %v3901
        %v3952 = vadd.f32 %v3530, %v3906
        %v3953 = vadd.f32 %v3531, %v3911
        %v3954 = vadd.f32 %v3532, %v3916
        %v3955 = vadd.f32 %v3533, %v3921
        %v3956 = vld [vmem:[#allocation2 + $0x27] sm:$0xff]
        %v3957 = vld [vmem:[#allocation2 + $0x2f] sm:$0xff]
        %v3958 = vld [vmem:[#allocation2 + $0x37] sm:$0xff]
        %v3959 = vld [vmem:[#allocation2 + $0x3f] sm:$0xff]
        %v3960 = vld [vmem:[#allocation2 + $0x47] sm:$0xff]
        %v3961 = vld [vmem:[#allocation2 + $0x4f] sm:$0xff]
        %v3962 = vld [vmem:[#allocation2 + $0x57] sm:$0xff]
        %v3963 = vld [vmem:[#allocation2 + $0x5f] sm:$0xff]
        %v3964 = vld [vmem:[#allocation2 + $0x67] sm:$0xff]
        %v3965 = vld [vmem:[#allocation2 + $0x6f] sm:$0xff]
        %v3966 = vld [vmem:[#allocation2 + $0x77] sm:$0xff]
        %v3967 = vld [vmem:[#allocation2 + $0x7f] sm:$0xff]
        %v3968 = vld [vmem:[#allocation2 + $0x87] sm:$0xff]
        %v3969 = vld [vmem:[#allocation2 + $0x8f] sm:$0xff]
        %v3970 = vld [vmem:[#allocation2 + $0x97] sm:$0xff]
        %v3971 = vld [vmem:[#allocation2 + $0x9f] sm:$0xff]
        %v3972 = vld [vmem:[#allocation2 + $0xa7] sm:$0xff]
        %v3973 = vld [vmem:[#allocation2 + $0xaf] sm:$0xff]
        %v3974 = vld [vmem:[#allocation2 + $0xb7] sm:$0xff]
        %v3975 = vld [vmem:[#allocation2 + $0xbf] sm:$0xff]
        %v3976 = vld [vmem:[#allocation2 + $0xc7] sm:$0xff]
        %v3977 = vld [vmem:[#allocation2 + $0xcf] sm:$0xff]
        %v3978 = vld [vmem:[#allocation2 + $0xd7] sm:$0xff]
        %v3979 = vld [vmem:[#allocation2 + $0xdf] sm:$0xff]
        %v3980 = vld [vmem:[#allocation2 + $0xe7] sm:$0xff]
        %v3981 = vld [vmem:[#allocation2 + $0xef] sm:$0xff]
        %v3982 = vld [vmem:[#allocation2 + $0xf7] sm:$0xff]
        %v3983 = vld [vmem:[#allocation2 + $0xff] sm:$0xff]
        %v3984 = vld [vmem:[#allocation2 + $0x107] sm:$0xff]
        %v3985 = vld [vmem:[#allocation2 + $0x10f] sm:$0xff]
        %v3986 = vld [vmem:[#allocation2 + $0x117] sm:$0xff]
        %v3987 = vld [vmem:[#allocation2 + $0x11f] sm:$0xff]
        %v3988 = vsel %vm1489, 0.0, %v3956
        %v3989 = vsel %vm1490, 0.0, %v3957
        %v3990 = vsel %vm1491, 0.0, %v3958
        %v3991 = vsel %vm1492, 0.0, %v3959
        %v3992 = vsel %vm1493, 0.0, %v3960
        %v3993 = vsel %vm1494, 0.0, %v3961
        %v3994 = vsel %vm1495, 0.0, %v3962
        %v3995 = vsel %vm1496, 0.0, %v3963
        %v3996 = vsel %vm1497, 0.0, %v3964
        %v3997 = vsel %vm1498, 0.0, %v3965
        %v3998 = vsel %vm1499, 0.0, %v3966
        %v3999 = vsel %vm1500, 0.0, %v3967
        %v4000 = vsel %vm1501, 0.0, %v3968
        %v4001 = vsel %vm1502, 0.0, %v3969
        %v4002 = vsel %vm1503, 0.0, %v3970
        %v4003 = vsel %vm1504, 0.0, %v3971
        %v4004 = vsel %vm1505, 0.0, %v3972
        %v4005 = vsel %vm1506, 0.0, %v3973
        %v4006 = vsel %vm1507, 0.0, %v3974
        %v4007 = vsel %vm1508, 0.0, %v3975
        %v4008 = vsel %vm1509, 0.0, %v3976
        %v4009 = vsel %vm1510, 0.0, %v3977
        %v4010 = vsel %vm1511, 0.0, %v3978
        %v4011 = vsel %vm1512, 0.0, %v3979
        %v4012 = vsel %vm1513, 0.0, %v3980
        %v4013 = vsel %vm1514, 0.0, %v3981
        %v4014 = vsel %vm1515, 0.0, %v3982
        %v4015 = vsel %vm1516, 0.0, %v3983
        %v4016 = vsel %vm1517, 0.0, %v3984
        %v4017 = vsel %vm1518, 0.0, %v3985
        %v4018 = vsel %vm1519, 0.0, %v3986
        %v4019 = vsel %vm1520, 0.0, %v3987
        %s4020 = scalar_lea.vmem %s2, 192
        %v4021 = vld [vmem:[%s4020] sm:$0xff]
        %v4022 = vld [vmem:[%s4020 + $0x8] sm:$0xff]
        %v4023 = vld [vmem:[%s4020 + $0x10] sm:$0xff]
        %v4024 = vld [vmem:[%s4020 + $0x18] sm:$0xff]
        %v4026 = vsel %vm905, %v3988, 0
        %v4029 = vsel %vm905, %v3989, 0
        %v4032 = vsel %vm905, %v3990, 0
        %v4035 = vsel %vm905, %v3991, 0
        %v4038 = vsel %vm905, %v3992, 0
        %v4041 = vsel %vm905, %v3993, 0
        %v4044 = vsel %vm905, %v3994, 0
        %v4047 = vsel %vm905, %v3995, 0
        %v4050 = vsel %vm905, %v3996, 0
        %v4053 = vsel %vm905, %v3997, 0
        %v4056 = vsel %vm905, %v3998, 0
        %v4059 = vsel %vm905, %v3999, 0
        %v4062 = vsel %vm905, %v4000, 0
        %v4065 = vsel %vm905, %v4001, 0
        %v4068 = vsel %vm905, %v4002, 0
        %v4071 = vsel %vm905, %v4003, 0
        %v4074 = vsel %vm905, %v4004, 0
        %v4077 = vsel %vm905, %v4005, 0
        %v4080 = vsel %vm905, %v4006, 0
        %v4083 = vsel %vm905, %v4007, 0
        %v4086 = vsel %vm905, %v4008, 0
        %v4089 = vsel %vm905, %v4009, 0
        %v4092 = vsel %vm905, %v4010, 0
        %v4095 = vsel %vm905, %v4011, 0
        %v4098 = vsel %vm905, %v4012, 0
        %v4101 = vsel %vm905, %v4013, 0
        %v4104 = vsel %vm905, %v4014, 0
        %v4107 = vsel %vm905, %v4015, 0
        %v4110 = vsel %vm905, %v4016, 0
        %v4113 = vsel %vm905, %v4017, 0
        %v4116 = vsel %vm905, %v4018, 0
        %v4119 = vsel %vm905, %v4019, 0
        %4121 = vmatprep.subr.mxu0 0.0
        %4122 = vmatpush1.msra.mxu0 %v4021
        %4123 = vmatprep.subr.mxu0 0.0
        %4124 = vmatpush1.msra.mxu0 %v4022
        %4125 = vmatprep.subr.mxu0 0.0
        %4126 = vmatpush1.msra.mxu0 %v4023
        %4127 = vmatprep.subr.mxu0 0.0
        %4128 = vmatpush1.msra.mxu0 %v4024
        %4129 = vmatprep.subr.mxu0 0.0
        %4130 = vmatpush1.msra.mxu0 0.0
        %4131 = vmatprep.subr.mxu0 0.0
        %4132 = vmatpush1.msra.mxu0 0.0
        %4133 = vmatprep.subr.mxu0 0.0
        %4134 = vmatpush1.msra.mxu0 0.0
        %4135 = vmatprep.subr.mxu0 0.0
        %4136 = vmatpush1.msra.mxu0 0.0
        %4137 = vmatprep.subr.mxu0 0.0
        %4138 = vmatpush1.msra.mxu0 0.0
        %4139 = vmatprep.subr.mxu0 0.0
        %4140 = vmatpush1.msra.mxu0 0.0
        %4141 = vmatprep.subr.mxu0 0.0
        %4142 = vmatpush1.msra.mxu0 0.0
        %4143 = vmatprep.subr.mxu0 0.0
        %4144 = vmatpush1.msra.mxu0 0.0
        %4145 = vmatprep.subr.mxu0 0.0
        %4146 = vmatpush1.msra.mxu0 0.0
        %4147 = vmatprep.subr.mxu0 0.0
        %4148 = vmatpush1.msra.mxu0 0.0
        %4149 = vmatprep.subr.mxu0 0.0
        %4150 = vmatpush1.msra.mxu0 0.0
        %4151 = vmatprep.subr.mxu0 0.0
        %4152 = vmatpush1.msra.mxu0 0.0
        %4153 = vmatprep.subr.mxu0 0.0
        %4154 = vmatpush1.msra.mxu0 0.0
        %4155 = vmatprep.subr.mxu0 0.0
        %4156 = vmatpush1.msra.mxu0 0.0
        %4157 = vmatprep.subr.mxu0 0.0
        %4158 = vmatpush1.msra.mxu0 0.0
        %4159 = vmatprep.subr.mxu0 0.0
        %4160 = vmatpush1.msra.mxu0 0.0
        %4161 = vmatprep.subr.mxu0 0.0
        %4162 = vmatpush1.msra.mxu0 0.0
        %4163 = vmatprep.subr.mxu0 0.0
        %4164 = vmatpush1.msra.mxu0 0.0
        %4165 = vmatprep.subr.mxu0 0.0
        %4166 = vmatpush1.msra.mxu0 0.0
        %4167 = vmatprep.subr.mxu0 0.0
        %4168 = vmatpush1.msra.mxu0 0.0
        %4169 = vmatprep.subr.mxu0 0.0
        %4170 = vmatpush1.msra.mxu0 0.0
        %4171 = vmatprep.subr.mxu0 0.0
        %4172 = vmatpush1.msra.mxu0 0.0
        %4173 = vmatprep.subr.mxu0 0.0
        %4174 = vmatpush1.msra.mxu0 0.0
        %4175 = vmatprep.subr.mxu0 0.0
        %4176 = vmatpush1.msra.mxu0 0.0
        %4177 = vmatprep.subr.mxu0 0.0
        %4178 = vmatpush1.msra.mxu0 0.0
        %4179 = vmatprep.subr.mxu0 0.0
        %4180 = vmatpush1.msra.mxu0 0.0
        %4181 = vmatprep.subr.mxu0 0.0
        %4182 = vmatpush1.msra.mxu0 0.0
        %4183 = vmatprep.subr.mxu0 0.0
        %4184 = vmatpush1.msra.mxu0 0.0
        %4185 = vmatprep.mubr.f32.mxu0 0.0
        %4186 = vmatmul.mubr.f32.gmra.mrb[0].mxu0 %v4026
        %v4187 = vpop.f32.mrb[0].mxu0
        %v4188 = vadd.f32 0.0, %v4187
        %v4189 = vpop.f32.mrb[0].mxu0
        %4190 = vmatprep.mubr.f32.mxu0 0.0
        %4191 = vmatmul.mubr.f32.gmra.mrb[0].mxu0 %v4029
        %v4192 = vpop.f32.mrb[0].mxu0
        %v4193 = vadd.f32 0.0, %v4192
        %v4194 = vpop.f32.mrb[0].mxu0
        %4195 = vmatprep.mubr.f32.mxu0 0.0
        %4196 = vmatmul.mubr.f32.gmra.mrb[0].mxu0 %v4032
        %v4197 = vpop.f32.mrb[0].mxu0
        %v4198 = vadd.f32 0.0, %v4197
        %v4199 = vpop.f32.mrb[0].mxu0
        %4200 = vmatprep.mubr.f32.mxu0 0.0
        %4201 = vmatmul.mubr.f32.gmra.mrb[0].mxu0 %v4035
        %v4202 = vpop.f32.mrb[0].mxu0
        %v4203 = vadd.f32 0.0, %v4202
        %v4204 = vpop.f32.mrb[0].mxu0
        %4205 = vmatprep.mubr.f32.mxu0 0.0
        %4206 = vmatmul.mubr.f32.gmra.mrb[0].mxu0 %v4038
        %v4207 = vpop.f32.mrb[0].mxu0
        %v4208 = vadd.f32 0.0, %v4207
        %v4209 = vpop.f32.mrb[0].mxu0
        %4210 = vmatprep.mubr.f32.mxu0 0.0
        %4211 = vmatmul.mubr.f32.gmra.mrb[0].mxu0 %v4041
        %v4212 = vpop.f32.mrb[0].mxu0
        %v4213 = vadd.f32 0.0, %v4212
        %v4214 = vpop.f32.mrb[0].mxu0
        %4215 = vmatprep.mubr.f32.mxu0 0.0
        %4216 = vmatmul.mubr.f32.gmra.mrb[0].mxu0 %v4044
        %v4217 = vpop.f32.mrb[0].mxu0
        %v4218 = vadd.f32 0.0, %v4217
        %v4219 = vpop.f32.mrb[0].mxu0
        %4220 = vmatprep.mubr.f32.mxu0 0.0
        %4221 = vmatmul.mubr.f32.gmra.mrb[0].mxu0 %v4047
        %v4222 = vpop.f32.mrb[0].mxu0
        %v4223 = vadd.f32 0.0, %v4222
        %v4224 = vpop.f32.mrb[0].mxu0
        %4225 = vmatprep.mubr.f32.mxu0 0.0
        %4226 = vmatmul.mubr.f32.gmra.mrb[0].mxu0 %v4050
        %v4227 = vpop.f32.mrb[0].mxu0
        %v4228 = vadd.f32 0.0, %v4227
        %v4229 = vpop.f32.mrb[0].mxu0
        %4230 = vmatprep.mubr.f32.mxu0 0.0
        %4231 = vmatmul.mubr.f32.gmra.mrb[0].mxu0 %v4053
        %v4232 = vpop.f32.mrb[0].mxu0
        %v4233 = vadd.f32 0.0, %v4232
        %v4234 = vpop.f32.mrb[0].mxu0
        %4235 = vmatprep.mubr.f32.mxu0 0.0
        %4236 = vmatmul.mubr.f32.gmra.mrb[0].mxu0 %v4056
        %v4237 = vpop.f32.mrb[0].mxu0
        %v4238 = vadd.f32 0.0, %v4237
        %v4239 = vpop.f32.mrb[0].mxu0
        %4240 = vmatprep.mubr.f32.mxu0 0.0
        %4241 = vmatmul.mubr.f32.gmra.mrb[0].mxu0 %v4059
        %v4242 = vpop.f32.mrb[0].mxu0
        %v4243 = vadd.f32 0.0, %v4242
        %v4244 = vpop.f32.mrb[0].mxu0
        %4245 = vmatprep.mubr.f32.mxu0 0.0
        %4246 = vmatmul.mubr.f32.gmra.mrb[0].mxu0 %v4062
        %v4247 = vpop.f32.mrb[0].mxu0
        %v4248 = vadd.f32 0.0, %v4247
        %v4249 = vpop.f32.mrb[0].mxu0
        %4250 = vmatprep.mubr.f32.mxu0 0.0
        %4251 = vmatmul.mubr.f32.gmra.mrb[0].mxu0 %v4065
        %v4252 = vpop.f32.mrb[0].mxu0
        %v4253 = vadd.f32 0.0, %v4252
        %v4254 = vpop.f32.mrb[0].mxu0
        %4255 = vmatprep.mubr.f32.mxu0 0.0
        %4256 = vmatmul.mubr.f32.gmra.mrb[0].mxu0 %v4068
        %v4257 = vpop.f32.mrb[0].mxu0
        %v4258 = vadd.f32 0.0, %v4257
        %v4259 = vpop.f32.mrb[0].mxu0
        %4260 = vmatprep.mubr.f32.mxu0 0.0
        %4261 = vmatmul.mubr.f32.gmra.mrb[0].mxu0 %v4071
        %v4262 = vpop.f32.mrb[0].mxu0
        %v4263 = vadd.f32 0.0, %v4262
        %v4264 = vpop.f32.mrb[0].mxu0
        %4265 = vmatprep.mubr.f32.mxu0 0.0
        %4266 = vmatmul.mubr.f32.gmra.mrb[0].mxu0 %v4074
        %v4267 = vpop.f32.mrb[0].mxu0
        %v4268 = vadd.f32 0.0, %v4267
        %v4269 = vpop.f32.mrb[0].mxu0
        %4270 = vmatprep.mubr.f32.mxu0 0.0
        %4271 = vmatmul.mubr.f32.gmra.mrb[0].mxu0 %v4077
        %v4272 = vpop.f32.mrb[0].mxu0
        %v4273 = vadd.f32 0.0, %v4272
        %v4274 = vpop.f32.mrb[0].mxu0
        %4275 = vmatprep.mubr.f32.mxu0 0.0
        %4276 = vmatmul.mubr.f32.gmra.mrb[0].mxu0 %v4080
        %v4277 = vpop.f32.mrb[0].mxu0
        %v4278 = vadd.f32 0.0, %v4277
        %v4279 = vpop.f32.mrb[0].mxu0
        %4280 = vmatprep.mubr.f32.mxu0 0.0
        %4281 = vmatmul.mubr.f32.gmra.mrb[0].mxu0 %v4083
        %v4282 = vpop.f32.mrb[0].mxu0
        %v4283 = vadd.f32 0.0, %v4282
        %v4284 = vpop.f32.mrb[0].mxu0
        %4285 = vmatprep.mubr.f32.mxu0 0.0
        %4286 = vmatmul.mubr.f32.gmra.mrb[0].mxu0 %v4086
        %v4287 = vpop.f32.mrb[0].mxu0
        %v4288 = vadd.f32 0.0, %v4287
        %v4289 = vpop.f32.mrb[0].mxu0
        %4290 = vmatprep.mubr.f32.mxu0 0.0
        %4291 = vmatmul.mubr.f32.gmra.mrb[0].mxu0 %v4089
        %v4292 = vpop.f32.mrb[0].mxu0
        %v4293 = vadd.f32 0.0, %v4292
        %v4294 = vpop.f32.mrb[0].mxu0
        %4295 = vmatprep.mubr.f32.mxu0 0.0
        %4296 = vmatmul.mubr.f32.gmra.mrb[0].mxu0 %v4092
        %v4297 = vpop.f32.mrb[0].mxu0
        %v4298 = vadd.f32 0.0, %v4297
        %v4299 = vpop.f32.mrb[0].mxu0
        %4300 = vmatprep.mubr.f32.mxu0 0.0
        %4301 = vmatmul.mubr.f32.gmra.mrb[0].mxu0 %v4095
        %v4302 = vpop.f32.mrb[0].mxu0
        %v4303 = vadd.f32 0.0, %v4302
        %v4304 = vpop.f32.mrb[0].mxu0
        %4305 = vmatprep.mubr.f32.mxu0 0.0
        %4306 = vmatmul.mubr.f32.gmra.mrb[0].mxu0 %v4098
        %v4307 = vpop.f32.mrb[0].mxu0
        %v4308 = vadd.f32 0.0, %v4307
        %v4309 = vpop.f32.mrb[0].mxu0
        %4310 = vmatprep.mubr.f32.mxu0 0.0
        %4311 = vmatmul.mubr.f32.gmra.mrb[0].mxu0 %v4101
        %v4312 = vpop.f32.mrb[0].mxu0
        %v4313 = vadd.f32 0.0, %v4312
        %v4314 = vpop.f32.mrb[0].mxu0
        %4315 = vmatprep.mubr.f32.mxu0 0.0
        %4316 = vmatmul.mubr.f32.gmra.mrb[0].mxu0 %v4104
        %v4317 = vpop.f32.mrb[0].mxu0
        %v4318 = vadd.f32 0.0, %v4317
        %v4319 = vpop.f32.mrb[0].mxu0
        %4320 = vmatprep.mubr.f32.mxu0 0.0
        %4321 = vmatmul.mubr.f32.gmra.mrb[0].mxu0 %v4107
        %v4322 = vpop.f32.mrb[0].mxu0
        %v4323 = vadd.f32 0.0, %v4322
        %v4324 = vpop.f32.mrb[0].mxu0
        %4325 = vmatprep.mubr.f32.mxu0 0.0
        %4326 = vmatmul.mubr.f32.gmra.mrb[0].mxu0 %v4110
        %v4327 = vpop.f32.mrb[0].mxu0
        %v4328 = vadd.f32 0.0, %v4327
        %v4329 = vpop.f32.mrb[0].mxu0
        %4330 = vmatprep.mubr.f32.mxu0 0.0
        %4331 = vmatmul.mubr.f32.gmra.mrb[0].mxu0 %v4113
        %v4332 = vpop.f32.mrb[0].mxu0
        %v4333 = vadd.f32 0.0, %v4332
        %v4334 = vpop.f32.mrb[0].mxu0
        %4335 = vmatprep.mubr.f32.mxu0 0.0
        %4336 = vmatmul.mubr.f32.gmra.mrb[0].mxu0 %v4116
        %v4337 = vpop.f32.mrb[0].mxu0
        %v4338 = vadd.f32 0.0, %v4337
        %v4339 = vpop.f32.mrb[0].mxu0
        %4340 = vmatprep.mubr.f32.mxu0 0.0
        %4341 = vmatmul.mubr.f32.gmra.mrb[0].mxu0 %v4119
        %v4342 = vpop.f32.mrb[0].mxu0
        %v4343 = vadd.f32 0.0, %v4342
        %v4344 = vpop.f32.mrb[0].mxu0
        %4345 = vdwg.mxu0
        %v4346 = vadd.f32 %v3924, %v4188
        %v4347 = vadd.f32 %v3925, %v4193
        %v4348 = vadd.f32 %v3926, %v4198
        %v4349 = vadd.f32 %v3927, %v4203
        %v4350 = vadd.f32 %v3928, %v4208
        %v4351 = vadd.f32 %v3929, %v4213
        %v4352 = vadd.f32 %v3930, %v4218
        %v4353 = vadd.f32 %v3931, %v4223
        %v4354 = vadd.f32 %v3932, %v4228
        %v4355 = vadd.f32 %v3933, %v4233
        %v4356 = vadd.f32 %v3934, %v4238
        %v4357 = vadd.f32 %v3935, %v4243
        %v4358 = vadd.f32 %v3936, %v4248
        %v4359 = vadd.f32 %v3937, %v4253
        %v4360 = vadd.f32 %v3938, %v4258
        %v4361 = vadd.f32 %v3939, %v4263
        %v4362 = vadd.f32 %v3940, %v4268
        %v4363 = vadd.f32 %v3941, %v4273
        %v4364 = vadd.f32 %v3942, %v4278
        %v4365 = vadd.f32 %v3943, %v4283
        %v4366 = vadd.f32 %v3944, %v4288
        %v4367 = vadd.f32 %v3945, %v4293
        %v4368 = vadd.f32 %v3946, %v4298
        %v4369 = vadd.f32 %v3947, %v4303
        %v4370 = vadd.f32 %v3948, %v4308
        %v4371 = vadd.f32 %v3949, %v4313
        %v4372 = vadd.f32 %v3950, %v4318
        %v4373 = vadd.f32 %v3951, %v4323
        %v4374 = vadd.f32 %v3952, %v4328
        %v4375 = vadd.f32 %v3953, %v4333
        %v4376 = vadd.f32 %v3954, %v4338
        %v4377 = vadd.f32 %v3955, %v4343
        %v4378 = vld [vmem:[#allocation2 + $0x28] sm:$0xff]
        %v4379 = vld [vmem:[#allocation2 + $0x30] sm:$0xff]
        %v4380 = vld [vmem:[#allocation2 + $0x38] sm:$0xff]
        %v4381 = vld [vmem:[#allocation2 + $0x40] sm:$0xff]
        %v4382 = vld [vmem:[#allocation2 + $0x48] sm:$0xff]
        %v4383 = vld [vmem:[#allocation2 + $0x50] sm:$0xff]
        %v4384 = vld [vmem:[#allocation2 + $0x58] sm:$0xff]
        %v4385 = vld [vmem:[#allocation2 + $0x60] sm:$0xff]
        %v4386 = vld [vmem:[#allocation2 + $0x68] sm:$0xff]
        %v4387 = vld [vmem:[#allocation2 + $0x70] sm:$0xff]
        %v4388 = vld [vmem:[#allocation2 + $0x78] sm:$0xff]
        %v4389 = vld [vmem:[#allocation2 + $0x80] sm:$0xff]
        %v4390 = vld [vmem:[#allocation2 + $0x88] sm:$0xff]
        %v4391 = vld [vmem:[#allocation2 + $0x90] sm:$0xff]
        %v4392 = vld [vmem:[#allocation2 + $0x98] sm:$0xff]
        %v4393 = vld [vmem:[#allocation2 + $0xa0] sm:$0xff]
        %v4394 = vld [vmem:[#allocation2 + $0xa8] sm:$0xff]
        %v4395 = vld [vmem:[#allocation2 + $0xb0] sm:$0xff]
        %v4396 = vld [vmem:[#allocation2 + $0xb8] sm:$0xff]
        %v4397 = vld [vmem:[#allocation2 + $0xc0] sm:$0xff]
        %v4398 = vld [vmem:[#allocation2 + $0xc8] sm:$0xff]
        %v4399 = vld [vmem:[#allocation2 + $0xd0] sm:$0xff]
        %v4400 = vld [vmem:[#allocation2 + $0xd8] sm:$0xff]
        %v4401 = vld [vmem:[#allocation2 + $0xe0] sm:$0xff]
        %v4402 = vld [vmem:[#allocation2 + $0xe8] sm:$0xff]
        %v4403 = vld [vmem:[#allocation2 + $0xf0] sm:$0xff]
        %v4404 = vld [vmem:[#allocation2 + $0xf8] sm:$0xff]
        %v4405 = vld [vmem:[#allocation2 + $0x100] sm:$0xff]
        %v4406 = vld [vmem:[#allocation2 + $0x108] sm:$0xff]
        %v4407 = vld [vmem:[#allocation2 + $0x110] sm:$0xff]
        %v4408 = vld [vmem:[#allocation2 + $0x118] sm:$0xff]
        %v4409 = vld [vmem:[#allocation2 + $0x120] sm:$0xff]
        %s4410 = scalar_lea.vmem %s2, 224
        %v4411 = vld [vmem:[%s4410] sm:$0xff]
        %v4412 = vld [vmem:[%s4410 + $0x8] sm:$0xff]
        %v4413 = vld [vmem:[%s4410 + $0x10] sm:$0xff]
        %v4414 = vld [vmem:[%s4410 + $0x18] sm:$0xff]
        %v4416 = vsel %vm905, %v4378, 0
        %v4419 = vsel %vm905, %v4379, 0
        %v4422 = vsel %vm905, %v4380, 0
        %v4425 = vsel %vm905, %v4381, 0
        %v4428 = vsel %vm905, %v4382, 0
        %v4431 = vsel %vm905, %v4383, 0
        %v4434 = vsel %vm905, %v4384, 0
        %v4437 = vsel %vm905, %v4385, 0
        %v4440 = vsel %vm905, %v4386, 0
        %v4443 = vsel %vm905, %v4387, 0
        %v4446 = vsel %vm905, %v4388, 0
        %v4449 = vsel %vm905, %v4389, 0
        %v4452 = vsel %vm905, %v4390, 0
        %v4455 = vsel %vm905, %v4391, 0
        %v4458 = vsel %vm905, %v4392, 0
        %v4461 = vsel %vm905, %v4393, 0
        %v4464 = vsel %vm905, %v4394, 0
        %v4467 = vsel %vm905, %v4395, 0
        %v4470 = vsel %vm905, %v4396, 0
        %v4473 = vsel %vm905, %v4397, 0
        %v4476 = vsel %vm905, %v4398, 0
        %v4479 = vsel %vm905, %v4399, 0
        %v4482 = vsel %vm905, %v4400, 0
        %v4485 = vsel %vm905, %v4401, 0
        %v4488 = vsel %vm905, %v4402, 0
        %v4491 = vsel %vm905, %v4403, 0
        %v4494 = vsel %vm905, %v4404, 0
        %v4497 = vsel %vm905, %v4405, 0
        %v4500 = vsel %vm905, %v4406, 0
        %v4503 = vsel %vm905, %v4407, 0
        %v4506 = vsel %vm905, %v4408, 0
        %v4509 = vsel %vm905, %v4409, 0
        %4511 = vmatprep.subr.mxu0 0.0
        %4512 = vmatpush1.msra.mxu0 %v4411
        %4513 = vmatprep.subr.mxu0 0.0
        %4514 = vmatpush1.msra.mxu0 %v4412
        %4515 = vmatprep.subr.mxu0 0.0
        %4516 = vmatpush1.msra.mxu0 %v4413
        %4517 = vmatprep.subr.mxu0 0.0
        %4518 = vmatpush1.msra.mxu0 %v4414
        %4519 = vmatprep.subr.mxu0 0.0
        %4520 = vmatpush1.msra.mxu0 0.0
        %4521 = vmatprep.subr.mxu0 0.0
        %4522 = vmatpush1.msra.mxu0 0.0
        %4523 = vmatprep.subr.mxu0 0.0
        %4524 = vmatpush1.msra.mxu0 0.0
        %4525 = vmatprep.subr.mxu0 0.0
        %4526 = vmatpush1.msra.mxu0 0.0
        %4527 = vmatprep.subr.mxu0 0.0
        %4528 = vmatpush1.msra.mxu0 0.0
        %4529 = vmatprep.subr.mxu0 0.0
        %4530 = vmatpush1.msra.mxu0 0.0
        %4531 = vmatprep.subr.mxu0 0.0
        %4532 = vmatpush1.msra.mxu0 0.0
        %4533 = vmatprep.subr.mxu0 0.0
        %4534 = vmatpush1.msra.mxu0 0.0
        %4535 = vmatprep.subr.mxu0 0.0
        %4536 = vmatpush1.msra.mxu0 0.0
        %4537 = vmatprep.subr.mxu0 0.0
        %4538 = vmatpush1.msra.mxu0 0.0
        %4539 = vmatprep.subr.mxu0 0.0
        %4540 = vmatpush1.msra.mxu0 0.0
        %4541 = vmatprep.subr.mxu0 0.0
        %4542 = vmatpush1.msra.mxu0 0.0
        %4543 = vmatprep.subr.mxu0 0.0
        %4544 = vmatpush1.msra.mxu0 0.0
        %4545 = vmatprep.subr.mxu0 0.0
        %4546 = vmatpush1.msra.mxu0 0.0
        %4547 = vmatprep.subr.mxu0 0.0
        %4548 = vmatpush1.msra.mxu0 0.0
        %4549 = vmatprep.subr.mxu0 0.0
        %4550 = vmatpush1.msra.mxu0 0.0
        %4551 = vmatprep.subr.mxu0 0.0
        %4552 = vmatpush1.msra.mxu0 0.0
        %4553 = vmatprep.subr.mxu0 0.0
        %4554 = vmatpush1.msra.mxu0 0.0
        %4555 = vmatprep.subr.mxu0 0.0
        %4556 = vmatpush1.msra.mxu0 0.0
        %4557 = vmatprep.subr.mxu0 0.0
        %4558 = vmatpush1.msra.mxu0 0.0
        %4559 = vmatprep.subr.mxu0 0.0
        %4560 = vmatpush1.msra.mxu0 0.0
        %4561 = vmatprep.subr.mxu0 0.0
        %4562 = vmatpush1.msra.mxu0 0.0
        %4563 = vmatprep.subr.mxu0 0.0
        %4564 = vmatpush1.msra.mxu0 0.0
        %4565 = vmatprep.subr.mxu0 0.0
        %4566 = vmatpush1.msra.mxu0 0.0
        %4567 = vmatprep.subr.mxu0 0.0
        %4568 = vmatpush1.msra.mxu0 0.0
        %4569 = vmatprep.subr.mxu0 0.0
        %4570 = vmatpush1.msra.mxu0 0.0
        %4571 = vmatprep.subr.mxu0 0.0
        %4572 = vmatpush1.msra.mxu0 0.0
        %4573 = vmatprep.subr.mxu0 0.0
        %4574 = vmatpush1.msra.mxu0 0.0
        %4575 = vmatprep.mubr.f32.mxu0 0.0
        %4576 = vmatmul.mubr.f32.gmra.mrb[0].mxu0 %v4416
        %v4577 = vpop.f32.mrb[0].mxu0
        %v4578 = vadd.f32 0.0, %v4577
        %v4579 = vpop.f32.mrb[0].mxu0
        %4580 = vmatprep.mubr.f32.mxu0 0.0
        %4581 = vmatmul.mubr.f32.gmra.mrb[0].mxu0 %v4419
        %v4582 = vpop.f32.mrb[0].mxu0
        %v4583 = vadd.f32 0.0, %v4582
        %v4584 = vpop.f32.mrb[0].mxu0
        %4585 = vmatprep.mubr.f32.mxu0 0.0
        %4586 = vmatmul.mubr.f32.gmra.mrb[0].mxu0 %v4422
        %v4587 = vpop.f32.mrb[0].mxu0
        %v4588 = vadd.f32 0.0, %v4587
        %v4589 = vpop.f32.mrb[0].mxu0
        %4590 = vmatprep.mubr.f32.mxu0 0.0
        %4591 = vmatmul.mubr.f32.gmra.mrb[0].mxu0 %v4425
        %v4592 = vpop.f32.mrb[0].mxu0
        %v4593 = vadd.f32 0.0, %v4592
        %v4594 = vpop.f32.mrb[0].mxu0
        %4595 = vmatprep.mubr.f32.mxu0 0.0
        %4596 = vmatmul.mubr.f32.gmra.mrb[0].mxu0 %v4428
        %v4597 = vpop.f32.mrb[0].mxu0
        %v4598 = vadd.f32 0.0, %v4597
        %v4599 = vpop.f32.mrb[0].mxu0
        %4600 = vmatprep.mubr.f32.mxu0 0.0
        %4601 = vmatmul.mubr.f32.gmra.mrb[0].mxu0 %v4431
        %v4602 = vpop.f32.mrb[0].mxu0
        %v4603 = vadd.f32 0.0, %v4602
        %v4604 = vpop.f32.mrb[0].mxu0
        %4605 = vmatprep.mubr.f32.mxu0 0.0
        %4606 = vmatmul.mubr.f32.gmra.mrb[0].mxu0 %v4434
        %v4607 = vpop.f32.mrb[0].mxu0
        %v4608 = vadd.f32 0.0, %v4607
        %v4609 = vpop.f32.mrb[0].mxu0
        %4610 = vmatprep.mubr.f32.mxu0 0.0
        %4611 = vmatmul.mubr.f32.gmra.mrb[0].mxu0 %v4437
        %v4612 = vpop.f32.mrb[0].mxu0
        %v4613 = vadd.f32 0.0, %v4612
        %v4614 = vpop.f32.mrb[0].mxu0
        %4615 = vmatprep.mubr.f32.mxu0 0.0
        %4616 = vmatmul.mubr.f32.gmra.mrb[0].mxu0 %v4440
        %v4617 = vpop.f32.mrb[0].mxu0
        %v4618 = vadd.f32 0.0, %v4617
        %v4619 = vpop.f32.mrb[0].mxu0
        %4620 = vmatprep.mubr.f32.mxu0 0.0
        %4621 = vmatmul.mubr.f32.gmra.mrb[0].mxu0 %v4443
        %v4622 = vpop.f32.mrb[0].mxu0
        %v4623 = vadd.f32 0.0, %v4622
        %v4624 = vpop.f32.mrb[0].mxu0
        %4625 = vmatprep.mubr.f32.mxu0 0.0
        %4626 = vmatmul.mubr.f32.gmra.mrb[0].mxu0 %v4446
        %v4627 = vpop.f32.mrb[0].mxu0
        %v4628 = vadd.f32 0.0, %v4627
        %v4629 = vpop.f32.mrb[0].mxu0
        %4630 = vmatprep.mubr.f32.mxu0 0.0
        %4631 = vmatmul.mubr.f32.gmra.mrb[0].mxu0 %v4449
        %v4632 = vpop.f32.mrb[0].mxu0
        %v4633 = vadd.f32 0.0, %v4632
        %v4634 = vpop.f32.mrb[0].mxu0
        %4635 = vmatprep.mubr.f32.mxu0 0.0
        %4636 = vmatmul.mubr.f32.gmra.mrb[0].mxu0 %v4452
        %v4637 = vpop.f32.mrb[0].mxu0
        %v4638 = vadd.f32 0.0, %v4637
        %v4639 = vpop.f32.mrb[0].mxu0
        %4640 = vmatprep.mubr.f32.mxu0 0.0
        %4641 = vmatmul.mubr.f32.gmra.mrb[0].mxu0 %v4455
        %v4642 = vpop.f32.mrb[0].mxu0
        %v4643 = vadd.f32 0.0, %v4642
        %v4644 = vpop.f32.mrb[0].mxu0
        %4645 = vmatprep.mubr.f32.mxu0 0.0
        %4646 = vmatmul.mubr.f32.gmra.mrb[0].mxu0 %v4458
        %v4647 = vpop.f32.mrb[0].mxu0
        %v4648 = vadd.f32 0.0, %v4647
        %v4649 = vpop.f32.mrb[0].mxu0
        %4650 = vmatprep.mubr.f32.mxu0 0.0
        %4651 = vmatmul.mubr.f32.gmra.mrb[0].mxu0 %v4461
        %v4652 = vpop.f32.mrb[0].mxu0
        %v4653 = vadd.f32 0.0, %v4652
        %v4654 = vpop.f32.mrb[0].mxu0
        %4655 = vmatprep.mubr.f32.mxu0 0.0
        %4656 = vmatmul.mubr.f32.gmra.mrb[0].mxu0 %v4464
        %v4657 = vpop.f32.mrb[0].mxu0
        %v4658 = vadd.f32 0.0, %v4657
        %v4659 = vpop.f32.mrb[0].mxu0
        %4660 = vmatprep.mubr.f32.mxu0 0.0
        %4661 = vmatmul.mubr.f32.gmra.mrb[0].mxu0 %v4467
        %v4662 = vpop.f32.mrb[0].mxu0
        %v4663 = vadd.f32 0.0, %v4662
        %v4664 = vpop.f32.mrb[0].mxu0
        %4665 = vmatprep.mubr.f32.mxu0 0.0
        %4666 = vmatmul.mubr.f32.gmra.mrb[0].mxu0 %v4470
        %v4667 = vpop.f32.mrb[0].mxu0
        %v4668 = vadd.f32 0.0, %v4667
        %v4669 = vpop.f32.mrb[0].mxu0
        %4670 = vmatprep.mubr.f32.mxu0 0.0
        %4671 = vmatmul.mubr.f32.gmra.mrb[0].mxu0 %v4473
        %v4672 = vpop.f32.mrb[0].mxu0
        %v4673 = vadd.f32 0.0, %v4672
        %v4674 = vpop.f32.mrb[0].mxu0
        %4675 = vmatprep.mubr.f32.mxu0 0.0
        %4676 = vmatmul.mubr.f32.gmra.mrb[0].mxu0 %v4476
        %v4677 = vpop.f32.mrb[0].mxu0
        %v4678 = vadd.f32 0.0, %v4677
        %v4679 = vpop.f32.mrb[0].mxu0
        %4680 = vmatprep.mubr.f32.mxu0 0.0
        %4681 = vmatmul.mubr.f32.gmra.mrb[0].mxu0 %v4479
        %v4682 = vpop.f32.mrb[0].mxu0
        %v4683 = vadd.f32 0.0, %v4682
        %v4684 = vpop.f32.mrb[0].mxu0
        %4685 = vmatprep.mubr.f32.mxu0 0.0
        %4686 = vmatmul.mubr.f32.gmra.mrb[0].mxu0 %v4482
        %v4687 = vpop.f32.mrb[0].mxu0
        %v4688 = vadd.f32 0.0, %v4687
        %v4689 = vpop.f32.mrb[0].mxu0
        %4690 = vmatprep.mubr.f32.mxu0 0.0
        %4691 = vmatmul.mubr.f32.gmra.mrb[0].mxu0 %v4485
        %v4692 = vpop.f32.mrb[0].mxu0
        %v4693 = vadd.f32 0.0, %v4692
        %v4694 = vpop.f32.mrb[0].mxu0
        %4695 = vmatprep.mubr.f32.mxu0 0.0
        %4696 = vmatmul.mubr.f32.gmra.mrb[0].mxu0 %v4488
        %v4697 = vpop.f32.mrb[0].mxu0
        %v4698 = vadd.f32 0.0, %v4697
        %v4699 = vpop.f32.mrb[0].mxu0
        %4700 = vmatprep.mubr.f32.mxu0 0.0
        %4701 = vmatmul.mubr.f32.gmra.mrb[0].mxu0 %v4491
        %v4702 = vpop.f32.mrb[0].mxu0
        %v4703 = vadd.f32 0.0, %v4702
        %v4704 = vpop.f32.mrb[0].mxu0
        %4705 = vmatprep.mubr.f32.mxu0 0.0
        %4706 = vmatmul.mubr.f32.gmra.mrb[0].mxu0 %v4494
        %v4707 = vpop.f32.mrb[0].mxu0
        %v4708 = vadd.f32 0.0, %v4707
        %v4709 = vpop.f32.mrb[0].mxu0
        %4710 = vmatprep.mubr.f32.mxu0 0.0
        %4711 = vmatmul.mubr.f32.gmra.mrb[0].mxu0 %v4497
        %v4712 = vpop.f32.mrb[0].mxu0
        %v4713 = vadd.f32 0.0, %v4712
        %v4714 = vpop.f32.mrb[0].mxu0
        %4715 = vmatprep.mubr.f32.mxu0 0.0
        %4716 = vmatmul.mubr.f32.gmra.mrb[0].mxu0 %v4500
        %v4717 = vpop.f32.mrb[0].mxu0
        %v4718 = vadd.f32 0.0, %v4717
        %v4719 = vpop.f32.mrb[0].mxu0
        %4720 = vmatprep.mubr.f32.mxu0 0.0
        %4721 = vmatmul.mubr.f32.gmra.mrb[0].mxu0 %v4503
        %v4722 = vpop.f32.mrb[0].mxu0
        %v4723 = vadd.f32 0.0, %v4722
        %v4724 = vpop.f32.mrb[0].mxu0
        %4725 = vmatprep.mubr.f32.mxu0 0.0
        %4726 = vmatmul.mubr.f32.gmra.mrb[0].mxu0 %v4506
        %v4727 = vpop.f32.mrb[0].mxu0
        %v4728 = vadd.f32 0.0, %v4727
        %v4729 = vpop.f32.mrb[0].mxu0
        %4730 = vmatprep.mubr.f32.mxu0 0.0
        %4731 = vmatmul.mubr.f32.gmra.mrb[0].mxu0 %v4509
        %v4732 = vpop.f32.mrb[0].mxu0
        %v4733 = vadd.f32 0.0, %v4732
        %v4734 = vpop.f32.mrb[0].mxu0
        %4735 = vdwg.mxu0
        %v4736 = vadd.f32 %v4346, %v4578
        %v4737 = vadd.f32 %v4347, %v4583
        %v4738 = vadd.f32 %v4348, %v4588
        %v4739 = vadd.f32 %v4349, %v4593
        %v4740 = vadd.f32 %v4350, %v4598
        %v4741 = vadd.f32 %v4351, %v4603
        %v4742 = vadd.f32 %v4352, %v4608
        %v4743 = vadd.f32 %v4353, %v4613
        %v4744 = vadd.f32 %v4354, %v4618
        %v4745 = vadd.f32 %v4355, %v4623
        %v4746 = vadd.f32 %v4356, %v4628
        %v4747 = vadd.f32 %v4357, %v4633
        %v4748 = vadd.f32 %v4358, %v4638
        %v4749 = vadd.f32 %v4359, %v4643
        %v4750 = vadd.f32 %v4360, %v4648
        %v4751 = vadd.f32 %v4361, %v4653
        %v4752 = vadd.f32 %v4362, %v4658
        %v4753 = vadd.f32 %v4363, %v4663
        %v4754 = vadd.f32 %v4364, %v4668
        %v4755 = vadd.f32 %v4365, %v4673
        %v4756 = vadd.f32 %v4366, %v4678
        %v4757 = vadd.f32 %v4367, %v4683
        %v4758 = vadd.f32 %v4368, %v4688
        %v4759 = vadd.f32 %v4369, %v4693
        %v4760 = vadd.f32 %v4370, %v4698
        %v4761 = vadd.f32 %v4371, %v4703
        %v4762 = vadd.f32 %v4372, %v4708
        %v4763 = vadd.f32 %v4373, %v4713
        %v4764 = vadd.f32 %v4374, %v4718
        %v4765 = vadd.f32 %v4375, %v4723
        %v4766 = vadd.f32 %v4376, %v4728
        %v4767 = vadd.f32 %v4377, %v4733
        %v4768 = vld [vmem:[#allocation2 + $0x29] sm:$0xff]
        %v4769 = vld [vmem:[#allocation2 + $0x31] sm:$0xff]
        %v4770 = vld [vmem:[#allocation2 + $0x39] sm:$0xff]
        %v4771 = vld [vmem:[#allocation2 + $0x41] sm:$0xff]
        %v4772 = vld [vmem:[#allocation2 + $0x49] sm:$0xff]
        %v4773 = vld [vmem:[#allocation2 + $0x51] sm:$0xff]
        %v4774 = vld [vmem:[#allocation2 + $0x59] sm:$0xff]
        %v4775 = vld [vmem:[#allocation2 + $0x61] sm:$0xff]
        %v4776 = vld [vmem:[#allocation2 + $0x69] sm:$0xff]
        %v4777 = vld [vmem:[#allocation2 + $0x71] sm:$0xff]
        %v4778 = vld [vmem:[#allocation2 + $0x79] sm:$0xff]
        %v4779 = vld [vmem:[#allocation2 + $0x81] sm:$0xff]
        %v4780 = vld [vmem:[#allocation2 + $0x89] sm:$0xff]
        %v4781 = vld [vmem:[#allocation2 + $0x91] sm:$0xff]
        %v4782 = vld [vmem:[#allocation2 + $0x99] sm:$0xff]
        %v4783 = vld [vmem:[#allocation2 + $0xa1] sm:$0xff]
        %v4784 = vld [vmem:[#allocation2 + $0xa9] sm:$0xff]
        %v4785 = vld [vmem:[#allocation2 + $0xb1] sm:$0xff]
        %v4786 = vld [vmem:[#allocation2 + $0xb9] sm:$0xff]
        %v4787 = vld [vmem:[#allocation2 + $0xc1] sm:$0xff]
        %v4788 = vld [vmem:[#allocation2 + $0xc9] sm:$0xff]
        %v4789 = vld [vmem:[#allocation2 + $0xd1] sm:$0xff]
        %v4790 = vld [vmem:[#allocation2 + $0xd9] sm:$0xff]
        %v4791 = vld [vmem:[#allocation2 + $0xe1] sm:$0xff]
        %v4792 = vld [vmem:[#allocation2 + $0xe9] sm:$0xff]
        %v4793 = vld [vmem:[#allocation2 + $0xf1] sm:$0xff]
        %v4794 = vld [vmem:[#allocation2 + $0xf9] sm:$0xff]
        %v4795 = vld [vmem:[#allocation2 + $0x101] sm:$0xff]
        %v4796 = vld [vmem:[#allocation2 + $0x109] sm:$0xff]
        %v4797 = vld [vmem:[#allocation2 + $0x111] sm:$0xff]
        %v4798 = vld [vmem:[#allocation2 + $0x119] sm:$0xff]
        %v4799 = vld [vmem:[#allocation2 + $0x121] sm:$0xff]
        %v4800 = vsel %vm2300, 0.0, %v4768
        %v4801 = vsel %vm2301, 0.0, %v4769
        %v4802 = vsel %vm2302, 0.0, %v4770
        %v4803 = vsel %vm2303, 0.0, %v4771
        %v4804 = vsel %vm2304, 0.0, %v4772
        %v4805 = vsel %vm2305, 0.0, %v4773
        %v4806 = vsel %vm2306, 0.0, %v4774
        %v4807 = vsel %vm2307, 0.0, %v4775
        %v4808 = vsel %vm2308, 0.0, %v4776
        %v4809 = vsel %vm2309, 0.0, %v4777
        %v4810 = vsel %vm2310, 0.0, %v4778
        %v4811 = vsel %vm2311, 0.0, %v4779
        %v4812 = vsel %vm2312, 0.0, %v4780
        %v4813 = vsel %vm2313, 0.0, %v4781
        %v4814 = vsel %vm2314, 0.0, %v4782
        %v4815 = vsel %vm2315, 0.0, %v4783
        %v4816 = vsel %vm2316, 0.0, %v4784
        %v4817 = vsel %vm2317, 0.0, %v4785
        %v4818 = vsel %vm2318, 0.0, %v4786
        %v4819 = vsel %vm2319, 0.0, %v4787
        %v4820 = vsel %vm2320, 0.0, %v4788
        %v4821 = vsel %vm2321, 0.0, %v4789
        %v4822 = vsel %vm2322, 0.0, %v4790
        %v4823 = vsel %vm2323, 0.0, %v4791
        %v4824 = vsel %vm2324, 0.0, %v4792
        %v4825 = vsel %vm2325, 0.0, %v4793
        %v4826 = vsel %vm2326, 0.0, %v4794
        %v4827 = vsel %vm2327, 0.0, %v4795
        %v4828 = vsel %vm2328, 0.0, %v4796
        %v4829 = vsel %vm2329, 0.0, %v4797
        %v4830 = vsel %vm2330, 0.0, %v4798
        %v4831 = vsel %vm2331, 0.0, %v4799
        %s4832 = scalar_lea.vmem %s2, 256
        %v4833 = vld [vmem:[%s4832] sm:$0xff]
        %v4834 = vld [vmem:[%s4832 + $0x8] sm:$0xff]
        %v4835 = vld [vmem:[%s4832 + $0x10] sm:$0xff]
        %v4836 = vld [vmem:[%s4832 + $0x18] sm:$0xff]
        %v4838 = vsel %vm905, %v4800, 0
        %v4841 = vsel %vm905, %v4801, 0
        %v4844 = vsel %vm905, %v4802, 0
        %v4847 = vsel %vm905, %v4803, 0
        %v4850 = vsel %vm905, %v4804, 0
        %v4853 = vsel %vm905, %v4805, 0
        %v4856 = vsel %vm905, %v4806, 0
        %v4859 = vsel %vm905, %v4807, 0
        %v4862 = vsel %vm905, %v4808, 0
        %v4865 = vsel %vm905, %v4809, 0
        %v4868 = vsel %vm905, %v4810, 0
        %v4871 = vsel %vm905, %v4811, 0
        %v4874 = vsel %vm905, %v4812, 0
        %v4877 = vsel %vm905, %v4813, 0
        %v4880 = vsel %vm905, %v4814, 0
        %v4883 = vsel %vm905, %v4815, 0
        %v4886 = vsel %vm905, %v4816, 0
        %v4889 = vsel %vm905, %v4817, 0
        %v4892 = vsel %vm905, %v4818, 0
        %v4895 = vsel %vm905, %v4819, 0
        %v4898 = vsel %vm905, %v4820, 0
        %v4901 = vsel %vm905, %v4821, 0
        %v4904 = vsel %vm905, %v4822, 0
        %v4907 = vsel %vm905, %v4823, 0
        %v4910 = vsel %vm905, %v4824, 0
        %v4913 = vsel %vm905, %v4825, 0
        %v4916 = vsel %vm905, %v4826, 0
        %v4919 = vsel %vm905, %v4827, 0
        %v4922 = vsel %vm905, %v4828, 0
        %v4925 = vsel %vm905, %v4829, 0
        %v4928 = vsel %vm905, %v4830, 0
        %v4931 = vsel %vm905, %v4831, 0
        %4933 = vmatprep.subr.mxu0 0.0
        %4934 = vmatpush1.msra.mxu0 %v4833
        %4935 = vmatprep.subr.mxu0 0.0
        %4936 = vmatpush1.msra.mxu0 %v4834
        %4937 = vmatprep.subr.mxu0 0.0
        %4938 = vmatpush1.msra.mxu0 %v4835
        %4939 = vmatprep.subr.mxu0 0.0
        %4940 = vmatpush1.msra.mxu0 %v4836
        %4941 = vmatprep.subr.mxu0 0.0
        %4942 = vmatpush1.msra.mxu0 0.0
        %4943 = vmatprep.subr.mxu0 0.0
        %4944 = vmatpush1.msra.mxu0 0.0
        %4945 = vmatprep.subr.mxu0 0.0
        %4946 = vmatpush1.msra.mxu0 0.0
        %4947 = vmatprep.subr.mxu0 0.0
        %4948 = vmatpush1.msra.mxu0 0.0
        %4949 = vmatprep.subr.mxu0 0.0
        %4950 = vmatpush1.msra.mxu0 0.0
        %4951 = vmatprep.subr.mxu0 0.0
        %4952 = vmatpush1.msra.mxu0 0.0
        %4953 = vmatprep.subr.mxu0 0.0
        %4954 = vmatpush1.msra.mxu0 0.0
        %4955 = vmatprep.subr.mxu0 0.0
        %4956 = vmatpush1.msra.mxu0 0.0
        %4957 = vmatprep.subr.mxu0 0.0
        %4958 = vmatpush1.msra.mxu0 0.0
        %4959 = vmatprep.subr.mxu0 0.0
        %4960 = vmatpush1.msra.mxu0 0.0
        %4961 = vmatprep.subr.mxu0 0.0
        %4962 = vmatpush1.msra.mxu0 0.0
        %4963 = vmatprep.subr.mxu0 0.0
        %4964 = vmatpush1.msra.mxu0 0.0
        %4965 = vmatprep.subr.mxu0 0.0
        %4966 = vmatpush1.msra.mxu0 0.0
        %4967 = vmatprep.subr.mxu0 0.0
        %4968 = vmatpush1.msra.mxu0 0.0
        %4969 = vmatprep.subr.mxu0 0.0
        %4970 = vmatpush1.msra.mxu0 0.0
        %4971 = vmatprep.subr.mxu0 0.0
        %4972 = vmatpush1.msra.mxu0 0.0
        %4973 = vmatprep.subr.mxu0 0.0
        %4974 = vmatpush1.msra.mxu0 0.0
        %4975 = vmatprep.subr.mxu0 0.0
        %4976 = vmatpush1.msra.mxu0 0.0
        %4977 = vmatprep.subr.mxu0 0.0
        %4978 = vmatpush1.msra.mxu0 0.0
        %4979 = vmatprep.subr.mxu0 0.0
        %4980 = vmatpush1.msra.mxu0 0.0
        %4981 = vmatprep.subr.mxu0 0.0
        %4982 = vmatpush1.msra.mxu0 0.0
        %4983 = vmatprep.subr.mxu0 0.0
        %4984 = vmatpush1.msra.mxu0 0.0
        %4985 = vmatprep.subr.mxu0 0.0
        %4986 = vmatpush1.msra.mxu0 0.0
        %4987 = vmatprep.subr.mxu0 0.0
        %4988 = vmatpush1.msra.mxu0 0.0
        %4989 = vmatprep.subr.mxu0 0.0
        %4990 = vmatpush1.msra.mxu0 0.0
        %4991 = vmatprep.subr.mxu0 0.0
        %4992 = vmatpush1.msra.mxu0 0.0
        %4993 = vmatprep.subr.mxu0 0.0
        %4994 = vmatpush1.msra.mxu0 0.0
        %4995 = vmatprep.subr.mxu0 0.0
        %4996 = vmatpush1.msra.mxu0 0.0
        %4997 = vmatprep.mubr.f32.mxu0 0.0
        %4998 = vmatmul.mubr.f32.gmra.mrb[0].mxu0 %v4838
        %v4999 = vpop.f32.mrb[0].mxu0
        %v5000 = vadd.f32 0.0, %v4999
        %v5001 = vpop.f32.mrb[0].mxu0
        %5002 = vmatprep.mubr.f32.mxu0 0.0
        %5003 = vmatmul.mubr.f32.gmra.mrb[0].mxu0 %v4841
        %v5004 = vpop.f32.mrb[0].mxu0
        %v5005 = vadd.f32 0.0, %v5004
        %v5006 = vpop.f32.mrb[0].mxu0
        %5007 = vmatprep.mubr.f32.mxu0 0.0
        %5008 = vmatmul.mubr.f32.gmra.mrb[0].mxu0 %v4844
        %v5009 = vpop.f32.mrb[0].mxu0
        %v5010 = vadd.f32 0.0, %v5009
        %v5011 = vpop.f32.mrb[0].mxu0
        %5012 = vmatprep.mubr.f32.mxu0 0.0
        %5013 = vmatmul.mubr.f32.gmra.mrb[0].mxu0 %v4847
        %v5014 = vpop.f32.mrb[0].mxu0
        %v5015 = vadd.f32 0.0, %v5014
        %v5016 = vpop.f32.mrb[0].mxu0
        %5017 = vmatprep.mubr.f32.mxu0 0.0
        %5018 = vmatmul.mubr.f32.gmra.mrb[0].mxu0 %v4850
        %v5019 = vpop.f32.mrb[0].mxu0
        %v5020 = vadd.f32 0.0, %v5019
        %v5021 = vpop.f32.mrb[0].mxu0
        %5022 = vmatprep.mubr.f32.mxu0 0.0
        %5023 = vmatmul.mubr.f32.gmra.mrb[0].mxu0 %v4853
        %v5024 = vpop.f32.mrb[0].mxu0
        %v5025 = vadd.f32 0.0, %v5024
        %v5026 = vpop.f32.mrb[0].mxu0
        %5027 = vmatprep.mubr.f32.mxu0 0.0
        %5028 = vmatmul.mubr.f32.gmra.mrb[0].mxu0 %v4856
        %v5029 = vpop.f32.mrb[0].mxu0
        %v5030 = vadd.f32 0.0, %v5029
        %v5031 = vpop.f32.mrb[0].mxu0
        %5032 = vmatprep.mubr.f32.mxu0 0.0
        %5033 = vmatmul.mubr.f32.gmra.mrb[0].mxu0 %v4859
        %v5034 = vpop.f32.mrb[0].mxu0
        %v5035 = vadd.f32 0.0, %v5034
        %v5036 = vpop.f32.mrb[0].mxu0
        %5037 = vmatprep.mubr.f32.mxu0 0.0
        %5038 = vmatmul.mubr.f32.gmra.mrb[0].mxu0 %v4862
        %v5039 = vpop.f32.mrb[0].mxu0
        %v5040 = vadd.f32 0.0, %v5039
        %v5041 = vpop.f32.mrb[0].mxu0
        %5042 = vmatprep.mubr.f32.mxu0 0.0
        %5043 = vmatmul.mubr.f32.gmra.mrb[0].mxu0 %v4865
        %v5044 = vpop.f32.mrb[0].mxu0
        %v5045 = vadd.f32 0.0, %v5044
        %v5046 = vpop.f32.mrb[0].mxu0
        %5047 = vmatprep.mubr.f32.mxu0 0.0
        %5048 = vmatmul.mubr.f32.gmra.mrb[0].mxu0 %v4868
        %v5049 = vpop.f32.mrb[0].mxu0
        %v5050 = vadd.f32 0.0, %v5049
        %v5051 = vpop.f32.mrb[0].mxu0
        %5052 = vmatprep.mubr.f32.mxu0 0.0
        %5053 = vmatmul.mubr.f32.gmra.mrb[0].mxu0 %v4871
        %v5054 = vpop.f32.mrb[0].mxu0
        %v5055 = vadd.f32 0.0, %v5054
        %v5056 = vpop.f32.mrb[0].mxu0
        %5057 = vmatprep.mubr.f32.mxu0 0.0
        %5058 = vmatmul.mubr.f32.gmra.mrb[0].mxu0 %v4874
        %v5059 = vpop.f32.mrb[0].mxu0
        %v5060 = vadd.f32 0.0, %v5059
        %v5061 = vpop.f32.mrb[0].mxu0
        %5062 = vmatprep.mubr.f32.mxu0 0.0
        %5063 = vmatmul.mubr.f32.gmra.mrb[0].mxu0 %v4877
        %v5064 = vpop.f32.mrb[0].mxu0
        %v5065 = vadd.f32 0.0, %v5064
        %v5066 = vpop.f32.mrb[0].mxu0
        %5067 = vmatprep.mubr.f32.mxu0 0.0
        %5068 = vmatmul.mubr.f32.gmra.mrb[0].mxu0 %v4880
        %v5069 = vpop.f32.mrb[0].mxu0
        %v5070 = vadd.f32 0.0, %v5069
        %v5071 = vpop.f32.mrb[0].mxu0
        %5072 = vmatprep.mubr.f32.mxu0 0.0
        %5073 = vmatmul.mubr.f32.gmra.mrb[0].mxu0 %v4883
        %v5074 = vpop.f32.mrb[0].mxu0
        %v5075 = vadd.f32 0.0, %v5074
        %v5076 = vpop.f32.mrb[0].mxu0
        %5077 = vmatprep.mubr.f32.mxu0 0.0
        %5078 = vmatmul.mubr.f32.gmra.mrb[0].mxu0 %v4886
        %v5079 = vpop.f32.mrb[0].mxu0
        %v5080 = vadd.f32 0.0, %v5079
        %v5081 = vpop.f32.mrb[0].mxu0
        %5082 = vmatprep.mubr.f32.mxu0 0.0
        %5083 = vmatmul.mubr.f32.gmra.mrb[0].mxu0 %v4889
        %v5084 = vpop.f32.mrb[0].mxu0
        %v5085 = vadd.f32 0.0, %v5084
        %v5086 = vpop.f32.mrb[0].mxu0
        %5087 = vmatprep.mubr.f32.mxu0 0.0
        %5088 = vmatmul.mubr.f32.gmra.mrb[0].mxu0 %v4892
        %v5089 = vpop.f32.mrb[0].mxu0
        %v5090 = vadd.f32 0.0, %v5089
        %v5091 = vpop.f32.mrb[0].mxu0
        %5092 = vmatprep.mubr.f32.mxu0 0.0
        %5093 = vmatmul.mubr.f32.gmra.mrb[0].mxu0 %v4895
        %v5094 = vpop.f32.mrb[0].mxu0
        %v5095 = vadd.f32 0.0, %v5094
        %v5096 = vpop.f32.mrb[0].mxu0
        %5097 = vmatprep.mubr.f32.mxu0 0.0
        %5098 = vmatmul.mubr.f32.gmra.mrb[0].mxu0 %v4898
        %v5099 = vpop.f32.mrb[0].mxu0
        %v5100 = vadd.f32 0.0, %v5099
        %v5101 = vpop.f32.mrb[0].mxu0
        %5102 = vmatprep.mubr.f32.mxu0 0.0
        %5103 = vmatmul.mubr.f32.gmra.mrb[0].mxu0 %v4901
        %v5104 = vpop.f32.mrb[0].mxu0
        %v5105 = vadd.f32 0.0, %v5104
        %v5106 = vpop.f32.mrb[0].mxu0
        %5107 = vmatprep.mubr.f32.mxu0 0.0
        %5108 = vmatmul.mubr.f32.gmra.mrb[0].mxu0 %v4904
        %v5109 = vpop.f32.mrb[0].mxu0
        %v5110 = vadd.f32 0.0, %v5109
        %v5111 = vpop.f32.mrb[0].mxu0
        %5112 = vmatprep.mubr.f32.mxu0 0.0
        %5113 = vmatmul.mubr.f32.gmra.mrb[0].mxu0 %v4907
        %v5114 = vpop.f32.mrb[0].mxu0
        %v5115 = vadd.f32 0.0, %v5114
        %v5116 = vpop.f32.mrb[0].mxu0
        %5117 = vmatprep.mubr.f32.mxu0 0.0
        %5118 = vmatmul.mubr.f32.gmra.mrb[0].mxu0 %v4910
        %v5119 = vpop.f32.mrb[0].mxu0
        %v5120 = vadd.f32 0.0, %v5119
        %v5121 = vpop.f32.mrb[0].mxu0
        %5122 = vmatprep.mubr.f32.mxu0 0.0
        %5123 = vmatmul.mubr.f32.gmra.mrb[0].mxu0 %v4913
        %v5124 = vpop.f32.mrb[0].mxu0
        %v5125 = vadd.f32 0.0, %v5124
        %v5126 = vpop.f32.mrb[0].mxu0
        %5127 = vmatprep.mubr.f32.mxu0 0.0
        %5128 = vmatmul.mubr.f32.gmra.mrb[0].mxu0 %v4916
        %v5129 = vpop.f32.mrb[0].mxu0
        %v5130 = vadd.f32 0.0, %v5129
        %v5131 = vpop.f32.mrb[0].mxu0
        %5132 = vmatprep.mubr.f32.mxu0 0.0
        %5133 = vmatmul.mubr.f32.gmra.mrb[0].mxu0 %v4919
        %v5134 = vpop.f32.mrb[0].mxu0
        %v5135 = vadd.f32 0.0, %v5134
        %v5136 = vpop.f32.mrb[0].mxu0
        %5137 = vmatprep.mubr.f32.mxu0 0.0
        %5138 = vmatmul.mubr.f32.gmra.mrb[0].mxu0 %v4922
        %v5139 = vpop.f32.mrb[0].mxu0
        %v5140 = vadd.f32 0.0, %v5139
        %v5141 = vpop.f32.mrb[0].mxu0
        %5142 = vmatprep.mubr.f32.mxu0 0.0
        %5143 = vmatmul.mubr.f32.gmra.mrb[0].mxu0 %v4925
        %v5144 = vpop.f32.mrb[0].mxu0
        %v5145 = vadd.f32 0.0, %v5144
        %v5146 = vpop.f32.mrb[0].mxu0
        %5147 = vmatprep.mubr.f32.mxu0 0.0
        %5148 = vmatmul.mubr.f32.gmra.mrb[0].mxu0 %v4928
        %v5149 = vpop.f32.mrb[0].mxu0
        %v5150 = vadd.f32 0.0, %v5149
        %v5151 = vpop.f32.mrb[0].mxu0
        %5152 = vmatprep.mubr.f32.mxu0 0.0
        %5153 = vmatmul.mubr.f32.gmra.mrb[0].mxu0 %v4931
        %v5154 = vpop.f32.mrb[0].mxu0
        %v5155 = vadd.f32 0.0, %v5154
        %v5156 = vpop.f32.mrb[0].mxu0
        %5157 = vdwg.mxu0
        %v5158 = vadd.f32 %v4736, %v5000
        %v5159 = vadd.f32 %v4737, %v5005
        %v5160 = vadd.f32 %v4738, %v5010
        %v5161 = vadd.f32 %v4739, %v5015
        %v5162 = vadd.f32 %v4740, %v5020
        %v5163 = vadd.f32 %v4741, %v5025
        %v5164 = vadd.f32 %v4742, %v5030
        %v5165 = vadd.f32 %v4743, %v5035
        %v5166 = vadd.f32 %v4744, %v5040
        %v5167 = vadd.f32 %v4745, %v5045
        %v5168 = vadd.f32 %v4746, %v5050
        %v5169 = vadd.f32 %v4747, %v5055
        %v5170 = vadd.f32 %v4748, %v5060
        %v5171 = vadd.f32 %v4749, %v5065
        %v5172 = vadd.f32 %v4750, %v5070
        %v5173 = vadd.f32 %v4751, %v5075
        %v5174 = vadd.f32 %v4752, %v5080
        %v5175 = vadd.f32 %v4753, %v5085
        %v5176 = vadd.f32 %v4754, %v5090
        %v5177 = vadd.f32 %v4755, %v5095
        %v5178 = vadd.f32 %v4756, %v5100
        %v5179 = vadd.f32 %v4757, %v5105
        %v5180 = vadd.f32 %v4758, %v5110
        %v5181 = vadd.f32 %v4759, %v5115
        %v5182 = vadd.f32 %v4760, %v5120
        %v5183 = vadd.f32 %v4761, %v5125
        %v5184 = vadd.f32 %v4762, %v5130
        %v5185 = vadd.f32 %v4763, %v5135
        %v5186 = vadd.f32 %v4764, %v5140
        %v5187 = vadd.f32 %v4765, %v5145
        %v5188 = vadd.f32 %v4766, %v5150
        %v5189 = vadd.f32 %v4767, %v5155
        %v5190 = vld [vmem:[%s7] sm:$0x1]
        %v5192 = vlaneseq
        %v5193 = vshrl.u32 %v5192, 7
        %v5194 = vsub.s32 0, %v5193
        %v5195 = vrot.slane %v5190, %v5194
        %v5197 = vmul.f32 %v5158, %v5195
        %v5198 = vmul.f32 %v5159, %v5195
        %v5199 = vmul.f32 %v5160, %v5195
        %v5200 = vmul.f32 %v5161, %v5195
        %v5201 = vmul.f32 %v5162, %v5195
        %v5202 = vmul.f32 %v5163, %v5195
        %v5203 = vmul.f32 %v5164, %v5195
        %v5204 = vmul.f32 %v5165, %v5195
        %v5205 = vmul.f32 %v5166, %v5195
        %v5206 = vmul.f32 %v5167, %v5195
        %v5207 = vmul.f32 %v5168, %v5195
        %v5208 = vmul.f32 %v5169, %v5195
        %v5209 = vmul.f32 %v5170, %v5195
        %v5210 = vmul.f32 %v5171, %v5195
        %v5211 = vmul.f32 %v5172, %v5195
        %v5212 = vmul.f32 %v5173, %v5195
        %v5213 = vmul.f32 %v5174, %v5195
        %v5214 = vmul.f32 %v5175, %v5195
        %v5215 = vmul.f32 %v5176, %v5195
        %v5216 = vmul.f32 %v5177, %v5195
        %v5217 = vmul.f32 %v5178, %v5195
        %v5218 = vmul.f32 %v5179, %v5195
        %v5219 = vmul.f32 %v5180, %v5195
        %v5220 = vmul.f32 %v5181, %v5195
        %v5221 = vmul.f32 %v5182, %v5195
        %v5222 = vmul.f32 %v5183, %v5195
        %v5223 = vmul.f32 %v5184, %v5195
        %v5224 = vmul.f32 %v5185, %v5195
        %v5225 = vmul.f32 %v5186, %v5195
        %v5226 = vmul.f32 %v5187, %v5195
        %v5227 = vmul.f32 %v5188, %v5195
        %v5228 = vmul.f32 %v5189, %v5195
        %v5229 = vld [vmem:[%s8] sm:$0x1]
        %v5231 = vlaneseq
        %v5232 = vshrl.u32 %v5231, 7
        %v5233 = vsub.s32 0, %v5232
        %v5234 = vrot.slane %v5229, %v5233
        %v5236 = vadd.f32 %v5197, %v5234
        %v5237 = vadd.f32 %v5198, %v5234
        %v5238 = vadd.f32 %v5199, %v5234
        %v5239 = vadd.f32 %v5200, %v5234
        %v5240 = vadd.f32 %v5201, %v5234
        %v5241 = vadd.f32 %v5202, %v5234
        %v5242 = vadd.f32 %v5203, %v5234
        %v5243 = vadd.f32 %v5204, %v5234
        %v5244 = vadd.f32 %v5205, %v5234
        %v5245 = vadd.f32 %v5206, %v5234
        %v5246 = vadd.f32 %v5207, %v5234
        %v5247 = vadd.f32 %v5208, %v5234
        %v5248 = vadd.f32 %v5209, %v5234
        %v5249 = vadd.f32 %v5210, %v5234
        %v5250 = vadd.f32 %v5211, %v5234
        %v5251 = vadd.f32 %v5212, %v5234
        %v5252 = vadd.f32 %v5213, %v5234
        %v5253 = vadd.f32 %v5214, %v5234
        %v5254 = vadd.f32 %v5215, %v5234
        %v5255 = vadd.f32 %v5216, %v5234
        %v5256 = vadd.f32 %v5217, %v5234
        %v5257 = vadd.f32 %v5218, %v5234
        %v5258 = vadd.f32 %v5219, %v5234
        %v5259 = vadd.f32 %v5220, %v5234
        %v5260 = vadd.f32 %v5221, %v5234
        %v5261 = vadd.f32 %v5222, %v5234
        %v5262 = vadd.f32 %v5223, %v5234
        %v5263 = vadd.f32 %v5224, %v5234
        %v5264 = vadd.f32 %v5225, %v5234
        %v5265 = vadd.f32 %v5226, %v5234
        %v5266 = vadd.f32 %v5227, %v5234
        %v5267 = vadd.f32 %v5228, %v5234
        %v5268 = vmax.f32 %v5236, 0.0
        %v5269 = vmax.f32 %v5237, 0.0
        %v5270 = vmax.f32 %v5238, 0.0
        %v5271 = vmax.f32 %v5239, 0.0
        %v5272 = vmax.f32 %v5240, 0.0
        %v5273 = vmax.f32 %v5241, 0.0
        %v5274 = vmax.f32 %v5242, 0.0
        %v5275 = vmax.f32 %v5243, 0.0
        %v5276 = vmax.f32 %v5244, 0.0
        %v5277 = vmax.f32 %v5245, 0.0
        %v5278 = vmax.f32 %v5246, 0.0
        %v5279 = vmax.f32 %v5247, 0.0
        %v5280 = vmax.f32 %v5248, 0.0
        %v5281 = vmax.f32 %v5249, 0.0
        %v5282 = vmax.f32 %v5250, 0.0
        %v5283 = vmax.f32 %v5251, 0.0
        %v5284 = vmax.f32 %v5252, 0.0
        %v5285 = vmax.f32 %v5253, 0.0
        %v5286 = vmax.f32 %v5254, 0.0
        %v5287 = vmax.f32 %v5255, 0.0
        %v5288 = vmax.f32 %v5256, 0.0
        %v5289 = vmax.f32 %v5257, 0.0
        %v5290 = vmax.f32 %v5258, 0.0
        %v5291 = vmax.f32 %v5259, 0.0
        %v5292 = vmax.f32 %v5260, 0.0
        %v5293 = vmax.f32 %v5261, 0.0
        %v5294 = vmax.f32 %v5262, 0.0
        %v5295 = vmax.f32 %v5263, 0.0
        %v5296 = vmax.f32 %v5264, 0.0
        %v5297 = vmax.f32 %v5265, 0.0
        %v5298 = vmax.f32 %v5266, 0.0
        %v5299 = vmax.f32 %v5267, 0.0
        %v5300 = vld [vmem:[%s3] sm:$0xff]
        %v5301 = vld [vmem:[%s3 + $0x8] sm:$0xff]
        %v5302 = vld [vmem:[%s3 + $0x10] sm:$0xff]
        %v5303 = vld [vmem:[%s3 + $0x18] sm:$0xff]
        %v5305 = vsel %vm905, %v5268, 0
        %v5308 = vsel %vm905, %v5269, 0
        %v5311 = vsel %vm905, %v5270, 0
        %v5314 = vsel %vm905, %v5271, 0
        %v5317 = vsel %vm905, %v5272, 0
        %v5320 = vsel %vm905, %v5273, 0
        %v5323 = vsel %vm905, %v5274, 0
        %v5326 = vsel %vm905, %v5275, 0
        %v5329 = vsel %vm905, %v5276, 0
        %v5332 = vsel %vm905, %v5277, 0
        %v5335 = vsel %vm905, %v5278, 0
        %v5338 = vsel %vm905, %v5279, 0
        %v5341 = vsel %vm905, %v5280, 0
        %v5344 = vsel %vm905, %v5281, 0
        %v5347 = vsel %vm905, %v5282, 0
        %v5350 = vsel %vm905, %v5283, 0
        %v5353 = vsel %vm905, %v5284, 0
        %v5356 = vsel %vm905, %v5285, 0
        %v5359 = vsel %vm905, %v5286, 0
        %v5362 = vsel %vm905, %v5287, 0
        %v5365 = vsel %vm905, %v5288, 0
        %v5368 = vsel %vm905, %v5289, 0
        %v5371 = vsel %vm905, %v5290, 0
        %v5374 = vsel %vm905, %v5291, 0
        %v5377 = vsel %vm905, %v5292, 0
        %v5380 = vsel %vm905, %v5293, 0
        %v5383 = vsel %vm905, %v5294, 0
        %v5386 = vsel %vm905, %v5295, 0
        %v5389 = vsel %vm905, %v5296, 0
        %v5392 = vsel %vm905, %v5297, 0
        %v5395 = vsel %vm905, %v5298, 0
        %v5398 = vsel %vm905, %v5299, 0
        %5400 = vmatprep.subr.mxu0 0.0
        %5401 = vmatpush1.msra.mxu0 %v5300
        %5402 = vmatprep.subr.mxu0 0.0
        %5403 = vmatpush1.msra.mxu0 %v5301
        %5404 = vmatprep.subr.mxu0 0.0
        %5405 = vmatpush1.msra.mxu0 %v5302
        %5406 = vmatprep.subr.mxu0 0.0
        %5407 = vmatpush1.msra.mxu0 %v5303
        %5408 = vmatprep.subr.mxu0 0.0
        %5409 = vmatpush1.msra.mxu0 0.0
        %5410 = vmatprep.subr.mxu0 0.0
        %5411 = vmatpush1.msra.mxu0 0.0
        %5412 = vmatprep.subr.mxu0 0.0
        %5413 = vmatpush1.msra.mxu0 0.0
        %5414 = vmatprep.subr.mxu0 0.0
        %5415 = vmatpush1.msra.mxu0 0.0
        %5416 = vmatprep.subr.mxu0 0.0
        %5417 = vmatpush1.msra.mxu0 0.0
        %5418 = vmatprep.subr.mxu0 0.0
        %5419 = vmatpush1.msra.mxu0 0.0
        %5420 = vmatprep.subr.mxu0 0.0
        %5421 = vmatpush1.msra.mxu0 0.0
        %5422 = vmatprep.subr.mxu0 0.0
        %5423 = vmatpush1.msra.mxu0 0.0
        %5424 = vmatprep.subr.mxu0 0.0
        %5425 = vmatpush1.msra.mxu0 0.0
        %5426 = vmatprep.subr.mxu0 0.0
        %5427 = vmatpush1.msra.mxu0 0.0
        %5428 = vmatprep.subr.mxu0 0.0
        %5429 = vmatpush1.msra.mxu0 0.0
        %5430 = vmatprep.subr.mxu0 0.0
        %5431 = vmatpush1.msra.mxu0 0.0
        %5432 = vmatprep.subr.mxu0 0.0
        %5433 = vmatpush1.msra.mxu0 0.0
        %5434 = vmatprep.subr.mxu0 0.0
        %5435 = vmatpush1.msra.mxu0 0.0
        %5436 = vmatprep.subr.mxu0 0.0
        %5437 = vmatpush1.msra.mxu0 0.0
        %5438 = vmatprep.subr.mxu0 0.0
        %5439 = vmatpush1.msra.mxu0 0.0
        %5440 = vmatprep.subr.mxu0 0.0
        %5441 = vmatpush1.msra.mxu0 0.0
        %5442 = vmatprep.subr.mxu0 0.0
        %5443 = vmatpush1.msra.mxu0 0.0
        %5444 = vmatprep.subr.mxu0 0.0
        %5445 = vmatpush1.msra.mxu0 0.0
        %5446 = vmatprep.subr.mxu0 0.0
        %5447 = vmatpush1.msra.mxu0 0.0
        %5448 = vmatprep.subr.mxu0 0.0
        %5449 = vmatpush1.msra.mxu0 0.0
        %5450 = vmatprep.subr.mxu0 0.0
        %5451 = vmatpush1.msra.mxu0 0.0
        %5452 = vmatprep.subr.mxu0 0.0
        %5453 = vmatpush1.msra.mxu0 0.0
        %5454 = vmatprep.subr.mxu0 0.0
        %5455 = vmatpush1.msra.mxu0 0.0
        %5456 = vmatprep.subr.mxu0 0.0
        %5457 = vmatpush1.msra.mxu0 0.0
        %5458 = vmatprep.subr.mxu0 0.0
        %5459 = vmatpush1.msra.mxu0 0.0
        %5460 = vmatprep.subr.mxu0 0.0
        %5461 = vmatpush1.msra.mxu0 0.0
        %5462 = vmatprep.subr.mxu0 0.0
        %5463 = vmatpush1.msra.mxu0 0.0
        %5464 = vmatprep.mubr.f32.mxu0 0.0
        %5465 = vmatmul.mubr.f32.gmra.mrb[0].mxu0 %v5305
        %v5466 = vpop.f32.mrb[0].mxu0
        %v5467 = vadd.f32 0.0, %v5466
        %v5468 = vpop.f32.mrb[0].mxu0
        %5469 = vmatprep.mubr.f32.mxu0 0.0
        %5470 = vmatmul.mubr.f32.gmra.mrb[0].mxu0 %v5308
        %v5471 = vpop.f32.mrb[0].mxu0
        %v5472 = vadd.f32 0.0, %v5471
        %v5473 = vpop.f32.mrb[0].mxu0
        %5474 = vmatprep.mubr.f32.mxu0 0.0
        %5475 = vmatmul.mubr.f32.gmra.mrb[0].mxu0 %v5311
        %v5476 = vpop.f32.mrb[0].mxu0
        %v5477 = vadd.f32 0.0, %v5476
        %v5478 = vpop.f32.mrb[0].mxu0
        %5479 = vmatprep.mubr.f32.mxu0 0.0
        %5480 = vmatmul.mubr.f32.gmra.mrb[0].mxu0 %v5314
        %v5481 = vpop.f32.mrb[0].mxu0
        %v5482 = vadd.f32 0.0, %v5481
        %v5483 = vpop.f32.mrb[0].mxu0
        %5484 = vmatprep.mubr.f32.mxu0 0.0
        %5485 = vmatmul.mubr.f32.gmra.mrb[0].mxu0 %v5317
        %v5486 = vpop.f32.mrb[0].mxu0
        %v5487 = vadd.f32 0.0, %v5486
        %v5488 = vpop.f32.mrb[0].mxu0
        %5489 = vmatprep.mubr.f32.mxu0 0.0
        %5490 = vmatmul.mubr.f32.gmra.mrb[0].mxu0 %v5320
        %v5491 = vpop.f32.mrb[0].mxu0
        %v5492 = vadd.f32 0.0, %v5491
        %v5493 = vpop.f32.mrb[0].mxu0
        %5494 = vmatprep.mubr.f32.mxu0 0.0
        %5495 = vmatmul.mubr.f32.gmra.mrb[0].mxu0 %v5323
        %v5496 = vpop.f32.mrb[0].mxu0
        %v5497 = vadd.f32 0.0, %v5496
        %v5498 = vpop.f32.mrb[0].mxu0
        %5499 = vmatprep.mubr.f32.mxu0 0.0
        %5500 = vmatmul.mubr.f32.gmra.mrb[0].mxu0 %v5326
        %v5501 = vpop.f32.mrb[0].mxu0
        %v5502 = vadd.f32 0.0, %v5501
        %v5503 = vpop.f32.mrb[0].mxu0
        %5504 = vmatprep.mubr.f32.mxu0 0.0
        %5505 = vmatmul.mubr.f32.gmra.mrb[0].mxu0 %v5329
        %v5506 = vpop.f32.mrb[0].mxu0
        %v5507 = vadd.f32 0.0, %v5506
        %v5508 = vpop.f32.mrb[0].mxu0
        %5509 = vmatprep.mubr.f32.mxu0 0.0
        %5510 = vmatmul.mubr.f32.gmra.mrb[0].mxu0 %v5332
        %v5511 = vpop.f32.mrb[0].mxu0
        %v5512 = vadd.f32 0.0, %v5511
        %v5513 = vpop.f32.mrb[0].mxu0
        %5514 = vmatprep.mubr.f32.mxu0 0.0
        %5515 = vmatmul.mubr.f32.gmra.mrb[0].mxu0 %v5335
        %v5516 = vpop.f32.mrb[0].mxu0
        %v5517 = vadd.f32 0.0, %v5516
        %v5518 = vpop.f32.mrb[0].mxu0
        %5519 = vmatprep.mubr.f32.mxu0 0.0
        %5520 = vmatmul.mubr.f32.gmra.mrb[0].mxu0 %v5338
        %v5521 = vpop.f32.mrb[0].mxu0
        %v5522 = vadd.f32 0.0, %v5521
        %v5523 = vpop.f32.mrb[0].mxu0
        %5524 = vmatprep.mubr.f32.mxu0 0.0
        %5525 = vmatmul.mubr.f32.gmra.mrb[0].mxu0 %v5341
        %v5526 = vpop.f32.mrb[0].mxu0
        %v5527 = vadd.f32 0.0, %v5526
        %v5528 = vpop.f32.mrb[0].mxu0
        %5529 = vmatprep.mubr.f32.mxu0 0.0
        %5530 = vmatmul.mubr.f32.gmra.mrb[0].mxu0 %v5344
        %v5531 = vpop.f32.mrb[0].mxu0
        %v5532 = vadd.f32 0.0, %v5531
        %v5533 = vpop.f32.mrb[0].mxu0
        %5534 = vmatprep.mubr.f32.mxu0 0.0
        %5535 = vmatmul.mubr.f32.gmra.mrb[0].mxu0 %v5347
        %v5536 = vpop.f32.mrb[0].mxu0
        %v5537 = vadd.f32 0.0, %v5536
        %v5538 = vpop.f32.mrb[0].mxu0
        %5539 = vmatprep.mubr.f32.mxu0 0.0
        %5540 = vmatmul.mubr.f32.gmra.mrb[0].mxu0 %v5350
        %v5541 = vpop.f32.mrb[0].mxu0
        %v5542 = vadd.f32 0.0, %v5541
        %v5543 = vpop.f32.mrb[0].mxu0
        %5544 = vmatprep.mubr.f32.mxu0 0.0
        %5545 = vmatmul.mubr.f32.gmra.mrb[0].mxu0 %v5353
        %v5546 = vpop.f32.mrb[0].mxu0
        %v5547 = vadd.f32 0.0, %v5546
        %v5548 = vpop.f32.mrb[0].mxu0
        %5549 = vmatprep.mubr.f32.mxu0 0.0
        %5550 = vmatmul.mubr.f32.gmra.mrb[0].mxu0 %v5356
        %v5551 = vpop.f32.mrb[0].mxu0
        %v5552 = vadd.f32 0.0, %v5551
        %v5553 = vpop.f32.mrb[0].mxu0
        %5554 = vmatprep.mubr.f32.mxu0 0.0
        %5555 = vmatmul.mubr.f32.gmra.mrb[0].mxu0 %v5359
        %v5556 = vpop.f32.mrb[0].mxu0
        %v5557 = vadd.f32 0.0, %v5556
        %v5558 = vpop.f32.mrb[0].mxu0
        %5559 = vmatprep.mubr.f32.mxu0 0.0
        %5560 = vmatmul.mubr.f32.gmra.mrb[0].mxu0 %v5362
        %v5561 = vpop.f32.mrb[0].mxu0
        %v5562 = vadd.f32 0.0, %v5561
        %v5563 = vpop.f32.mrb[0].mxu0
        %5564 = vmatprep.mubr.f32.mxu0 0.0
        %5565 = vmatmul.mubr.f32.gmra.mrb[0].mxu0 %v5365
        %v5566 = vpop.f32.mrb[0].mxu0
        %v5567 = vadd.f32 0.0, %v5566
        %v5568 = vpop.f32.mrb[0].mxu0
        %5569 = vmatprep.mubr.f32.mxu0 0.0
        %5570 = vmatmul.mubr.f32.gmra.mrb[0].mxu0 %v5368
        %v5571 = vpop.f32.mrb[0].mxu0
        %v5572 = vadd.f32 0.0, %v5571
        %v5573 = vpop.f32.mrb[0].mxu0
        %5574 = vmatprep.mubr.f32.mxu0 0.0
        %5575 = vmatmul.mubr.f32.gmra.mrb[0].mxu0 %v5371
        %v5576 = vpop.f32.mrb[0].mxu0
        %v5577 = vadd.f32 0.0, %v5576
        %v5578 = vpop.f32.mrb[0].mxu0
        %5579 = vmatprep.mubr.f32.mxu0 0.0
        %5580 = vmatmul.mubr.f32.gmra.mrb[0].mxu0 %v5374
        %v5581 = vpop.f32.mrb[0].mxu0
        %v5582 = vadd.f32 0.0, %v5581
        %v5583 = vpop.f32.mrb[0].mxu0
        %5584 = vmatprep.mubr.f32.mxu0 0.0
        %5585 = vmatmul.mubr.f32.gmra.mrb[0].mxu0 %v5377
        %v5586 = vpop.f32.mrb[0].mxu0
        %v5587 = vadd.f32 0.0, %v5586
        %v5588 = vpop.f32.mrb[0].mxu0
        %5589 = vmatprep.mubr.f32.mxu0 0.0
        %5590 = vmatmul.mubr.f32.gmra.mrb[0].mxu0 %v5380
        %v5591 = vpop.f32.mrb[0].mxu0
        %v5592 = vadd.f32 0.0, %v5591
        %v5593 = vpop.f32.mrb[0].mxu0
        %5594 = vmatprep.mubr.f32.mxu0 0.0
        %5595 = vmatmul.mubr.f32.gmra.mrb[0].mxu0 %v5383
        %v5596 = vpop.f32.mrb[0].mxu0
        %v5597 = vadd.f32 0.0, %v5596
        %v5598 = vpop.f32.mrb[0].mxu0
        %5599 = vmatprep.mubr.f32.mxu0 0.0
        %5600 = vmatmul.mubr.f32.gmra.mrb[0].mxu0 %v5386
        %v5601 = vpop.f32.mrb[0].mxu0
        %v5602 = vadd.f32 0.0, %v5601
        %v5603 = vpop.f32.mrb[0].mxu0
        %5604 = vmatprep.mubr.f32.mxu0 0.0
        %5605 = vmatmul.mubr.f32.gmra.mrb[0].mxu0 %v5389
        %v5606 = vpop.f32.mrb[0].mxu0
        %v5607 = vadd.f32 0.0, %v5606
        %v5608 = vpop.f32.mrb[0].mxu0
        %5609 = vmatprep.mubr.f32.mxu0 0.0
        %5610 = vmatmul.mubr.f32.gmra.mrb[0].mxu0 %v5392
        %v5611 = vpop.f32.mrb[0].mxu0
        %v5612 = vadd.f32 0.0, %v5611
        %v5613 = vpop.f32.mrb[0].mxu0
        %5614 = vmatprep.mubr.f32.mxu0 0.0
        %5615 = vmatmul.mubr.f32.gmra.mrb[0].mxu0 %v5395
        %v5616 = vpop.f32.mrb[0].mxu0
        %v5617 = vadd.f32 0.0, %v5616
        %v5618 = vpop.f32.mrb[0].mxu0
        %5619 = vmatprep.mubr.f32.mxu0 0.0
        %5620 = vmatmul.mubr.f32.gmra.mrb[0].mxu0 %v5398
        %v5621 = vpop.f32.mrb[0].mxu0
        %v5622 = vadd.f32 0.0, %v5621
        %v5623 = vpop.f32.mrb[0].mxu0
        %5624 = vdwg.mxu0
        %v5625 = vld [vmem:[%s9] sm:$0x1]
        %v5627 = vlaneseq
        %v5628 = vshrl.u32 %v5627, 7
        %v5629 = vsub.s32 0, %v5628
        %v5630 = vrot.slane %v5625, %v5629
        %v5632 = vmul.f32 %v5467, %v5630
        %v5633 = vmul.f32 %v5472, %v5630
        %v5634 = vmul.f32 %v5477, %v5630
        %v5635 = vmul.f32 %v5482, %v5630
        %v5636 = vmul.f32 %v5487, %v5630
        %v5637 = vmul.f32 %v5492, %v5630
        %v5638 = vmul.f32 %v5497, %v5630
        %v5639 = vmul.f32 %v5502, %v5630
        %v5640 = vmul.f32 %v5507, %v5630
        %v5641 = vmul.f32 %v5512, %v5630
        %v5642 = vmul.f32 %v5517, %v5630
        %v5643 = vmul.f32 %v5522, %v5630
        %v5644 = vmul.f32 %v5527, %v5630
        %v5645 = vmul.f32 %v5532, %v5630
        %v5646 = vmul.f32 %v5537, %v5630
        %v5647 = vmul.f32 %v5542, %v5630
        %v5648 = vmul.f32 %v5547, %v5630
        %v5649 = vmul.f32 %v5552, %v5630
        %v5650 = vmul.f32 %v5557, %v5630
        %v5651 = vmul.f32 %v5562, %v5630
        %v5652 = vmul.f32 %v5567, %v5630
        %v5653 = vmul.f32 %v5572, %v5630
        %v5654 = vmul.f32 %v5577, %v5630
        %v5655 = vmul.f32 %v5582, %v5630
        %v5656 = vmul.f32 %v5587, %v5630
        %v5657 = vmul.f32 %v5592, %v5630
        %v5658 = vmul.f32 %v5597, %v5630
        %v5659 = vmul.f32 %v5602, %v5630
        %v5660 = vmul.f32 %v5607, %v5630
        %v5661 = vmul.f32 %v5612, %v5630
        %v5662 = vmul.f32 %v5617, %v5630
        %v5663 = vmul.f32 %v5622, %v5630
        %v5664 = vld [vmem:[%s10] sm:$0x1]
        %v5666 = vlaneseq
        %v5667 = vshrl.u32 %v5666, 7
        %v5668 = vsub.s32 0, %v5667
        %v5669 = vrot.slane %v5664, %v5668
        %v5671 = vadd.f32 %v5632, %v5669
        %v5672 = vadd.f32 %v5633, %v5669
        %v5673 = vadd.f32 %v5634, %v5669
        %v5674 = vadd.f32 %v5635, %v5669
        %v5675 = vadd.f32 %v5636, %v5669
        %v5676 = vadd.f32 %v5637, %v5669
        %v5677 = vadd.f32 %v5638, %v5669
        %v5678 = vadd.f32 %v5639, %v5669
        %v5679 = vadd.f32 %v5640, %v5669
        %v5680 = vadd.f32 %v5641, %v5669
        %v5681 = vadd.f32 %v5642, %v5669
        %v5682 = vadd.f32 %v5643, %v5669
        %v5683 = vadd.f32 %v5644, %v5669
        %v5684 = vadd.f32 %v5645, %v5669
        %v5685 = vadd.f32 %v5646, %v5669
        %v5686 = vadd.f32 %v5647, %v5669
        %v5687 = vadd.f32 %v5648, %v5669
        %v5688 = vadd.f32 %v5649, %v5669
        %v5689 = vadd.f32 %v5650, %v5669
        %v5690 = vadd.f32 %v5651, %v5669
        %v5691 = vadd.f32 %v5652, %v5669
        %v5692 = vadd.f32 %v5653, %v5669
        %v5693 = vadd.f32 %v5654, %v5669
        %v5694 = vadd.f32 %v5655, %v5669
        %v5695 = vadd.f32 %v5656, %v5669
        %v5696 = vadd.f32 %v5657, %v5669
        %v5697 = vadd.f32 %v5658, %v5669
        %v5698 = vadd.f32 %v5659, %v5669
        %v5699 = vadd.f32 %v5660, %v5669
        %v5700 = vadd.f32 %v5661, %v5669
        %v5701 = vadd.f32 %v5662, %v5669
        %v5702 = vadd.f32 %v5663, %v5669
        %v5703 = vld [vmem:[%s4] sm:$0xff]
        %v5704 = vld [vmem:[%s4 + $0x8] sm:$0xff]
        %5705 = vmatprep.subr.mxu0 0.0
        %5706 = vmatpush1.msra.mxu0 %v5703
        %5707 = vmatprep.subr.mxu0 0.0
        %5708 = vmatpush1.msra.mxu0 %v5704
        %5709 = vmatprep.subr.mxu0 0.0
        %5710 = vmatpush1.msra.mxu0 0.0
        %5711 = vmatprep.subr.mxu0 0.0
        %5712 = vmatpush1.msra.mxu0 0.0
        %5713 = vmatprep.subr.mxu0 0.0
        %5714 = vmatpush1.msra.mxu0 0.0
        %5715 = vmatprep.subr.mxu0 0.0
        %5716 = vmatpush1.msra.mxu0 0.0
        %5717 = vmatprep.subr.mxu0 0.0
        %5718 = vmatpush1.msra.mxu0 0.0
        %5719 = vmatprep.subr.mxu0 0.0
        %5720 = vmatpush1.msra.mxu0 0.0
        %5721 = vmatprep.subr.mxu0 0.0
        %5722 = vmatpush1.msra.mxu0 0.0
        %5723 = vmatprep.subr.mxu0 0.0
        %5724 = vmatpush1.msra.mxu0 0.0
        %5725 = vmatprep.subr.mxu0 0.0
        %5726 = vmatpush1.msra.mxu0 0.0
        %5727 = vmatprep.subr.mxu0 0.0
        %5728 = vmatpush1.msra.mxu0 0.0
        %5729 = vmatprep.subr.mxu0 0.0
        %5730 = vmatpush1.msra.mxu0 0.0
        %5731 = vmatprep.subr.mxu0 0.0
        %5732 = vmatpush1.msra.mxu0 0.0
        %5733 = vmatprep.subr.mxu0 0.0
        %5734 = vmatpush1.msra.mxu0 0.0
        %5735 = vmatprep.subr.mxu0 0.0
        %5736 = vmatpush1.msra.mxu0 0.0
        %5737 = vmatprep.subr.mxu0 0.0
        %5738 = vmatpush1.msra.mxu0 0.0
        %5739 = vmatprep.subr.mxu0 0.0
        %5740 = vmatpush1.msra.mxu0 0.0
        %5741 = vmatprep.subr.mxu0 0.0
        %5742 = vmatpush1.msra.mxu0 0.0
        %5743 = vmatprep.subr.mxu0 0.0
        %5744 = vmatpush1.msra.mxu0 0.0
        %5745 = vmatprep.subr.mxu0 0.0
        %5746 = vmatpush1.msra.mxu0 0.0
        %5747 = vmatprep.subr.mxu0 0.0
        %5748 = vmatpush1.msra.mxu0 0.0
        %5749 = vmatprep.subr.mxu0 0.0
        %5750 = vmatpush1.msra.mxu0 0.0
        %5751 = vmatprep.subr.mxu0 0.0
        %5752 = vmatpush1.msra.mxu0 0.0
        %5753 = vmatprep.subr.mxu0 0.0
        %5754 = vmatpush1.msra.mxu0 0.0
        %5755 = vmatprep.subr.mxu0 0.0
        %5756 = vmatpush1.msra.mxu0 0.0
        %5757 = vmatprep.subr.mxu0 0.0
        %5758 = vmatpush1.msra.mxu0 0.0
        %5759 = vmatprep.subr.mxu0 0.0
        %5760 = vmatpush1.msra.mxu0 0.0
        %5761 = vmatprep.subr.mxu0 0.0
        %5762 = vmatpush1.msra.mxu0 0.0
        %5763 = vmatprep.subr.mxu0 0.0
        %5764 = vmatpush1.msra.mxu0 0.0
        %5765 = vmatprep.subr.mxu0 0.0
        %5766 = vmatpush1.msra.mxu0 0.0
        %5767 = vmatprep.subr.mxu0 0.0
        %5768 = vmatpush1.msra.mxu0 0.0
        %5769 = vmatprep.mubr.f32.mxu0 0.0
        %5770 = vmatmul.mubr.f32.gmra.mrb[0].mxu0 %v475
        %v5771 = vpop.f32.mrb[0].mxu0
        %v5772 = vadd.f32 0.0, %v5771
        %v5773 = vpop.f32.mrb[0].mxu0
        %5774 = vmatprep.mubr.f32.mxu0 0.0
        %5775 = vmatmul.mubr.f32.gmra.mrb[0].mxu0 %v478
        %v5776 = vpop.f32.mrb[0].mxu0
        %v5777 = vadd.f32 0.0, %v5776
        %v5778 = vpop.f32.mrb[0].mxu0
        %5779 = vmatprep.mubr.f32.mxu0 0.0
        %5780 = vmatmul.mubr.f32.gmra.mrb[0].mxu0 %v481
        %v5781 = vpop.f32.mrb[0].mxu0
        %v5782 = vadd.f32 0.0, %v5781
        %v5783 = vpop.f32.mrb[0].mxu0
        %5784 = vmatprep.mubr.f32.mxu0 0.0
        %5785 = vmatmul.mubr.f32.gmra.mrb[0].mxu0 %v484
        %v5786 = vpop.f32.mrb[0].mxu0
        %v5787 = vadd.f32 0.0, %v5786
        %v5788 = vpop.f32.mrb[0].mxu0
        %5789 = vmatprep.mubr.f32.mxu0 0.0
        %5790 = vmatmul.mubr.f32.gmra.mrb[0].mxu0 %v487
        %v5791 = vpop.f32.mrb[0].mxu0
        %v5792 = vadd.f32 0.0, %v5791
        %v5793 = vpop.f32.mrb[0].mxu0
        %5794 = vmatprep.mubr.f32.mxu0 0.0
        %5795 = vmatmul.mubr.f32.gmra.mrb[0].mxu0 %v490
        %v5796 = vpop.f32.mrb[0].mxu0
        %v5797 = vadd.f32 0.0, %v5796
        %v5798 = vpop.f32.mrb[0].mxu0
        %5799 = vmatprep.mubr.f32.mxu0 0.0
        %5800 = vmatmul.mubr.f32.gmra.mrb[0].mxu0 %v493
        %v5801 = vpop.f32.mrb[0].mxu0
        %v5802 = vadd.f32 0.0, %v5801
        %v5803 = vpop.f32.mrb[0].mxu0
        %5804 = vmatprep.mubr.f32.mxu0 0.0
        %5805 = vmatmul.mubr.f32.gmra.mrb[0].mxu0 %v496
        %v5806 = vpop.f32.mrb[0].mxu0
        %v5807 = vadd.f32 0.0, %v5806
        %v5808 = vpop.f32.mrb[0].mxu0
        %5809 = vmatprep.mubr.f32.mxu0 0.0
        %5810 = vmatmul.mubr.f32.gmra.mrb[0].mxu0 %v499
        %v5811 = vpop.f32.mrb[0].mxu0
        %v5812 = vadd.f32 0.0, %v5811
        %v5813 = vpop.f32.mrb[0].mxu0
        %5814 = vmatprep.mubr.f32.mxu0 0.0
        %5815 = vmatmul.mubr.f32.gmra.mrb[0].mxu0 %v502
        %v5816 = vpop.f32.mrb[0].mxu0
        %v5817 = vadd.f32 0.0, %v5816
        %v5818 = vpop.f32.mrb[0].mxu0
        %5819 = vmatprep.mubr.f32.mxu0 0.0
        %5820 = vmatmul.mubr.f32.gmra.mrb[0].mxu0 %v505
        %v5821 = vpop.f32.mrb[0].mxu0
        %v5822 = vadd.f32 0.0, %v5821
        %v5823 = vpop.f32.mrb[0].mxu0
        %5824 = vmatprep.mubr.f32.mxu0 0.0
        %5825 = vmatmul.mubr.f32.gmra.mrb[0].mxu0 %v508
        %v5826 = vpop.f32.mrb[0].mxu0
        %v5827 = vadd.f32 0.0, %v5826
        %v5828 = vpop.f32.mrb[0].mxu0
        %5829 = vmatprep.mubr.f32.mxu0 0.0
        %5830 = vmatmul.mubr.f32.gmra.mrb[0].mxu0 %v511
        %v5831 = vpop.f32.mrb[0].mxu0
        %v5832 = vadd.f32 0.0, %v5831
        %v5833 = vpop.f32.mrb[0].mxu0
        %5834 = vmatprep.mubr.f32.mxu0 0.0
        %5835 = vmatmul.mubr.f32.gmra.mrb[0].mxu0 %v514
        %v5836 = vpop.f32.mrb[0].mxu0
        %v5837 = vadd.f32 0.0, %v5836
        %v5838 = vpop.f32.mrb[0].mxu0
        %5839 = vmatprep.mubr.f32.mxu0 0.0
        %5840 = vmatmul.mubr.f32.gmra.mrb[0].mxu0 %v517
        %v5841 = vpop.f32.mrb[0].mxu0
        %v5842 = vadd.f32 0.0, %v5841
        %v5843 = vpop.f32.mrb[0].mxu0
        %5844 = vmatprep.mubr.f32.mxu0 0.0
        %5845 = vmatmul.mubr.f32.gmra.mrb[0].mxu0 %v520
        %v5846 = vpop.f32.mrb[0].mxu0
        %v5847 = vadd.f32 0.0, %v5846
        %v5848 = vpop.f32.mrb[0].mxu0
        %5849 = vmatprep.mubr.f32.mxu0 0.0
        %5850 = vmatmul.mubr.f32.gmra.mrb[0].mxu0 %v523
        %v5851 = vpop.f32.mrb[0].mxu0
        %v5852 = vadd.f32 0.0, %v5851
        %v5853 = vpop.f32.mrb[0].mxu0
        %5854 = vmatprep.mubr.f32.mxu0 0.0
        %5855 = vmatmul.mubr.f32.gmra.mrb[0].mxu0 %v526
        %v5856 = vpop.f32.mrb[0].mxu0
        %v5857 = vadd.f32 0.0, %v5856
        %v5858 = vpop.f32.mrb[0].mxu0
        %5859 = vmatprep.mubr.f32.mxu0 0.0
        %5860 = vmatmul.mubr.f32.gmra.mrb[0].mxu0 %v529
        %v5861 = vpop.f32.mrb[0].mxu0
        %v5862 = vadd.f32 0.0, %v5861
        %v5863 = vpop.f32.mrb[0].mxu0
        %5864 = vmatprep.mubr.f32.mxu0 0.0
        %5865 = vmatmul.mubr.f32.gmra.mrb[0].mxu0 %v532
        %v5866 = vpop.f32.mrb[0].mxu0
        %v5867 = vadd.f32 0.0, %v5866
        %v5868 = vpop.f32.mrb[0].mxu0
        %5869 = vmatprep.mubr.f32.mxu0 0.0
        %5870 = vmatmul.mubr.f32.gmra.mrb[0].mxu0 %v535
        %v5871 = vpop.f32.mrb[0].mxu0
        %v5872 = vadd.f32 0.0, %v5871
        %v5873 = vpop.f32.mrb[0].mxu0
        %5874 = vmatprep.mubr.f32.mxu0 0.0
        %5875 = vmatmul.mubr.f32.gmra.mrb[0].mxu0 %v538
        %v5876 = vpop.f32.mrb[0].mxu0
        %v5877 = vadd.f32 0.0, %v5876
        %v5878 = vpop.f32.mrb[0].mxu0
        %5879 = vmatprep.mubr.f32.mxu0 0.0
        %5880 = vmatmul.mubr.f32.gmra.mrb[0].mxu0 %v541
        %v5881 = vpop.f32.mrb[0].mxu0
        %v5882 = vadd.f32 0.0, %v5881
        %v5883 = vpop.f32.mrb[0].mxu0
        %5884 = vmatprep.mubr.f32.mxu0 0.0
        %5885 = vmatmul.mubr.f32.gmra.mrb[0].mxu0 %v544
        %v5886 = vpop.f32.mrb[0].mxu0
        %v5887 = vadd.f32 0.0, %v5886
        %v5888 = vpop.f32.mrb[0].mxu0
        %5889 = vmatprep.mubr.f32.mxu0 0.0
        %5890 = vmatmul.mubr.f32.gmra.mrb[0].mxu0 %v547
        %v5891 = vpop.f32.mrb[0].mxu0
        %v5892 = vadd.f32 0.0, %v5891
        %v5893 = vpop.f32.mrb[0].mxu0
        %5894 = vmatprep.mubr.f32.mxu0 0.0
        %5895 = vmatmul.mubr.f32.gmra.mrb[0].mxu0 %v550
        %v5896 = vpop.f32.mrb[0].mxu0
        %v5897 = vadd.f32 0.0, %v5896
        %v5898 = vpop.f32.mrb[0].mxu0
        %5899 = vmatprep.mubr.f32.mxu0 0.0
        %5900 = vmatmul.mubr.f32.gmra.mrb[0].mxu0 %v553
        %v5901 = vpop.f32.mrb[0].mxu0
        %v5902 = vadd.f32 0.0, %v5901
        %v5903 = vpop.f32.mrb[0].mxu0
        %5904 = vmatprep.mubr.f32.mxu0 0.0
        %5905 = vmatmul.mubr.f32.gmra.mrb[0].mxu0 %v556
        %v5906 = vpop.f32.mrb[0].mxu0
        %v5907 = vadd.f32 0.0, %v5906
        %v5908 = vpop.f32.mrb[0].mxu0
        %5909 = vmatprep.mubr.f32.mxu0 0.0
        %5910 = vmatmul.mubr.f32.gmra.mrb[0].mxu0 %v559
        %v5911 = vpop.f32.mrb[0].mxu0
        %v5912 = vadd.f32 0.0, %v5911
        %v5913 = vpop.f32.mrb[0].mxu0
        %5914 = vmatprep.mubr.f32.mxu0 0.0
        %5915 = vmatmul.mubr.f32.gmra.mrb[0].mxu0 %v562
        %v5916 = vpop.f32.mrb[0].mxu0
        %v5917 = vadd.f32 0.0, %v5916
        %v5918 = vpop.f32.mrb[0].mxu0
        %5919 = vmatprep.mubr.f32.mxu0 0.0
        %5920 = vmatmul.mubr.f32.gmra.mrb[0].mxu0 %v565
        %v5921 = vpop.f32.mrb[0].mxu0
        %v5922 = vadd.f32 0.0, %v5921
        %v5923 = vpop.f32.mrb[0].mxu0
        %5924 = vmatprep.mubr.f32.mxu0 0.0
        %5925 = vmatmul.mubr.f32.gmra.mrb[0].mxu0 %v568
        %v5926 = vpop.f32.mrb[0].mxu0
        %v5927 = vadd.f32 0.0, %v5926
        %v5928 = vpop.f32.mrb[0].mxu0
        %5929 = vdwg.mxu0
        %v5930 = vld [vmem:[%s11] sm:$0x1]
        %v5932 = vlaneseq
        %v5933 = vshrl.u32 %v5932, 7
        %v5934 = vsub.s32 0, %v5933
        %v5935 = vrot.slane %v5930, %v5934
        %v5937 = vmul.f32 %v5772, %v5935
        %v5938 = vmul.f32 %v5777, %v5935
        %v5939 = vmul.f32 %v5782, %v5935
        %v5940 = vmul.f32 %v5787, %v5935
        %v5941 = vmul.f32 %v5792, %v5935
        %v5942 = vmul.f32 %v5797, %v5935
        %v5943 = vmul.f32 %v5802, %v5935
        %v5944 = vmul.f32 %v5807, %v5935
        %v5945 = vmul.f32 %v5812, %v5935
        %v5946 = vmul.f32 %v5817, %v5935
        %v5947 = vmul.f32 %v5822, %v5935
        %v5948 = vmul.f32 %v5827, %v5935
        %v5949 = vmul.f32 %v5832, %v5935
        %v5950 = vmul.f32 %v5837, %v5935
        %v5951 = vmul.f32 %v5842, %v5935
        %v5952 = vmul.f32 %v5847, %v5935
        %v5953 = vmul.f32 %v5852, %v5935
        %v5954 = vmul.f32 %v5857, %v5935
        %v5955 = vmul.f32 %v5862, %v5935
        %v5956 = vmul.f32 %v5867, %v5935
        %v5957 = vmul.f32 %v5872, %v5935
        %v5958 = vmul.f32 %v5877, %v5935
        %v5959 = vmul.f32 %v5882, %v5935
        %v5960 = vmul.f32 %v5887, %v5935
        %v5961 = vmul.f32 %v5892, %v5935
        %v5962 = vmul.f32 %v5897, %v5935
        %v5963 = vmul.f32 %v5902, %v5935
        %v5964 = vmul.f32 %v5907, %v5935
        %v5965 = vmul.f32 %v5912, %v5935
        %v5966 = vmul.f32 %v5917, %v5935
        %v5967 = vmul.f32 %v5922, %v5935
        %v5968 = vmul.f32 %v5927, %v5935
        %v5969 = vld [vmem:[%s12] sm:$0x1]
        %v5971 = vlaneseq
        %v5972 = vshrl.u32 %v5971, 7
        %v5973 = vsub.s32 0, %v5972
        %v5974 = vrot.slane %v5969, %v5973
        %v5976 = vadd.f32 %v5937, %v5974
        %v5977 = vadd.f32 %v5938, %v5974
        %v5978 = vadd.f32 %v5939, %v5974
        %v5979 = vadd.f32 %v5940, %v5974
        %v5980 = vadd.f32 %v5941, %v5974
        %v5981 = vadd.f32 %v5942, %v5974
        %v5982 = vadd.f32 %v5943, %v5974
        %v5983 = vadd.f32 %v5944, %v5974
        %v5984 = vadd.f32 %v5945, %v5974
        %v5985 = vadd.f32 %v5946, %v5974
        %v5986 = vadd.f32 %v5947, %v5974
        %v5987 = vadd.f32 %v5948, %v5974
        %v5988 = vadd.f32 %v5949, %v5974
        %v5989 = vadd.f32 %v5950, %v5974
        %v5990 = vadd.f32 %v5951, %v5974
        %v5991 = vadd.f32 %v5952, %v5974
        %v5992 = vadd.f32 %v5953, %v5974
        %v5993 = vadd.f32 %v5954, %v5974
        %v5994 = vadd.f32 %v5955, %v5974
        %v5995 = vadd.f32 %v5956, %v5974
        %v5996 = vadd.f32 %v5957, %v5974
        %v5997 = vadd.f32 %v5958, %v5974
        %v5998 = vadd.f32 %v5959, %v5974
        %v5999 = vadd.f32 %v5960, %v5974
        %v6000 = vadd.f32 %v5961, %v5974
        %v6001 = vadd.f32 %v5962, %v5974
        %v6002 = vadd.f32 %v5963, %v5974
        %v6003 = vadd.f32 %v5964, %v5974
        %v6004 = vadd.f32 %v5965, %v5974
        %v6005 = vadd.f32 %v5966, %v5974
        %v6006 = vadd.f32 %v5967, %v5974
        %v6007 = vadd.f32 %v5968, %v5974
        %v6008 = vadd.f32 %v5671, %v5976
        %v6009 = vadd.f32 %v5672, %v5977
        %v6010 = vadd.f32 %v5673, %v5978
        %v6011 = vadd.f32 %v5674, %v5979
        %v6012 = vadd.f32 %v5675, %v5980
        %v6013 = vadd.f32 %v5676, %v5981
        %v6014 = vadd.f32 %v5677, %v5982
        %v6015 = vadd.f32 %v5678, %v5983
        %v6016 = vadd.f32 %v5679, %v5984
        %v6017 = vadd.f32 %v5680, %v5985
        %v6018 = vadd.f32 %v5681, %v5986
        %v6019 = vadd.f32 %v5682, %v5987
        %v6020 = vadd.f32 %v5683, %v5988
        %v6021 = vadd.f32 %v5684, %v5989
        %v6022 = vadd.f32 %v5685, %v5990
        %v6023 = vadd.f32 %v5686, %v5991
        %v6024 = vadd.f32 %v5687, %v5992
        %v6025 = vadd.f32 %v5688, %v5993
        %v6026 = vadd.f32 %v5689, %v5994
        %v6027 = vadd.f32 %v5690, %v5995
        %v6028 = vadd.f32 %v5691, %v5996
        %v6029 = vadd.f32 %v5692, %v5997
        %v6030 = vadd.f32 %v5693, %v5998
        %v6031 = vadd.f32 %v5694, %v5999
        %v6032 = vadd.f32 %v5695, %v6000
        %v6033 = vadd.f32 %v5696, %v6001
        %v6034 = vadd.f32 %v5697, %v6002
        %v6035 = vadd.f32 %v5698, %v6003
        %v6036 = vadd.f32 %v5699, %v6004
        %v6037 = vadd.f32 %v5700, %v6005
        %v6038 = vadd.f32 %v5701, %v6006
        %v6039 = vadd.f32 %v5702, %v6007
        %v6040 = vmax.f32 %v6008, 0.0
        %v6041 = vmax.f32 %v6009, 0.0
        %v6042 = vmax.f32 %v6010, 0.0
        %v6043 = vmax.f32 %v6011, 0.0
        %v6044 = vmax.f32 %v6012, 0.0
        %v6045 = vmax.f32 %v6013, 0.0
        %v6046 = vmax.f32 %v6014, 0.0
        %v6047 = vmax.f32 %v6015, 0.0
        %v6048 = vmax.f32 %v6016, 0.0
        %v6049 = vmax.f32 %v6017, 0.0
        %v6050 = vmax.f32 %v6018, 0.0
        %v6051 = vmax.f32 %v6019, 0.0
        %v6052 = vmax.f32 %v6020, 0.0
        %v6053 = vmax.f32 %v6021, 0.0
        %v6054 = vmax.f32 %v6022, 0.0
        %v6055 = vmax.f32 %v6023, 0.0
        %v6056 = vmax.f32 %v6024, 0.0
        %v6057 = vmax.f32 %v6025, 0.0
        %v6058 = vmax.f32 %v6026, 0.0
        %v6059 = vmax.f32 %v6027, 0.0
        %v6060 = vmax.f32 %v6028, 0.0
        %v6061 = vmax.f32 %v6029, 0.0
        %v6062 = vmax.f32 %v6030, 0.0
        %v6063 = vmax.f32 %v6031, 0.0
        %v6064 = vmax.f32 %v6032, 0.0
        %v6065 = vmax.f32 %v6033, 0.0
        %v6066 = vmax.f32 %v6034, 0.0
        %v6067 = vmax.f32 %v6035, 0.0
        %v6068 = vmax.f32 %v6036, 0.0
        %v6069 = vmax.f32 %v6037, 0.0
        %v6070 = vmax.f32 %v6038, 0.0
        %v6071 = vmax.f32 %v6039, 0.0
        %6072 = vst [vmem:[%s433] sm:$0xff] %v6040
        %6073 = vst [vmem:[%s433 + $0x8] sm:$0xff] %v6041
        %6074 = vst [vmem:[%s433 + $0x10] sm:$0xff] %v6042
        %6075 = vst [vmem:[%s433 + $0x18] sm:$0xff] %v6043
        %6076 = vst [vmem:[%s433 + $0x20] sm:$0xff] %v6044
        %6077 = vst [vmem:[%s433 + $0x28] sm:$0xff] %v6045
        %6078 = vst [vmem:[%s433 + $0x30] sm:$0xff] %v6046
        %6079 = vst [vmem:[%s433 + $0x38] sm:$0xff] %v6047
        %6080 = vst [vmem:[%s433 + $0x40] sm:$0xff] %v6048
        %6081 = vst [vmem:[%s433 + $0x48] sm:$0xff] %v6049
        %6082 = vst [vmem:[%s433 + $0x50] sm:$0xff] %v6050
        %6083 = vst [vmem:[%s433 + $0x58] sm:$0xff] %v6051
        %6084 = vst [vmem:[%s433 + $0x60] sm:$0xff] %v6052
        %6085 = vst [vmem:[%s433 + $0x68] sm:$0xff] %v6053
        %6086 = vst [vmem:[%s433 + $0x70] sm:$0xff] %v6054
        %6087 = vst [vmem:[%s433 + $0x78] sm:$0xff] %v6055
        %6088 = vst [vmem:[%s433 + $0x80] sm:$0xff] %v6056
        %6089 = vst [vmem:[%s433 + $0x88] sm:$0xff] %v6057
        %6090 = vst [vmem:[%s433 + $0x90] sm:$0xff] %v6058
        %6091 = vst [vmem:[%s433 + $0x98] sm:$0xff] %v6059
        %6092 = vst [vmem:[%s433 + $0xa0] sm:$0xff] %v6060
        %6093 = vst [vmem:[%s433 + $0xa8] sm:$0xff] %v6061
        %6094 = vst [vmem:[%s433 + $0xb0] sm:$0xff] %v6062
        %6095 = vst [vmem:[%s433 + $0xb8] sm:$0xff] %v6063
        %6096 = vst [vmem:[%s433 + $0xc0] sm:$0xff] %v6064
        %6097 = vst [vmem:[%s433 + $0xc8] sm:$0xff] %v6065
        %6098 = vst [vmem:[%s433 + $0xd0] sm:$0xff] %v6066
        %6099 = vst [vmem:[%s433 + $0xd8] sm:$0xff] %v6067
        %6100 = vst [vmem:[%s433 + $0xe0] sm:$0xff] %v6068
        %6101 = vst [vmem:[%s433 + $0xe8] sm:$0xff] %v6069
        %6102 = vst [vmem:[%s433 + $0xf0] sm:$0xff] %v6070
        %6103 = vst [vmem:[%s433 + $0xf8] sm:$0xff] %v6071
        %s6104 = sand.u32 %s313, 1
        %s6105 = scalar_lea.sflag [#allocation4], %s6104
        %s6106 = sand.u32 %s313, 1
        %s6107 = smul.addr %s6106, 256
        %s6108 = scalar_lea.vmem [#allocation3], %s6107
        // Predicated region
        $region73: #{tpu_custom_call.1} parent=71 // pred_check
          %p6109 = pneg %p323
        $region74: #{tpu_custom_call.1} parent=71 // pred_check_branch
          %6111 = sbr.rel (%p6109) target = $region76
        $region75: #{tpu_custom_call.1} parent=71 // pred_region
          %s6113 = ssub.s32 4096, 4096
          %6114 = vsyncadd %s6105, %s6113
          %s6115 = smul.addr %s27, 32
          %s6116 = smul.addr %s6115, 128
          %s6117 = scalar_lea.hbm %s13, %s6116
          %s6118 = sshll.u32 %s6108, 4
          %s6119 = int_to_ptr.vmem [resolvable:$true] %s6118
          %6124 = dma.vmem_to_hbm [thread:$0]  %s6119, 4096, %s6117, %s6105, 128, 128, 8
        $region76: #{tpu_custom_call.1} parent=71 // pred_fallthru
          _
      $region72: #{tpu_custom_call.1} parent=5 // pred_fallthru
        _
      %p6125 = scmp.le.s32.totalorder 2, %s22
      // Predicated region
      $region77: #{tpu_custom_call.1} parent=5 // pred_check
        %p6126 = pneg %p6125
      $region78: #{tpu_custom_call.1} parent=5 // pred_check_branch
        %6128 = sbr.rel (%p6126) target = $region80
      $region79: #{tpu_custom_call.1} parent=5 // pred_region
        %s6129 = ssub.s32 %s22, 2
        // Predicated region
        $region81: #{tpu_custom_call.1} parent=79 // pred_check
          %p6130 = pneg %p329
        $region82: #{tpu_custom_call.1} parent=79 // pred_check_branch
          %6132 = sbr.rel (%p6130) target = $region84
        $region83: #{tpu_custom_call.1} parent=79 // pred_region
          %s6133 = sand.u32 %s314, 1
          %s6134 = scalar_lea.sflag [#allocation4], %s6133
          %s6135 = sand.u32 %s314, 1
          %s6136 = smul.addr %s6135, 256
          %s6137 = scalar_lea.vmem [#allocation3], %s6136
          %6138 = dma.done %s6134, 4096
        $region84: #{tpu_custom_call.1} parent=79 // pred_fallthru
          _
      $region80: #{tpu_custom_call.1} parent=5 // pred_fallthru
        _
    $region6: #{tpu_custom_call.1} parent=1 // loop_footer
      %s26 = sadd.s32 1, %s22
    $region7: #{tpu_custom_call.1} parent=1 // loop_footer_branch
      %21 = sbr.rel target = $region3
    $region8: #{tpu_custom_call.1} parent=1 // loop_exit
      _
    %6139 = vsyncpa [#allocation4], 1
    %s6140 = scalar_lea.sflag [#allocation4], 1
    %6141 = vsyncpa %s6140, 1

</llo_original>
